<compile_context>
chip_gen: v6e
topology: v6e:2x2x1
jax: 0.10.0
libtpu: 0.0.40
codegen_flags: <defaults>
</compile_context>

<pallas_src>
import jax
import jax.numpy as jnp
from jax import lax
from jax.experimental import pallas as pl
from jax.experimental.pallas import tpu as pltpu

_BN_EPS = 1e-5
_INV_SQRT2 = 0.7071067811865476


# ----------------------------- Pallas kernels ------------------------------ #

def _conv_stats_kernel(p_ref, w_ref, y_ref, sum_ref, sq_ref):
    """Pass 1: y = P @ W (bf16 MXU operands, f32 accumulation) for one M-tile.

    Emits per-tile per-channel partial sum / sum-of-squares, sub-reduced to an
    (8, C) block so the stat outputs keep (8, C)-shaped tiles and the grid axis
    stays fully parallel (no carried accumulator)."""
    y = jnp.dot(p_ref[...], w_ref[...], preferred_element_type=jnp.float32)
    y_ref[...] = y.astype(y_ref.dtype)                 # bf16 store halves y traffic
    y3 = y.reshape(y.shape[0] // 8, 8, y.shape[1])
    sum_ref[...] = jnp.sum(y3, axis=0)
    sq_ref[...] = jnp.sum(y3 * y3, axis=0)


def _bn_gelu_kernel(y_ref, ss_ref, o_ref):
    """Pass 2: folded BatchNorm (y*scale + shift) + exact erf-GELU.

    Operates on a lane-dense folded view [rows, fold*C] (fold*C multiple of 128
    when possible), so loads/stores are unmasked full-lane vector ops."""
    z = y_ref[...].astype(jnp.float32) * ss_ref[0:1, :] + ss_ref[1:2, :]
    o_ref[...] = (0.5 * z * (1.0 + lax.erf(z * _INV_SQRT2))).astype(o_ref.dtype)


# ------------------------------ tiling helpers ------------------------------ #

def _lane_fold(c_cols):
    """Fold factor so fold*c_cols is a 128 multiple (lane-dense pass-2 blocks)."""
    if c_cols < 128 and 128 % c_cols == 0:
        return 128 // c_cols
    return 1


def _choose_tile_m(m, fold, target=1024):
    """tile_m multiple of 8*fold (<= ~target), and M padded up to a tile multiple."""
    align = 8 * fold
    if m <= target:
        tile = ((m + align - 1) // align) * align
    else:
        tile = max(align, (target // align) * align)
    m_pad = ((m + tile - 1) // tile) * tile
    return tile, m_pad


# ------------------------------ layer wrapper ------------------------------ #

def _conv_bn_gelu_layer(patches, w_mat, gamma, beta, *, bn_groups=1,
                        out_dtype=jnp.bfloat16):
    """GELU(BN(patches @ w_mat)) with training-mode batch stats.

    patches: [M, K] (any float dtype), w_mat: [K, c_cols] with
    c_cols = bn_groups * C_out; BN stats for channel c are taken jointly over
    all bn_groups column groups (used for the sub-pixel/pixel-shuffle UpConv).
    Conv bias is intentionally omitted: it cancels exactly under batch-stat BN.
    Returns [M, c_cols] in `out_dtype`.
    """
    m, k = patches.shape
    c_cols = w_mat.shape[1]
    c_out = c_cols // bn_groups

    fold = _lane_fold(c_cols)
    lane_w = fold * c_cols
    tile_m, m_pad = _choose_tile_m(m, fold)
    num_tiles = m_pad // tile_m

    p_bf16 = patches.astype(jnp.bfloat16)              # halves patch DMA bytes
    if m_pad != m:
        # Zero rows -> zero conv output (no bias) -> contribute 0 to sum/sumsq.
        p_bf16 = jnp.pad(p_bf16, ((0, m_pad - m), (0, 0)))
    w_bf16 = w_mat.astype(jnp.bfloat16)

    # Pass 1: matmul per M-tile + per-tile partial channel stats (parallel grid).
    y_flat, part_s, part_q = pl.pallas_call(
        _conv_stats_kernel,
        grid=(num_tiles,),
        out_shape=(jax.ShapeDtypeStruct((m_pad, c_cols), jnp.bfloat16),
                   jax.ShapeDtypeStruct((num_tiles * 8, c_cols), jnp.float32),
                   jax.ShapeDtypeStruct((num_tiles * 8, c_cols), jnp.float32)),
        in_specs=[pl.BlockSpec((tile_m, k), lambda i: (i, 0)),
                  pl.BlockSpec((k, c_cols), lambda i: (0, 0))],     # pinned weights
        out_specs=(pl.BlockSpec((tile_m, c_cols), lambda i: (i, 0)),
                   pl.BlockSpec((8, c_cols), lambda i: (i, 0)),
                   pl.BlockSpec((8, c_cols), lambda i: (i, 0))),
        compiler_params=pltpu.CompilerParams(dimension_semantics=("parallel",)),
    )(p_bf16, w_bf16)

    # Fold BN (training-mode biased batch stats) into one scale/shift per channel.
    # NOTE: E[x^2] - E[x]^2 in f32 is fine at these sizes; switch to centered
    # per-tile partials for very large M.
    s = jnp.sum(part_s, axis=0)                        # [c_cols]
    q = jnp.sum(part_q, axis=0)
    if bn_groups > 1:                                  # phase-major column groups
        s = s.reshape(bn_groups, c_out).sum(axis=0)
        q = q.reshape(bn_groups, c_out).sum(axis=0)
    count = float(m * bn_groups)                       # true element count per channel
    mean = s / count
    var = q / count - mean * mean
    scale = gamma * lax.rsqrt(var + _BN_EPS)
    shift = beta - mean * scale
    ss = jnp.stack([jnp.tile(scale, bn_groups * fold),
                    jnp.tile(shift, bn_groups * fold)], axis=0).astype(jnp.float32)

    # Pass 2: lane-dense folded view (free contiguous reshape of the HBM array).
    y_fold = y_flat.reshape(m_pad // fold, lane_w)
    rows_per_tile = tile_m // fold
    out = pl.pallas_call(
        _bn_gelu_kernel,
        grid=(num_tiles,),
        out_shape=jax.ShapeDtypeStruct((m_pad // fold, lane_w), out_dtype),
        in_specs=[pl.BlockSpec((rows_per_tile, lane_w), lambda i: (i, 0)),
                  pl.BlockSpec((2, lane_w), lambda i: (0, 0))],     # pinned scale/shift
        out_specs=pl.BlockSpec((rows_per_tile, lane_w), lambda i: (i, 0)),
        compiler_params=pltpu.CompilerParams(dimension_semantics=("parallel",)),
    )(y_fold, ss)

    out = out.reshape(m_pad, c_cols)
    if m_pad != m:
        out = out[:m]
    return out


# --------------------------- im2col / layout glue --------------------------- #

def _im2col_nhwc(x_nhwc, ksize, stride, pad):
    """NHWC -> patch matrix [N*Ho*Wo, k*k*C] with column order (kh, kw, c)."""
    n, h, w, c = x_nhwc.shape
    h_out = (h + 2 * pad - ksize) // stride + 1
    w_out = (w + 2 * pad - ksize) // stride + 1
    xp = jnp.pad(x_nhwc, ((0, 0), (pad, pad), (pad, pad), (0, 0)))
    taps = []
    for kh in range(ksize):
        for kw in range(ksize):
            taps.append(xp[:, kh:kh + stride * h_out:stride,
                           kw:kw + stride * w_out:stride, :])
    # [k*k, N, Ho, Wo, C] -> [N, Ho, Wo, k*k, C] -> [M, k*k*C]
    patches = jnp.stack(taps, axis=0).transpose(1, 2, 3, 0, 4)
    return patches.reshape(n * h_out * w_out, ksize * ksize * c), h_out, w_out


def _upconv_as_conv3_weight(w_t):
    """ConvTranspose2d(k=4,s=2,p=1) weight [C_in,C_out,4,4] -> equivalent
    k=3,s=1,p=1 conv weight matrix [9*C_in, 4*C_out] (sub-pixel decomposition).

    Rows ordered (dy, dx, c_in) to match _im2col_nhwc; columns (py, px, c_out)
    so a pixel-shuffle reshape interleaves the 4 phases into the 2Hx2W output.
    y[2i+py, 2j+px] uses input row i-1+dy with kernel tap ky = 3 + py - 2*dy
    (and likewise for columns); out-of-range taps are structural zeros.
    """
    c_in, c_out = int(w_t.shape[0]), int(w_t.shape[1])
    w9 = jnp.zeros((3, 3, c_in, 2, 2, c_out), w_t.dtype)
    for py in range(2):
        for px in range(2):
            for dy in range(3):
                ky = 3 + py - 2 * dy
                if not 0 <= ky <= 3:
                    continue
                for dx in range(3):
                    kx = 3 + px - 2 * dx
                    if not 0 <= kx <= 3:
                        continue
                    w9 = w9.at[dy, dx, :, py, px, :].set(w_t[:, :, ky, kx])
    return w9.reshape(9 * c_in, 4 * c_out)


# ------------------------------ UpBlock forward ----------------------------- #

@jax.jit
def upblock_forward(x, params):
    """x: [N, C_in, H, W] (NCHW f32) -> [N, C_out, 2H, 2W] (NCHW f32)."""
    n, c_in, h, w = x.shape
    c_out = params["up_w"].shape[1]

    x_nhwc = jnp.transpose(x, (0, 2, 3, 1))

    # --- UpConv: sub-pixel decomposition = k=3,s=1,p=1 conv with 4*C_out phase
    # columns on the un-dilated input, then pixel-shuffle to 2H x 2W.
    p_up, _, _ = _im2col_nhwc(x_nhwc, ksize=3, stride=1, pad=1)        # [N*H*W, 9*C_in]
    w_up_mat = _upconv_as_conv3_weight(params["up_w"])                 # [9*C_in, 4*C_out]
    a0 = _conv_bn_gelu_layer(p_up, w_up_mat, params["up_g"], params["up_beta"],
                             bn_groups=4, out_dtype=jnp.bfloat16)      # [N*H*W, 4*C_out]
    a0 = (a0.reshape(n, h, w, 2, 2, c_out)
            .transpose(0, 1, 3, 2, 4, 5)
            .reshape(n, 2 * h, 2 * w, c_out))                          # pixel shuffle

    # --- ConvBlock.conv1: Conv2d(k=3, s=1, p=1) + BN + GELU
    p1, ho1, wo1 = _im2col_nhwc(a0, ksize=3, stride=1, pad=1)
    w1_mat = params["c1_w"].transpose(2, 3, 1, 0).reshape(9 * c_out, c_out)
    a1 = _conv_bn_gelu_layer(p1, w1_mat, params["c1_g"], params["c1_beta"],
                             bn_groups=1, out_dtype=jnp.bfloat16)
    a1 = a1.reshape(n, ho1, wo1, c_out)

    # --- ConvBlock.conv2: Conv2d(k=3, s=1, p=1) + BN + GELU (final layer -> f32)
    p2, ho2, wo2 = _im2col_nhwc(a1, ksize=3, stride=1, pad=1)
    w2_mat = params["c2_w"].transpose(2, 3, 1, 0).reshape(9 * c_out, c_out)
    a2 = _conv_bn_gelu_layer(p2, w2_mat, params["c2_g"], params["c2_beta"],
                             bn_groups=1, out_dtype=jnp.float32)
    a2 = a2.reshape(n, ho2, wo2, c_out)

    # Only the final result converts back to NCHW to match the PyTorch module.
    return jnp.transpose(a2, (0, 3, 1, 2))


# -------------------------------- reference -------------------------------- #

def _reference(x, params):
    def bn_gelu(y, g, b):
        mean = jnp.mean(y, axis=(0, 2, 3), keepdims=True)
        var = jnp.mean((y - mean) ** 2, axis=(0, 2, 3), keepdims=True)
        z = (y - mean) * lax.rsqrt(var + _BN_EPS)
        z = z * g[None, :, None, None] + b[None, :, None, None]
        return jax.nn.gelu(z, approximate=False)

    dn = ("NCHW", "OIHW", "NCHW")
    # ConvTranspose2d(k=4, s=2, p=1) via lhs_dilation + flipped/swapped kernel.
    w_up = jnp.flip(params["up_w"], (2, 3)).transpose(1, 0, 2, 3)  # [C_out, C_in, 4, 4]
    y = lax.conv_general_dilated(x, w_up, window_strides=(1, 1),
                                 padding=((2, 2), (2, 2)), lhs_dilation=(2, 2),
                                 dimension_numbers=dn)
    y = bn_gelu(y + params["up_b"][None, :, None, None], params["up_g"], params["up_beta"])

    y = lax.conv_general_dilated(y, params["c1_w"], (1, 1), ((1, 1), (1, 1)),
                                 dimension_numbers=dn)
    y = bn_gelu(y + params["c1_b"][None, :, None, None], params["c1_g"], params["c1_beta"])

    y = lax.conv_general_dilated(y, params["c2_w"], (1, 1), ((1, 1), (1, 1)),
                                 dimension_numbers=dn)
    y = bn_gelu(y + params["c2_b"][None, :, None, None], params["c2_g"], params["c2_beta"])
    return y


# ----------------------------------- main ----------------------------------- #

if __name__ == "__main__":
    N, C_IN, C_OUT, H, W = 2, 4, 8, 16, 16

    key = jax.random.PRNGKey(0)
    keys = jax.random.split(key, 11)
    x = jax.random.normal(keys[0], (N, C_IN, H, W), dtype=jnp.float32)

    def uinit(k, shape, fan_in):
        bound = 1.0 / (fan_in ** 0.5)
        return jax.random.uniform(k, shape, jnp.float32, -bound, bound)

    params = {
        # ConvTranspose2d weight layout: [C_in, C_out, 4, 4]
        "up_w": uinit(keys[1], (C_IN, C_OUT, 4, 4), C_IN * 16),
        "up_b": uinit(keys[2], (C_OUT,), C_IN * 16),
        "up_g": 1.0 + 0.1 * jax.random.normal(keys[3], (C_OUT,), jnp.float32),
        "up_beta": 0.1 * jax.random.normal(keys[4], (C_OUT,), jnp.float32),
        # Conv2d weight layout: [C_out, C_in, 3, 3]
        "c1_w": uinit(keys[5], (C_OUT, C_OUT, 3, 3), C_OUT * 9),
        "c1_b": uinit(keys[6], (C_OUT,), C_OUT * 9),
        "c1_g": 1.0 + 0.1 * jax.random.normal(keys[7], (C_OUT,), jnp.float32),
        "c1_beta": 0.1 * jax.random.normal(keys[8], (C_OUT,), jnp.float32),
        "c2_w": uinit(keys[9], (C_OUT, C_OUT, 3, 3), C_OUT * 9),
        "c2_b": uinit(keys[10], (C_OUT,), C_OUT * 9),
        "c2_g": jnp.ones((C_OUT,), jnp.float32),
        "c2_beta": jnp.zeros((C_OUT,), jnp.float32),
    }

    out = upblock_forward(x, params)
    jax.block_until_ready(out)
    assert out.shape == (N, C_OUT, 2 * H, 2 * W), out.shape

    ref = _reference(x, params)
    max_err = float(jnp.max(jnp.abs(out - ref)))
    # Tolerance reflects bf16 MXU operands and bf16 intermediate activations
    # across three stacked conv+BN+GELU layers (reference is full f32).
    assert jnp.allclose(out, ref, rtol=5e-2, atol=5e-2), \
        f"mismatch, max abs err={max_err}"

    print("KERNEL_OK")
</pallas_src>

<mosaic_0001>
module attributes {stable_mosaic.version = 11 : i64} {
  func.func @_conv_stats_kernel(%arg0: i32, %arg1: memref<512x36xbf16, #tpu.memory_space<vmem>>, %arg2: memref<36x32xbf16, #tpu.memory_space<vmem>>, %arg3: memref<512x32xbf16, #tpu.memory_space<vmem>>, %arg4: memref<8x32xf32, #tpu.memory_space<vmem>>, %arg5: memref<8x32xf32, #tpu.memory_space<vmem>>) attributes {dimension_semantics = [#tpu.dimension_semantics<parallel>], iteration_bounds = array<i64: 1>, scalar_prefetch = 0 : i64, scratch_operands = 0 : i64, tpu.core_type = #tpu.core_type<tc>, window_params = [{transform_indices = @transform_0, window_bounds = array<i64: 512, 36>}, {pipeline_mode = #tpu.pipeline_mode<synchronous>, transform_indices = @transform_1, window_bounds = array<i64: 36, 32>}, {transform_indices = @transform_2, window_bounds = array<i64: 512, 32>}, {transform_indices = @transform_3, window_bounds = array<i64: 8, 32>}, {transform_indices = @transform_4, window_bounds = array<i64: 8, 32>}]} {
    %c0 = arith.constant 0 : index
    %c0_0 = arith.constant 0 : index
    %0 = vector.load %arg1[%c0, %c0_0] : memref<512x36xbf16, #tpu.memory_space<vmem>>, vector<512x36xbf16>
    %c0_1 = arith.constant 0 : index
    %c0_2 = arith.constant 0 : index
    %1 = vector.load %arg2[%c0_1, %c0_2] : memref<36x32xbf16, #tpu.memory_space<vmem>>, vector<36x32xbf16>
    %cst = arith.constant dense<0.000000e+00> : vector<512x32xf32>
    %2 = tpu.matmul %0, %1, %cst {dimension_numbers = #tpu.dot_dimension_numbers<[1], [0], [0], [1], [0, 0, 1, 1], [], []>} : vector<512x36xbf16>, vector<36x32xbf16>, vector<512x32xf32> -> vector<512x32xf32>
    %3 = arith.truncf %2 : vector<512x32xf32> to vector<512x32xbf16>
    %c0_3 = arith.constant 0 : index
    %c0_4 = arith.constant 0 : index
    %4 = vector.load %arg3[%c0_3, %c0_4] : memref<512x32xbf16, #tpu.memory_space<vmem>>, vector<512x32xbf16>
    tpu.vector_store %arg3[%c0_3, %c0_4], %3 {strides = array<i32>} : memref<512x32xbf16, #tpu.memory_space<vmem>>, vector<512x32xbf16>,
    %5 = vector.shape_cast %2 : vector<512x32xf32> to vector<64x8x32xf32>
    %cst_5 = arith.constant dense<0.000000e+00> : vector<8x32xf32>
    %6 = vector.multi_reduction <add>, %5, %cst_5 [0] : vector<64x8x32xf32> to vector<8x32xf32>
    %c0_6 = arith.constant 0 : index
    %c0_7 = arith.constant 0 : index
    %7 = vector.load %arg4[%c0_6, %c0_7] : memref<8x32xf32, #tpu.memory_space<vmem>>, vector<8x32xf32>
    tpu.vector_store %arg4[%c0_6, %c0_7], %6 {strides = array<i32>} : memref<8x32xf32, #tpu.memory_space<vmem>>, vector<8x32xf32>,
    %8 = arith.mulf %5, %5 : vector<64x8x32xf32>
    %cst_8 = arith.constant dense<0.000000e+00> : vector<8x32xf32>
    %9 = vector.multi_reduction <add>, %8, %cst_8 [0] : vector<64x8x32xf32> to vector<8x32xf32>
    %c0_9 = arith.constant 0 : index
    %c0_10 = arith.constant 0 : index
    %10 = vector.load %arg5[%c0_9, %c0_10] : memref<8x32xf32, #tpu.memory_space<vmem>>, vector<8x32xf32>
    tpu.vector_store %arg5[%c0_9, %c0_10], %9 {strides = array<i32>} : memref<8x32xf32, #tpu.memory_space<vmem>>, vector<8x32xf32>,
    return
  }
  func.func @transform_0(%arg0: i32) -> (i32, i32) {
    %c0_i32 = arith.constant 0 : i32
    %c0_i32_0 = arith.constant 0 : i32
    return %arg0, %c0_i32 : i32, i32
  }
  func.func @transform_1(%arg0: i32) -> (i32, i32) {
    %c0_i32 = arith.constant 0 : i32
    %c0_i32_0 = arith.constant 0 : i32
    %c0_i32_1 = arith.constant 0 : i32
    return %c0_i32, %c0_i32_0 : i32, i32
  }
  func.func @transform_2(%arg0: i32) -> (i32, i32) {
    %c0_i32 = arith.constant 0 : i32
    %c0_i32_0 = arith.constant 0 : i32
    return %arg0, %c0_i32 : i32, i32
  }
  func.func @transform_3(%arg0: i32) -> (i32, i32) {
    %c0_i32 = arith.constant 0 : i32
    %c0_i32_0 = arith.constant 0 : i32
    return %arg0, %c0_i32 : i32, i32
  }
  func.func @transform_4(%arg0: i32) -> (i32, i32) {
    %c0_i32 = arith.constant 0 : i32
    %c0_i32_0 = arith.constant 0 : i32
    return %arg0, %c0_i32 : i32, i32
  }
}

module attributes {stable_mosaic.version = 11 : i64} {
  func.func @_bn_gelu_kernel(%arg0: i32, %arg1: memref<128x128xbf16, #tpu.memory_space<vmem>>, %arg2: memref<2x128xf32, #tpu.memory_space<vmem>>, %arg3: memref<128x128xbf16, #tpu.memory_space<vmem>>) attributes {dimension_semantics = [#tpu.dimension_semantics<parallel>], iteration_bounds = array<i64: 1>, scalar_prefetch = 0 : i64, scratch_operands = 0 : i64, tpu.core_type = #tpu.core_type<tc>, window_params = [{transform_indices = @transform_0, window_bounds = array<i64: 128, 128>}, {pipeline_mode = #tpu.pipeline_mode<synchronous>, transform_indices = @transform_1, window_bounds = array<i64: 2, 128>}, {transform_indices = @transform_2, window_bounds = array<i64: 128, 128>}]} {
    %c0 = arith.constant 0 : index
    %c0_0 = arith.constant 0 : index
    %0 = vector.load %arg1[%c0, %c0_0] : memref<128x128xbf16, #tpu.memory_space<vmem>>, vector<128x128xbf16>
    %1 = arith.extf %0 : vector<128x128xbf16> to vector<128x128xf32>
    %c0_1 = arith.constant 0 : index
    %c0_2 = arith.constant 0 : index
    %2 = vector.load %arg2[%c0_1, %c0_2] : memref<2x128xf32, #tpu.memory_space<vmem>>, vector<1x128xf32>
    %3 = vector.broadcast %2 : vector<1x128xf32> to vector<128x128xf32>
    %4 = arith.mulf %1, %3 : vector<128x128xf32>
    %c1 = arith.constant 1 : index
    %c0_3 = arith.constant 0 : index
    %5 = vector.load %arg2[%c1, %c0_3] : memref<2x128xf32, #tpu.memory_space<vmem>>, vector<1x128xf32>
    %6 = vector.broadcast %5 : vector<1x128xf32> to vector<128x128xf32>
    %7 = arith.addf %4, %6 : vector<128x128xf32>
    %cst = arith.constant 5.000000e-01 : f32
    %8 = vector.broadcast %cst : f32 to vector<128x128xf32>
    %9 = arith.mulf %8, %7 : vector<128x128xf32>
    %cst_4 = arith.constant 0.707106769 : f32
    %10 = vector.broadcast %cst_4 : f32 to vector<128x128xf32>
    %11 = arith.mulf %7, %10 : vector<128x128xf32>
    %12 = math.erf %11 : vector<128x128xf32>
    %cst_5 = arith.constant 1.000000e+00 : f32
    %13 = vector.broadcast %cst_5 : f32 to vector<128x128xf32>
    %14 = arith.addf %13, %12 : vector<128x128xf32>
    %15 = arith.mulf %9, %14 : vector<128x128xf32>
    %16 = arith.truncf %15 : vector<128x128xf32> to vector<128x128xbf16>
    %c0_6 = arith.constant 0 : index
    %c0_7 = arith.constant 0 : index
    %17 = vector.load %arg3[%c0_6, %c0_7] : memref<128x128xbf16, #tpu.memory_space<vmem>>, vector<128x128xbf16>
    tpu.vector_store %arg3[%c0_6, %c0_7], %16 {strides = array<i32>} : memref<128x128xbf16, #tpu.memory_space<vmem>>, vector<128x128xbf16>,
    return
  }
  func.func @transform_0(%arg0: i32) -> (i32, i32) {
    %c0_i32 = arith.constant 0 : i32
    %c0_i32_0 = arith.constant 0 : i32
    return %arg0, %c0_i32 : i32, i32
  }
  func.func @transform_1(%arg0: i32) -> (i32, i32) {
    %c0_i32 = arith.constant 0 : i32
    %c0_i32_0 = arith.constant 0 : i32
    %c0_i32_1 = arith.constant 0 : i32
    return %c0_i32, %c0_i32_0 : i32, i32
  }
  func.func @transform_2(%arg0: i32) -> (i32, i32) {
    %c0_i32 = arith.constant 0 : i32
    %c0_i32_0 = arith.constant 0 : i32
    return %arg0, %c0_i32 : i32, i32
  }
}

module attributes {stable_mosaic.version = 11 : i64} {
  func.func @_conv_stats_kernel(%arg0: i32, %arg1: memref<1024x72xbf16, #tpu.memory_space<vmem>>, %arg2: memref<72x8xbf16, #tpu.memory_space<vmem>>, %arg3: memref<1024x8xbf16, #tpu.memory_space<vmem>>, %arg4: memref<8x8xf32, #tpu.memory_space<vmem>>, %arg5: memref<8x8xf32, #tpu.memory_space<vmem>>) attributes {dimension_semantics = [#tpu.dimension_semantics<parallel>], iteration_bounds = array<i64: 2>, scalar_prefetch = 0 : i64, scratch_operands = 0 : i64, tpu.core_type = #tpu.core_type<tc>, window_params = [{transform_indices = @transform_0, window_bounds = array<i64: 1024, 72>}, {pipeline_mode = #tpu.pipeline_mode<synchronous>, transform_indices = @transform_1, window_bounds = array<i64: 72, 8>}, {transform_indices = @transform_2, window_bounds = array<i64: 1024, 8>}, {transform_indices = @transform_3, window_bounds = array<i64: 8, 8>}, {transform_indices = @transform_4, window_bounds = array<i64: 8, 8>}]} {
    %c0 = arith.constant 0 : index
    %c0_0 = arith.constant 0 : index
    %0 = vector.load %arg1[%c0, %c0_0] : memref<1024x72xbf16, #tpu.memory_space<vmem>>, vector<1024x72xbf16>
    %c0_1 = arith.constant 0 : index
    %c0_2 = arith.constant 0 : index
    %1 = vector.load %arg2[%c0_1, %c0_2] : memref<72x8xbf16, #tpu.memory_space<vmem>>, vector<72x8xbf16>
    %cst = arith.constant dense<0.000000e+00> : vector<1024x8xf32>
    %2 = tpu.matmul %0, %1, %cst {dimension_numbers = #tpu.dot_dimension_numbers<[1], [0], [0], [1], [0, 0, 1, 1], [], []>} : vector<1024x72xbf16>, vector<72x8xbf16>, vector<1024x8xf32> -> vector<1024x8xf32>
    %3 = arith.truncf %2 : vector<1024x8xf32> to vector<1024x8xbf16>
    %c0_3 = arith.constant 0 : index
    %c0_4 = arith.constant 0 : index
    %4 = vector.load %arg3[%c0_3, %c0_4] : memref<1024x8xbf16, #tpu.memory_space<vmem>>, vector<1024x8xbf16>
    tpu.vector_store %arg3[%c0_3, %c0_4], %3 {strides = array<i32>} : memref<1024x8xbf16, #tpu.memory_space<vmem>>, vector<1024x8xbf16>,
    %5 = vector.shape_cast %2 : vector<1024x8xf32> to vector<128x8x8xf32>
    %cst_5 = arith.constant dense<0.000000e+00> : vector<8x8xf32>
    %6 = vector.multi_reduction <add>, %5, %cst_5 [0] : vector<128x8x8xf32> to vector<8x8xf32>
    %c0_6 = arith.constant 0 : index
    %c0_7 = arith.constant 0 : index
    %7 = vector.load %arg4[%c0_6, %c0_7] : memref<8x8xf32, #tpu.memory_space<vmem>>, vector<8x8xf32>
    tpu.vector_store %arg4[%c0_6, %c0_7], %6 {strides = array<i32>} : memref<8x8xf32, #tpu.memory_space<vmem>>, vector<8x8xf32>,
    %8 = arith.mulf %5, %5 : vector<128x8x8xf32>
    %cst_8 = arith.constant dense<0.000000e+00> : vector<8x8xf32>
    %9 = vector.multi_reduction <add>, %8, %cst_8 [0] : vector<128x8x8xf32> to vector<8x8xf32>
    %c0_9 = arith.constant 0 : index
    %c0_10 = arith.constant 0 : index
    %10 = vector.load %arg5[%c0_9, %c0_10] : memref<8x8xf32, #tpu.memory_space<vmem>>, vector<8x8xf32>
    tpu.vector_store %arg5[%c0_9, %c0_10], %9 {strides = array<i32>} : memref<8x8xf32, #tpu.memory_space<vmem>>, vector<8x8xf32>,
    return
  }
  func.func @transform_0(%arg0: i32) -> (i32, i32) {
    %c0_i32 = arith.constant 0 : i32
    %c0_i32_0 = arith.constant 0 : i32
    return %arg0, %c0_i32 : i32, i32
  }
  func.func @transform_1(%arg0: i32) -> (i32, i32) {
    %c0_i32 = arith.constant 0 : i32
    %c0_i32_0 = arith.constant 0 : i32
    %c0_i32_1 = arith.constant 0 : i32
    return %c0_i32, %c0_i32_0 : i32, i32
  }
  func.func @transform_2(%arg0: i32) -> (i32, i32) {
    %c0_i32 = arith.constant 0 : i32
    %c0_i32_0 = arith.constant 0 : i32
    return %arg0, %c0_i32 : i32, i32
  }
  func.func @transform_3(%arg0: i32) -> (i32, i32) {
    %c0_i32 = arith.constant 0 : i32
    %c0_i32_0 = arith.constant 0 : i32
    return %arg0, %c0_i32 : i32, i32
  }
  func.func @transform_4(%arg0: i32) -> (i32, i32) {
    %c0_i32 = arith.constant 0 : i32
    %c0_i32_0 = arith.constant 0 : i32
    return %arg0, %c0_i32 : i32, i32
  }
}

module attributes {stable_mosaic.version = 11 : i64} {
  func.func @_bn_gelu_kernel(%arg0: i32, %arg1: memref<64x128xbf16, #tpu.memory_space<vmem>>, %arg2: memref<2x128xf32, #tpu.memory_space<vmem>>, %arg3: memref<64x128xbf16, #tpu.memory_space<vmem>>) attributes {dimension_semantics = [#tpu.dimension_semantics<parallel>], iteration_bounds = array<i64: 2>, scalar_prefetch = 0 : i64, scratch_operands = 0 : i64, tpu.core_type = #tpu.core_type<tc>, window_params = [{transform_indices = @transform_0, window_bounds = array<i64: 64, 128>}, {pipeline_mode = #tpu.pipeline_mode<synchronous>, transform_indices = @transform_1, window_bounds = array<i64: 2, 128>}, {transform_indices = @transform_2, window_bounds = array<i64: 64, 128>}]} {
    %c0 = arith.constant 0 : index
    %c0_0 = arith.constant 0 : index
    %0 = vector.load %arg1[%c0, %c0_0] : memref<64x128xbf16, #tpu.memory_space<vmem>>, vector<64x128xbf16>
    %1 = arith.extf %0 : vector<64x128xbf16> to vector<64x128xf32>
    %c0_1 = arith.constant 0 : index
    %c0_2 = arith.constant 0 : index
    %2 = vector.load %arg2[%c0_1, %c0_2] : memref<2x128xf32, #tpu.memory_space<vmem>>, vector<1x128xf32>
    %3 = vector.broadcast %2 : vector<1x128xf32> to vector<64x128xf32>
    %4 = arith.mulf %1, %3 : vector<64x128xf32>
    %c1 = arith.constant 1 : index
    %c0_3 = arith.constant 0 : index
    %5 = vector.load %arg2[%c1, %c0_3] : memref<2x128xf32, #tpu.memory_space<vmem>>, vector<1x128xf32>
    %6 = vector.broadcast %5 : vector<1x128xf32> to vector<64x128xf32>
    %7 = arith.addf %4, %6 : vector<64x128xf32>
    %cst = arith.constant 5.000000e-01 : f32
    %8 = vector.broadcast %cst : f32 to vector<64x128xf32>
    %9 = arith.mulf %8, %7 : vector<64x128xf32>
    %cst_4 = arith.constant 0.707106769 : f32
    %10 = vector.broadcast %cst_4 : f32 to vector<64x128xf32>
    %11 = arith.mulf %7, %10 : vector<64x128xf32>
    %12 = math.erf %11 : vector<64x128xf32>
    %cst_5 = arith.constant 1.000000e+00 : f32
    %13 = vector.broadcast %cst_5 : f32 to vector<64x128xf32>
    %14 = arith.addf %13, %12 : vector<64x128xf32>
    %15 = arith.mulf %9, %14 : vector<64x128xf32>
    %16 = arith.truncf %15 : vector<64x128xf32> to vector<64x128xbf16>
    %c0_6 = arith.constant 0 : index
    %c0_7 = arith.constant 0 : index
    %17 = vector.load %arg3[%c0_6, %c0_7] : memref<64x128xbf16, #tpu.memory_space<vmem>>, vector<64x128xbf16>
    tpu.vector_store %arg3[%c0_6, %c0_7], %16 {strides = array<i32>} : memref<64x128xbf16, #tpu.memory_space<vmem>>, vector<64x128xbf16>,
    return
  }
  func.func @transform_0(%arg0: i32) -> (i32, i32) {
    %c0_i32 = arith.constant 0 : i32
    %c0_i32_0 = arith.constant 0 : i32
    return %arg0, %c0_i32 : i32, i32
  }
  func.func @transform_1(%arg0: i32) -> (i32, i32) {
    %c0_i32 = arith.constant 0 : i32
    %c0_i32_0 = arith.constant 0 : i32
    %c0_i32_1 = arith.constant 0 : i32
    return %c0_i32, %c0_i32_0 : i32, i32
  }
  func.func @transform_2(%arg0: i32) -> (i32, i32) {
    %c0_i32 = arith.constant 0 : i32
    %c0_i32_0 = arith.constant 0 : i32
    return %arg0, %c0_i32 : i32, i32
  }
}

module attributes {stable_mosaic.version = 11 : i64} {
  func.func @_bn_gelu_kernel(%arg0: i32, %arg1: memref<64x128xbf16, #tpu.memory_space<vmem>>, %arg2: memref<2x128xf32, #tpu.memory_space<vmem>>, %arg3: memref<64x128xf32, #tpu.memory_space<vmem>>) attributes {dimension_semantics = [#tpu.dimension_semantics<parallel>], iteration_bounds = array<i64: 2>, scalar_prefetch = 0 : i64, scratch_operands = 0 : i64, tpu.core_type = #tpu.core_type<tc>, window_params = [{transform_indices = @transform_0, window_bounds = array<i64: 64, 128>}, {pipeline_mode = #tpu.pipeline_mode<synchronous>, transform_indices = @transform_1, window_bounds = array<i64: 2, 128>}, {transform_indices = @transform_2, window_bounds = array<i64: 64, 128>}]} {
    %c0 = arith.constant 0 : index
    %c0_0 = arith.constant 0 : index
    %0 = vector.load %arg1[%c0, %c0_0] : memref<64x128xbf16, #tpu.memory_space<vmem>>, vector<64x128xbf16>
    %1 = arith.extf %0 : vector<64x128xbf16> to vector<64x128xf32>
    %c0_1 = arith.constant 0 : index
    %c0_2 = arith.constant 0 : index
    %2 = vector.load %arg2[%c0_1, %c0_2] : memref<2x128xf32, #tpu.memory_space<vmem>>, vector<1x128xf32>
    %3 = vector.broadcast %2 : vector<1x128xf32> to vector<64x128xf32>
    %4 = arith.mulf %1, %3 : vector<64x128xf32>
    %c1 = arith.constant 1 : index
    %c0_3 = arith.constant 0 : index
    %5 = vector.load %arg2[%c1, %c0_3] : memref<2x128xf32, #tpu.memory_space<vmem>>, vector<1x128xf32>
    %6 = vector.broadcast %5 : vector<1x128xf32> to vector<64x128xf32>
    %7 = arith.addf %4, %6 : vector<64x128xf32>
    %cst = arith.constant 5.000000e-01 : f32
    %8 = vector.broadcast %cst : f32 to vector<64x128xf32>
    %9 = arith.mulf %8, %7 : vector<64x128xf32>
    %cst_4 = arith.constant 0.707106769 : f32
    %10 = vector.broadcast %cst_4 : f32 to vector<64x128xf32>
    %11 = arith.mulf %7, %10 : vector<64x128xf32>
    %12 = math.erf %11 : vector<64x128xf32>
    %cst_5 = arith.constant 1.000000e+00 : f32
    %13 = vector.broadcast %cst_5 : f32 to vector<64x128xf32>
    %14 = arith.addf %13, %12 : vector<64x128xf32>
    %15 = arith.mulf %9, %14 : vector<64x128xf32>
    %c0_6 = arith.constant 0 : index
    %c0_7 = arith.constant 0 : index
    %16 = vector.load %arg3[%c0_6, %c0_7] : memref<64x128xf32, #tpu.memory_space<vmem>>, vector<64x128xf32>
    tpu.vector_store %arg3[%c0_6, %c0_7], %15 {strides = array<i32>} : memref<64x128xf32, #tpu.memory_space<vmem>>, vector<64x128xf32>,
    return
  }
  func.func @transform_0(%arg0: i32) -> (i32, i32) {
    %c0_i32 = arith.constant 0 : i32
    %c0_i32_0 = arith.constant 0 : i32
    return %arg0, %c0_i32 : i32, i32
  }
  func.func @transform_1(%arg0: i32) -> (i32, i32) {
    %c0_i32 = arith.constant 0 : i32
    %c0_i32_0 = arith.constant 0 : i32
    %c0_i32_1 = arith.constant 0 : i32
    return %c0_i32, %c0_i32_0 : i32, i32
  }
  func.func @transform_2(%arg0: i32) -> (i32, i32) {
    %c0_i32 = arith.constant 0 : i32
    %c0_i32_0 = arith.constant 0 : i32
    return %arg0, %c0_i32 : i32, i32
  }
}

</mosaic_0001>

<llo_original>
// kernel: tile.37
$region0: #{tile.37}
  #allocation0 [shape = 's32[1]{0}', space=sflag, size = 0x4, scoped, tag = 'scoped memory for tile.37']
  %s0 = inlined_call_operand.vmem [shape: f32[8], index: 0, kind: input, shape index: {}]
  %s1 = inlined_call_operand.vmem [shape: f32[16,8], index: 1, kind: output, shape index: {}]
  // Predicated region
  $region2: #{tile.37} parent=0 // pred_check
    _
  $region3: #{tile.37} parent=0 // pred_check_branch
    %3 = sbr.rel (0) target = $region5
  $region4: #{tile.37} parent=0 // pred_region
    _
  $region5: #{tile.37} parent=0 // pred_fallthru
    _
  %v4 = vld [vmem:[%s0] ss:$0 sm:$0xff]
  %5 = vst [vmem:[%s1] sm:$0xff] %v4
  %s6 = scalar_lea.vmem %s1, 8
  %7 = vst [vmem:[%s6] sm:$0xff] %v4

// kernel: tile.39
$region0: #{tile.39}
  %s0 = inlined_call_operand.vmem [shape: f32[16,8], index: 0, kind: input, shape index: {}]
  %s1 = inlined_call_operand.vmem [shape: f32[1,128], index: 1, kind: output, shape index: {}]
  $region1: #{tile.39} parent=0
    #allocation0 [shape = 'u8[4096]{0}', space=vmem, size = 0x1000, scoped, tag = 'scoped mem for output reshape']
    %v2 = vld [vmem:[%s0] sm:$0x1]
    %vm3 = vcmask 64512
    %4 = vst.msk [vmem:[#allocation0] sm:$0x1] %vm3, %v2
    %s5 = scalar_lea.vmem %s0, 15
    %v6 = vld [vmem:[%s5] sm:$0x1]
    %7 = vrot.lane.b32.xlu0 %v6, 120
    %v8 = vpop.permute.xlu0 %7
    %vm9 = vcmask 1048512
    %10 = vst.msk [vmem:[#allocation0] sm:$0x1] %vm9, %v8
    %s11 = scalar_lea.vmem %s0, 14
    %v12 = vld [vmem:[%s11] sm:$0x1]
    %13 = vrot.lane.b32.xlu0 %v12, 112
    %v14 = vpop.permute.xlu0 %13
    %vm15 = vcmask 982912
    %16 = vst.msk [vmem:[#allocation0] sm:$0x1] %vm15, %v14
    %s17 = scalar_lea.vmem %s0, 13
    %v18 = vld [vmem:[%s17] sm:$0x1]
    %19 = vrot.lane.b32.xlu0 %v18, 104
    %v20 = vpop.permute.xlu0 %19
    %vm21 = vcmask 917312
    %22 = vst.msk [vmem:[#allocation0] sm:$0x1] %vm21, %v20
    %s23 = scalar_lea.vmem %s0, 12
    %v24 = vld [vmem:[%s23] sm:$0x1]
    %25 = vrot.lane.b32.xlu0 %v24, 96
    %v26 = vpop.permute.xlu0 %25
    %vm27 = vcmask 851712
    %28 = vst.msk [vmem:[#allocation0] sm:$0x1] %vm27, %v26
    %s29 = scalar_lea.vmem %s0, 11
    %v30 = vld [vmem:[%s29] sm:$0x1]
    %31 = vrot.lane.b32.xlu0 %v30, 88
    %v32 = vpop.permute.xlu0 %31
    %vm33 = vcmask 786112
    %34 = vst.msk [vmem:[#allocation0] sm:$0x1] %vm33, %v32
    %s35 = scalar_lea.vmem %s0, 10
    %v36 = vld [vmem:[%s35] sm:$0x1]
    %37 = vrot.lane.b32.xlu0 %v36, 80
    %v38 = vpop.permute.xlu0 %37
    %vm39 = vcmask 720512
    %40 = vst.msk [vmem:[#allocation0] sm:$0x1] %vm39, %v38
    %s41 = scalar_lea.vmem %s0, 9
    %v42 = vld [vmem:[%s41] sm:$0x1]
    %43 = vrot.lane.b32.xlu0 %v42, 72
    %v44 = vpop.permute.xlu0 %43
    %vm45 = vcmask 654912
    %46 = vst.msk [vmem:[#allocation0] sm:$0x1] %vm45, %v44
    %s47 = scalar_lea.vmem %s0, 8
    %v48 = vld [vmem:[%s47] sm:$0x1]
    %49 = vrot.lane.b32.xlu0 %v48, 64
    %v50 = vpop.permute.xlu0 %49
    %vm51 = vcmask 589312
    %52 = vst.msk [vmem:[#allocation0] sm:$0x1] %vm51, %v50
    %s53 = scalar_lea.vmem %s0, 7
    %v54 = vld [vmem:[%s53] sm:$0x1]
    %55 = vrot.lane.b32.xlu0 %v54, 56
    %v56 = vpop.permute.xlu0 %55
    %vm57 = vcmask 523712
    %58 = vst.msk [vmem:[#allocation0] sm:$0x1] %vm57, %v56
    %s59 = scalar_lea.vmem %s0, 6
    %v60 = vld [vmem:[%s59] sm:$0x1]
    %61 = vrot.lane.b32.xlu0 %v60, 48
    %v62 = vpop.permute.xlu0 %61
    %vm63 = vcmask 458112
    %64 = vst.msk [vmem:[#allocation0] sm:$0x1] %vm63, %v62
    %s65 = scalar_lea.vmem %s0, 5
    %v66 = vld [vmem:[%s65] sm:$0x1]
    %67 = vrot.lane.b32.xlu0 %v66, 40
    %v68 = vpop.permute.xlu0 %67
    %vm69 = vcmask 392512
    %70 = vst.msk [vmem:[#allocation0] sm:$0x1] %vm69, %v68
    %s71 = scalar_lea.vmem %s0, 4
    %v72 = vld [vmem:[%s71] sm:$0x1]
    %73 = vrot.lane.b32.xlu0 %v72, 32
    %v74 = vpop.permute.xlu0 %73
    %vm75 = vcmask 326912
    %76 = vst.msk [vmem:[#allocation0] sm:$0x1] %vm75, %v74
    %s77 = scalar_lea.vmem %s0, 3
    %v78 = vld [vmem:[%s77] sm:$0x1]
    %79 = vrot.lane.b32.xlu0 %v78, 24
    %v80 = vpop.permute.xlu0 %79
    %vm81 = vcmask 261312
    %82 = vst.msk [vmem:[#allocation0] sm:$0x1] %vm81, %v80
    %s83 = scalar_lea.vmem %s0, 2
    %v84 = vld [vmem:[%s83] sm:$0x1]
    %85 = vrot.lane.b32.xlu0 %v84, 16
    %v86 = vpop.permute.xlu0 %85
    %vm87 = vcmask 195712
    %88 = vst.msk [vmem:[#allocation0] sm:$0x1] %vm87, %v86
    %s89 = scalar_lea.vmem %s0, 1
    %v90 = vld [vmem:[%s89] sm:$0x1]
    %91 = vrot.lane.b32.xlu0 %v90, 8
    %v92 = vpop.permute.xlu0 %91
    %vm93 = vcmask 130112
    %94 = vst.msk [vmem:[#allocation0] sm:$0x1] %vm93, %v92
    %s96 = sshll.u32 1, 1
    %s97 = ssub.s32 %s96, 1
    %v99 = vld [vmem:[#allocation0] sm:%s97]
    %s100 = sshll.u32 1, 1
    %s101 = ssub.s32 %s100, 1
    %102 = vst [vmem:[%s1] sm:%s101] %v99

// kernel: upblock_forward.7
$region0: #{upblock_forward.7}
  #allocation0 [shape = 'u32[]', space=smem, size = 0x4, offset = 0x4, fixed_abs, tag = 'smem constant byte address 0x4 - core index']
  #allocation1 [shape = 'u32[144,128]{1,0:T(1,128)}', space=vmem, size = 0x12000, scoped, tag = 'internal scratch']
  %s0 = inlined_call_operand.vmem [shape: bf16[128,128], index: 0, kind: input, shape index: {}]
  %s1 = inlined_call_operand.vmem [shape: f32[2,128], index: 1, kind: input, shape index: {}]
  %s2 = inlined_call_operand.vmem [shape: bf16[128,128], index: 2, kind: output, shape index: {}]
  %s3 = sld [smem:[#allocation0]]
  $region18: #{upblock_forward.7} parent=0
    _
  %s5 = ssub.s32 1, %s3
  %s6 = scalar_select 0, %s5, %s3
  // Predicated region
  $region2: #{upblock_forward.7} parent=0 // pred_check
    _
  $region3: #{upblock_forward.7} parent=0 // pred_check_branch
    %8 = sbr.rel (0) target = $region5
  $region4: #{upblock_forward.7} parent=0 // pred_region
    _
  $region5: #{upblock_forward.7} parent=0 // pred_fallthru
    _
  // Predicated region
  $region6: #{upblock_forward.7} parent=0 // pred_check
    _
  $region7: #{upblock_forward.7} parent=0 // pred_check_branch
    %10 = sbr.rel (0) target = $region9
  $region8: #{upblock_forward.7} parent=0 // pred_region
    _
  $region9: #{upblock_forward.7} parent=0 // pred_fallthru
    _
  %v11 = vld [vmem:[%s0] sm:$0xf]
  %v12 = vld [vmem:[%s0 + $0x4] sm:$0xf]
  %v13 = vld [vmem:[%s0 + $0x8] sm:$0xf]
  %v14 = vld [vmem:[%s0 + $0xc] sm:$0xf]
  %v15 = vld [vmem:[%s0 + $0x10] sm:$0xf]
  %v16 = vld [vmem:[%s0 + $0x14] sm:$0xf]
  %v17 = vld [vmem:[%s0 + $0x18] sm:$0xf]
  %v18 = vld [vmem:[%s0 + $0x1c] sm:$0xf]
  %v19 = vld [vmem:[%s0 + $0x20] sm:$0xf]
  %v20 = vld [vmem:[%s0 + $0x24] sm:$0xf]
  %v21 = vld [vmem:[%s0 + $0x28] sm:$0xf]
  %v22 = vld [vmem:[%s0 + $0x2c] sm:$0xf]
  %v23 = vld [vmem:[%s0 + $0x30] sm:$0xf]
  %v24 = vld [vmem:[%s0 + $0x34] sm:$0xf]
  %v25 = vld [vmem:[%s0 + $0x38] sm:$0xf]
  %v26 = vld [vmem:[%s0 + $0x3c] sm:$0xf]
  %v27 = vunpack.c.l.bf16 %v11
  %v28 = vunpack.c.l.bf16 %v12
  %v29 = vunpack.c.l.bf16 %v13
  %v30 = vunpack.c.l.bf16 %v14
  %v31 = vunpack.c.l.bf16 %v15
  %v32 = vunpack.c.l.bf16 %v16
  %v33 = vunpack.c.l.bf16 %v17
  %v34 = vunpack.c.l.bf16 %v18
  %v35 = vunpack.c.l.bf16 %v19
  %v36 = vunpack.c.l.bf16 %v20
  %v37 = vunpack.c.l.bf16 %v21
  %v38 = vunpack.c.l.bf16 %v22
  %v39 = vunpack.c.l.bf16 %v23
  %v40 = vunpack.c.l.bf16 %v24
  %v41 = vunpack.c.l.bf16 %v25
  %v42 = vunpack.c.l.bf16 %v26
  %v43 = vld [vmem:[%s1] sm:$0x1]
  %v44 = vlaneseq
  %v45 = vshrl.u32 %v44, 7
  %v46 = vsub.s32 0, %v45
  %v47 = vrot.slane %v43, %v46
  %v48 = vmul.f32 %v27, %v47
  %v49 = vmul.f32 %v28, %v47
  %v50 = vmul.f32 %v29, %v47
  %v51 = vmul.f32 %v30, %v47
  %v52 = vmul.f32 %v31, %v47
  %v53 = vmul.f32 %v32, %v47
  %v54 = vmul.f32 %v33, %v47
  %v55 = vmul.f32 %v34, %v47
  %v56 = vmul.f32 %v35, %v47
  %v57 = vmul.f32 %v36, %v47
  %v58 = vmul.f32 %v37, %v47
  %v59 = vmul.f32 %v38, %v47
  %v60 = vmul.f32 %v39, %v47
  %v61 = vmul.f32 %v40, %v47
  %v62 = vmul.f32 %v41, %v47
  %v63 = vmul.f32 %v42, %v47
  %v64 = vld [vmem:[%s1 + $0x1] sm:$0x1]
  %v65 = vlaneseq
  %v66 = vshrl.u32 %v65, 7
  %v67 = vsub.s32 0, %v66
  %v68 = vrot.slane %v64, %v67
  %v69 = vadd.f32 %v48, %v68
  %v70 = vadd.f32 %v49, %v68
  %v71 = vadd.f32 %v50, %v68
  %v72 = vadd.f32 %v51, %v68
  %v73 = vadd.f32 %v52, %v68
  %v74 = vadd.f32 %v53, %v68
  %v75 = vadd.f32 %v54, %v68
  %v76 = vadd.f32 %v55, %v68
  %v77 = vadd.f32 %v56, %v68
  %v78 = vadd.f32 %v57, %v68
  %v79 = vadd.f32 %v58, %v68
  %v80 = vadd.f32 %v59, %v68
  %v81 = vadd.f32 %v60, %v68
  %v82 = vadd.f32 %v61, %v68
  %v83 = vadd.f32 %v62, %v68
  %v84 = vadd.f32 %v63, %v68
  %v85 = vmul.f32 %v69, 0.5
  %v86 = vmul.f32 %v70, 0.5
  %v87 = vmul.f32 %v71, 0.5
  %v88 = vmul.f32 %v72, 0.5
  %v89 = vmul.f32 %v73, 0.5
  %v90 = vmul.f32 %v74, 0.5
  %v91 = vmul.f32 %v75, 0.5
  %v92 = vmul.f32 %v76, 0.5
  %v93 = vmul.f32 %v77, 0.5
  %v94 = vmul.f32 %v78, 0.5
  %v95 = vmul.f32 %v79, 0.5
  %v96 = vmul.f32 %v80, 0.5
  %v97 = vmul.f32 %v81, 0.5
  %v98 = vmul.f32 %v82, 0.5
  %v99 = vmul.f32 %v83, 0.5
  %v100 = vmul.f32 %v84, 0.5
  %v101 = vmul.f32 %v69, 0.70710677
  %v102 = vmul.f32 %v70, 0.70710677
  %v103 = vmul.f32 %v71, 0.70710677
  %v104 = vmul.f32 %v72, 0.70710677
  %v105 = vmul.f32 %v73, 0.70710677
  %v106 = vmul.f32 %v74, 0.70710677
  %v107 = vmul.f32 %v75, 0.70710677
  %v108 = vmul.f32 %v76, 0.70710677
  %v109 = vmul.f32 %v77, 0.70710677
  %v110 = vmul.f32 %v78, 0.70710677
  %v111 = vmul.f32 %v79, 0.70710677
  %v112 = vmul.f32 %v80, 0.70710677
  %v113 = vmul.f32 %v81, 0.70710677
  %v114 = vmul.f32 %v82, 0.70710677
  %v115 = vmul.f32 %v83, 0.70710677
  %v116 = vmul.f32 %v84, 0.70710677
  %v117 = verf.f32.pop %v101
  %v118 = verf.f32.pop %v102
  %v119 = verf.f32.pop %v103
  %v120 = verf.f32.pop %v104
  %v121 = verf.f32.pop %v105
  %v122 = verf.f32.pop %v106
  %v123 = verf.f32.pop %v107
  %v124 = verf.f32.pop %v108
  %v125 = verf.f32.pop %v109
  %v126 = verf.f32.pop %v110
  %v127 = verf.f32.pop %v111
  %v128 = verf.f32.pop %v112
  %v129 = verf.f32.pop %v113
  %v130 = verf.f32.pop %v114
  %v131 = verf.f32.pop %v115
  %v132 = verf.f32.pop %v116
  %v133 = vadd.f32 %v117, 1.0
  %v134 = vadd.f32 %v118, 1.0
  %v135 = vadd.f32 %v119, 1.0
  %v136 = vadd.f32 %v120, 1.0
  %v137 = vadd.f32 %v121, 1.0
  %v138 = vadd.f32 %v122, 1.0
  %v139 = vadd.f32 %v123, 1.0
  %v140 = vadd.f32 %v124, 1.0
  %v141 = vadd.f32 %v125, 1.0
  %v142 = vadd.f32 %v126, 1.0
  %v143 = vadd.f32 %v127, 1.0
  %v144 = vadd.f32 %v128, 1.0
  %v145 = vadd.f32 %v129, 1.0
  %v146 = vadd.f32 %v130, 1.0
  %v147 = vadd.f32 %v131, 1.0
  %v148 = vadd.f32 %v132, 1.0
  %v149 = vmul.f32 %v85, %v133
  %v150 = vmul.f32 %v86, %v134
  %v151 = vmul.f32 %v87, %v135
  %v152 = vmul.f32 %v88, %v136
  %v153 = vmul.f32 %v89, %v137
  %v154 = vmul.f32 %v90, %v138
  %v155 = vmul.f32 %v91, %v139
  %v156 = vmul.f32 %v92, %v140
  %v157 = vmul.f32 %v93, %v141
  %v158 = vmul.f32 %v94, %v142
  %v159 = vmul.f32 %v95, %v143
  %v160 = vmul.f32 %v96, %v144
  %v161 = vmul.f32 %v97, %v145
  %v162 = vmul.f32 %v98, %v146
  %v163 = vmul.f32 %v99, %v147
  %v164 = vmul.f32 %v100, %v148
  %v165 = vpack.c.bf16 %v150, %v149
  %v166 = vpack.c.bf16 %v152, %v151
  %v167 = vpack.c.bf16 %v154, %v153
  %v168 = vpack.c.bf16 %v156, %v155
  %v169 = vpack.c.bf16 %v158, %v157
  %v170 = vpack.c.bf16 %v160, %v159
  %v171 = vpack.c.bf16 %v162, %v161
  %v172 = vpack.c.bf16 %v164, %v163
  %v181 = vunpack.c.l.b16 %v165
  %v182 = vunpack.c.h.b16 %v165
  %v183 = vunpack.c.l.b16 %v166
  %v184 = vunpack.c.h.b16 %v166
  %v185 = vunpack.c.l.b16 %v167
  %v186 = vunpack.c.h.b16 %v167
  %v187 = vunpack.c.l.b16 %v168
  %v188 = vunpack.c.h.b16 %v168
  %v189 = vunpack.c.l.b16 %v169
  %v190 = vunpack.c.h.b16 %v169
  %v191 = vunpack.c.l.b16 %v170
  %v192 = vunpack.c.h.b16 %v170
  %v193 = vunpack.c.l.b16 %v171
  %v194 = vunpack.c.h.b16 %v171
  %v195 = vunpack.c.l.b16 %v172
  %v196 = vunpack.c.h.b16 %v172
  %v197 = vpack.c.b16 %v181, %v181
  %v198 = vpack.c.b16 %v182, %v182
  %v199 = vpack.c.b16 %v183, %v183
  %v200 = vpack.c.b16 %v184, %v184
  %v201 = vpack.c.b16 %v185, %v185
  %v202 = vpack.c.b16 %v186, %v186
  %v203 = vpack.c.b16 %v187, %v187
  %v204 = vpack.c.b16 %v188, %v188
  %v205 = vpack.c.b16 %v189, %v189
  %v206 = vpack.c.b16 %v190, %v190
  %v207 = vpack.c.b16 %v191, %v191
  %v208 = vpack.c.b16 %v192, %v192
  %v209 = vpack.c.b16 %v193, %v193
  %v210 = vpack.c.b16 %v194, %v194
  %v211 = vpack.c.b16 %v195, %v195
  %v212 = vpack.c.b16 %v196, %v196
  %229 = vst [vmem:[%s2] sm:$0xf] %v197
  %230 = vst [vmem:[%s2 + $0x4] sm:$0xf] %v198
  %231 = vst [vmem:[%s2 + $0x8] sm:$0xf] %v199
  %232 = vst [vmem:[%s2 + $0xc] sm:$0xf] %v200
  %233 = vst [vmem:[%s2 + $0x10] sm:$0xf] %v201
  %234 = vst [vmem:[%s2 + $0x14] sm:$0xf] %v202
  %235 = vst [vmem:[%s2 + $0x18] sm:$0xf] %v203
  %236 = vst [vmem:[%s2 + $0x1c] sm:$0xf] %v204
  %237 = vst [vmem:[%s2 + $0x20] sm:$0xf] %v205
  %238 = vst [vmem:[%s2 + $0x24] sm:$0xf] %v206
  %239 = vst [vmem:[%s2 + $0x28] sm:$0xf] %v207
  %240 = vst [vmem:[%s2 + $0x2c] sm:$0xf] %v208
  %241 = vst [vmem:[%s2 + $0x30] sm:$0xf] %v209
  %242 = vst [vmem:[%s2 + $0x34] sm:$0xf] %v210
  %243 = vst [vmem:[%s2 + $0x38] sm:$0xf] %v211
  %244 = vst [vmem:[%s2 + $0x3c] sm:$0xf] %v212
  // Predicated region
  $region10: #{upblock_forward.7} parent=0 // pred_check
    _
  $region11: #{upblock_forward.7} parent=0 // pred_check_branch
    %246 = sbr.rel (0) target = $region13
  $region12: #{upblock_forward.7} parent=0 // pred_region
    _
  $region13: #{upblock_forward.7} parent=0 // pred_fallthru
    _
  // Predicated region
  $region14: #{upblock_forward.7} parent=0 // pred_check
    _
  $region15: #{upblock_forward.7} parent=0 // pred_check_branch
    %248 = sbr.rel (0) target = $region17
  $region16: #{upblock_forward.7} parent=0 // pred_region
    _
  $region17: #{upblock_forward.7} parent=0 // pred_fallthru
    _

// kernel: upblock_forward.6
$region0: #{upblock_forward.6}
  #allocation0 [shape = 'u32[]', space=smem, size = 0x4, offset = 0x4, fixed_abs, tag = 'smem constant byte address 0x4 - core index']
  #allocation1 [shape = 'u32[144,128]{1,0:T(1,128)}', space=vmem, size = 0x12000, scoped, tag = 'internal scratch']
  %s0 = inlined_call_operand.vmem [shape: bf16[512,36], index: 0, kind: input, shape index: {}]
  %s1 = inlined_call_operand.vmem [shape: bf16[36,32], index: 1, kind: input, shape index: {}]
  %s2 = inlined_call_operand.vmem [shape: bf16[512,32], index: 2, kind: output, shape index: {0}]
  %s3 = inlined_call_operand.vmem [shape: f32[8,32], index: 3, kind: output, shape index: {1}]
  %s4 = inlined_call_operand.vmem [shape: f32[8,32], index: 4, kind: output, shape index: {2}]
  %5 = xla_tuple %s2, %s3, %s4
  %s6 = sld [smem:[#allocation0]]
  $region34: #{upblock_forward.6} parent=0
    _
  %s8 = ssub.s32 1, %s6
  %s9 = scalar_select 0, %s8, %s6
  // Predicated region
  $region2: #{upblock_forward.6} parent=0 // pred_check
    _
  $region3: #{upblock_forward.6} parent=0 // pred_check_branch
    %11 = sbr.rel (0) target = $region5
  $region4: #{upblock_forward.6} parent=0 // pred_region
    _
  $region5: #{upblock_forward.6} parent=0 // pred_fallthru
    _
  // Predicated region
  $region6: #{upblock_forward.6} parent=0 // pred_check
    _
  $region7: #{upblock_forward.6} parent=0 // pred_check_branch
    %13 = sbr.rel (0) target = $region9
  $region8: #{upblock_forward.6} parent=0 // pred_region
    _
  $region9: #{upblock_forward.6} parent=0 // pred_fallthru
    _
  %v15 = vld [vmem:[%s0] sm:$0xf]
  %v16 = vld [vmem:[%s0 + $0x4] sm:$0xf]
  %v17 = vld [vmem:[%s0 + $0x8] sm:$0xf]
  %v18 = vld [vmem:[%s0 + $0xc] sm:$0xf]
  %v19 = vld [vmem:[%s0 + $0x10] sm:$0xf]
  %v20 = vld [vmem:[%s0 + $0x14] sm:$0xf]
  %v21 = vld [vmem:[%s0 + $0x18] sm:$0xf]
  %v22 = vld [vmem:[%s0 + $0x1c] sm:$0xf]
  %v23 = vld [vmem:[%s0 + $0x20] sm:$0xf]
  %v24 = vld [vmem:[%s0 + $0x24] sm:$0xf]
  %v25 = vld [vmem:[%s0 + $0x28] sm:$0xf]
  %v26 = vld [vmem:[%s0 + $0x2c] sm:$0xf]
  %v27 = vld [vmem:[%s0 + $0x30] sm:$0xf]
  %v28 = vld [vmem:[%s0 + $0x34] sm:$0xf]
  %v29 = vld [vmem:[%s0 + $0x38] sm:$0xf]
  %v30 = vld [vmem:[%s0 + $0x3c] sm:$0xf]
  %v31 = vld [vmem:[%s0 + $0x40] sm:$0xf]
  %v32 = vld [vmem:[%s0 + $0x44] sm:$0xf]
  %v33 = vld [vmem:[%s0 + $0x48] sm:$0xf]
  %v34 = vld [vmem:[%s0 + $0x4c] sm:$0xf]
  %v35 = vld [vmem:[%s0 + $0x50] sm:$0xf]
  %v36 = vld [vmem:[%s0 + $0x54] sm:$0xf]
  %v37 = vld [vmem:[%s0 + $0x58] sm:$0xf]
  %v38 = vld [vmem:[%s0 + $0x5c] sm:$0xf]
  %v39 = vld [vmem:[%s0 + $0x60] sm:$0xf]
  %v40 = vld [vmem:[%s0 + $0x64] sm:$0xf]
  %v41 = vld [vmem:[%s0 + $0x68] sm:$0xf]
  %v42 = vld [vmem:[%s0 + $0x6c] sm:$0xf]
  %v43 = vld [vmem:[%s0 + $0x70] sm:$0xf]
  %v44 = vld [vmem:[%s0 + $0x74] sm:$0xf]
  %v45 = vld [vmem:[%s0 + $0x78] sm:$0xf]
  %v46 = vld [vmem:[%s0 + $0x7c] sm:$0xf]
  %v47 = vld [vmem:[%s0 + $0x80] sm:$0xf]
  %v48 = vld [vmem:[%s0 + $0x84] sm:$0xf]
  %v49 = vld [vmem:[%s0 + $0x88] sm:$0xf]
  %v50 = vld [vmem:[%s0 + $0x8c] sm:$0xf]
  %v51 = vld [vmem:[%s0 + $0x90] sm:$0xf]
  %v52 = vld [vmem:[%s0 + $0x94] sm:$0xf]
  %v53 = vld [vmem:[%s0 + $0x98] sm:$0xf]
  %v54 = vld [vmem:[%s0 + $0x9c] sm:$0xf]
  %v55 = vld [vmem:[%s0 + $0xa0] sm:$0xf]
  %v56 = vld [vmem:[%s0 + $0xa4] sm:$0xf]
  %v57 = vld [vmem:[%s0 + $0xa8] sm:$0xf]
  %v58 = vld [vmem:[%s0 + $0xac] sm:$0xf]
  %v59 = vld [vmem:[%s0 + $0xb0] sm:$0xf]
  %v60 = vld [vmem:[%s0 + $0xb4] sm:$0xf]
  %v61 = vld [vmem:[%s0 + $0xb8] sm:$0xf]
  %v62 = vld [vmem:[%s0 + $0xbc] sm:$0xf]
  %v63 = vld [vmem:[%s0 + $0xc0] sm:$0xf]
  %v64 = vld [vmem:[%s0 + $0xc4] sm:$0xf]
  %v65 = vld [vmem:[%s0 + $0xc8] sm:$0xf]
  %v66 = vld [vmem:[%s0 + $0xcc] sm:$0xf]
  %v67 = vld [vmem:[%s0 + $0xd0] sm:$0xf]
  %v68 = vld [vmem:[%s0 + $0xd4] sm:$0xf]
  %v69 = vld [vmem:[%s0 + $0xd8] sm:$0xf]
  %v70 = vld [vmem:[%s0 + $0xdc] sm:$0xf]
  %v71 = vld [vmem:[%s0 + $0xe0] sm:$0xf]
  %v72 = vld [vmem:[%s0 + $0xe4] sm:$0xf]
  %v73 = vld [vmem:[%s0 + $0xe8] sm:$0xf]
  %v74 = vld [vmem:[%s0 + $0xec] sm:$0xf]
  %v75 = vld [vmem:[%s0 + $0xf0] sm:$0xf]
  %v76 = vld [vmem:[%s0 + $0xf4] sm:$0xf]
  %v77 = vld [vmem:[%s0 + $0xf8] sm:$0xf]
  %v78 = vld [vmem:[%s0 + $0xfc] sm:$0xf]
  %v79 = vld [vmem:[%s1] sm:$0xf]
  %v80 = vld [vmem:[%s1 + $0x4] sm:$0xf]
  %v81 = vld [vmem:[%s1 + $0x8] sm:$0xf]
  %v82 = vld [vmem:[%s1 + $0xc] sm:$0xf]
  %v83 = vld [vmem:[%s1 + $0x10] sm:$0x3]
  %v148 = vunpack.c.l.b16 %v15
  %v149 = vunpack.c.l.b16 %v16
  %v150 = vunpack.c.l.b16 %v17
  %v151 = vunpack.c.l.b16 %v18
  %v152 = vunpack.c.l.b16 %v19
  %v153 = vunpack.c.l.b16 %v20
  %v154 = vunpack.c.l.b16 %v21
  %v155 = vunpack.c.l.b16 %v22
  %v156 = vunpack.c.l.b16 %v23
  %v157 = vunpack.c.l.b16 %v24
  %v158 = vunpack.c.l.b16 %v25
  %v159 = vunpack.c.l.b16 %v26
  %v160 = vunpack.c.l.b16 %v27
  %v161 = vunpack.c.l.b16 %v28
  %v162 = vunpack.c.l.b16 %v29
  %v163 = vunpack.c.l.b16 %v30
  %v164 = vunpack.c.l.b16 %v31
  %v165 = vunpack.c.l.b16 %v32
  %v166 = vunpack.c.l.b16 %v33
  %v167 = vunpack.c.l.b16 %v34
  %v168 = vunpack.c.l.b16 %v35
  %v169 = vunpack.c.l.b16 %v36
  %v170 = vunpack.c.l.b16 %v37
  %v171 = vunpack.c.l.b16 %v38
  %v172 = vunpack.c.l.b16 %v39
  %v173 = vunpack.c.l.b16 %v40
  %v174 = vunpack.c.l.b16 %v41
  %v175 = vunpack.c.l.b16 %v42
  %v176 = vunpack.c.l.b16 %v43
  %v177 = vunpack.c.l.b16 %v44
  %v178 = vunpack.c.l.b16 %v45
  %v179 = vunpack.c.l.b16 %v46
  %v180 = vunpack.c.l.b16 %v47
  %v181 = vunpack.c.l.b16 %v48
  %v182 = vunpack.c.l.b16 %v49
  %v183 = vunpack.c.l.b16 %v50
  %v184 = vunpack.c.l.b16 %v51
  %v185 = vunpack.c.l.b16 %v52
  %v186 = vunpack.c.l.b16 %v53
  %v187 = vunpack.c.l.b16 %v54
  %v188 = vunpack.c.l.b16 %v55
  %v189 = vunpack.c.l.b16 %v56
  %v190 = vunpack.c.l.b16 %v57
  %v191 = vunpack.c.l.b16 %v58
  %v192 = vunpack.c.l.b16 %v59
  %v193 = vunpack.c.l.b16 %v60
  %v194 = vunpack.c.l.b16 %v61
  %v195 = vunpack.c.l.b16 %v62
  %v196 = vunpack.c.l.b16 %v63
  %v197 = vunpack.c.l.b16 %v64
  %v198 = vunpack.c.l.b16 %v65
  %v199 = vunpack.c.l.b16 %v66
  %v200 = vunpack.c.l.b16 %v67
  %v201 = vunpack.c.l.b16 %v68
  %v202 = vunpack.c.l.b16 %v69
  %v203 = vunpack.c.l.b16 %v70
  %v204 = vunpack.c.l.b16 %v71
  %v205 = vunpack.c.l.b16 %v72
  %v206 = vunpack.c.l.b16 %v73
  %v207 = vunpack.c.l.b16 %v74
  %v208 = vunpack.c.l.b16 %v75
  %v209 = vunpack.c.l.b16 %v76
  %v210 = vunpack.c.l.b16 %v77
  %v211 = vunpack.c.l.b16 %v78
  %v212 = vpack.c.b16 %v149, %v148
  %v213 = vpack.c.b16 %v151, %v150
  %v214 = vpack.c.b16 %v153, %v152
  %v215 = vpack.c.b16 %v155, %v154
  %v216 = vpack.c.b16 %v157, %v156
  %v217 = vpack.c.b16 %v159, %v158
  %v218 = vpack.c.b16 %v161, %v160
  %v219 = vpack.c.b16 %v163, %v162
  %v220 = vpack.c.b16 %v165, %v164
  %v221 = vpack.c.b16 %v167, %v166
  %v222 = vpack.c.b16 %v169, %v168
  %v223 = vpack.c.b16 %v171, %v170
  %v224 = vpack.c.b16 %v173, %v172
  %v225 = vpack.c.b16 %v175, %v174
  %v226 = vpack.c.b16 %v177, %v176
  %v227 = vpack.c.b16 %v179, %v178
  %v228 = vpack.c.b16 %v181, %v180
  %v229 = vpack.c.b16 %v183, %v182
  %v230 = vpack.c.b16 %v185, %v184
  %v231 = vpack.c.b16 %v187, %v186
  %v232 = vpack.c.b16 %v189, %v188
  %v233 = vpack.c.b16 %v191, %v190
  %v234 = vpack.c.b16 %v193, %v192
  %v235 = vpack.c.b16 %v195, %v194
  %v236 = vpack.c.b16 %v197, %v196
  %v237 = vpack.c.b16 %v199, %v198
  %v238 = vpack.c.b16 %v201, %v200
  %v239 = vpack.c.b16 %v203, %v202
  %v240 = vpack.c.b16 %v205, %v204
  %v241 = vpack.c.b16 %v207, %v206
  %v242 = vpack.c.b16 %v209, %v208
  %v243 = vpack.c.b16 %v211, %v210
  %v249 = vunpack.c.l.b16 %v79
  %v250 = vunpack.c.l.b16 %v80
  %v251 = vunpack.c.l.b16 %v81
  %v252 = vunpack.c.l.b16 %v82
  %v253 = vunpack.c.l.b16 %v83
  %v254 = vpack.c.b16 %v250, %v249
  %v255 = vpack.c.b16 %v252, %v251
  %v256 = vpack.c.b16 %v253, %v253
  %vm259 = vcmask 293888
  %v261 = vsel %vm259, %v212, 0
  %v264 = vsel %vm259, %v213, 0
  %v267 = vsel %vm259, %v214, 0
  %v270 = vsel %vm259, %v215, 0
  %v273 = vsel %vm259, %v216, 0
  %v276 = vsel %vm259, %v217, 0
  %v279 = vsel %vm259, %v218, 0
  %v282 = vsel %vm259, %v219, 0
  %v285 = vsel %vm259, %v220, 0
  %v288 = vsel %vm259, %v221, 0
  %v291 = vsel %vm259, %v222, 0
  %v294 = vsel %vm259, %v223, 0
  %v297 = vsel %vm259, %v224, 0
  %v300 = vsel %vm259, %v225, 0
  %v303 = vsel %vm259, %v226, 0
  %v306 = vsel %vm259, %v227, 0
  %v309 = vsel %vm259, %v228, 0
  %v312 = vsel %vm259, %v229, 0
  %v315 = vsel %vm259, %v230, 0
  %v318 = vsel %vm259, %v231, 0
  %v321 = vsel %vm259, %v232, 0
  %v324 = vsel %vm259, %v233, 0
  %v327 = vsel %vm259, %v234, 0
  %v330 = vsel %vm259, %v235, 0
  %v333 = vsel %vm259, %v236, 0
  %v336 = vsel %vm259, %v237, 0
  %v339 = vsel %vm259, %v238, 0
  %v342 = vsel %vm259, %v239, 0
  %v345 = vsel %vm259, %v240, 0
  %v348 = vsel %vm259, %v241, 0
  %v351 = vsel %vm259, %v242, 0
  %v354 = vsel %vm259, %v243, 0
  %vm356 = vcmask 1041408
  %v358 = vsel %vm356, %v256, 0
  %360 = vmatprep.subr.bf16.mxu0 0
  %361 = vmatpush1.bf16.msra.mxu0 0
  %362 = vmatprep.subr.bf16.mxu0 0
  %363 = vmatpush1.bf16.msra.mxu0 0
  %364 = vmatprep.subr.bf16.mxu0 0
  %365 = vmatpush1.bf16.msra.mxu0 0
  %366 = vmatprep.subr.bf16.mxu0 0
  %367 = vmatpush1.bf16.msra.mxu0 0
  %368 = vmatprep.subr.bf16.mxu0 0
  %369 = vmatpush1.bf16.msra.mxu0 0
  %370 = vmatprep.subr.bf16.mxu0 0
  %371 = vmatpush1.bf16.msra.mxu0 %v358
  %372 = vmatprep.subr.bf16.mxu0 0
  %373 = vmatpush1.bf16.msra.mxu0 %v255
  %374 = vmatprep.subr.bf16.mxu0 0
  %375 = vmatpush1.bf16.msra.mxu0 %v254
  %376 = vmatprep.subr.bf16.mxu0 0
  %377 = vmatpush2.bf16.msra.mxu0 0
  %378 = vmatprep.subr.bf16.mxu0 0
  %379 = vmatpush2.bf16.msra.mxu0 0
  %380 = vmatprep.subr.bf16.mxu0 0
  %381 = vmatpush2.bf16.msra.mxu0 0
  %382 = vmatprep.subr.bf16.mxu0 0
  %383 = vmatpush2.bf16.msra.mxu0 0
  %384 = vmatprep.subr.bf16.mxu0 0
  %385 = vmatpush2.bf16.msra.mxu0 0
  %386 = vmatprep.subr.bf16.mxu0 0
  %387 = vmatpush2.bf16.msra.mxu0 0
  %388 = vmatprep.subr.bf16.mxu0 0
  %389 = vmatpush2.bf16.msra.mxu0 0
  %390 = vmatprep.subr.bf16.mxu0 0
  %391 = vmatpush2.bf16.msra.mxu0 0
  %392 = vmatprep.mubr.bf16.mxu0 0
  %393 = vmatmul.mubr.bf16.gmra.mxu0 %v261
  %v394 = vpop.f32.mrf.mxu0
  %v395 = vadd.f32 0.0, %v394
  %v396 = vpop.f32.mrf.mxu0
  %v397 = vpop.f32.mrf.mxu0
  %v398 = vadd.f32 0.0, %v397
  %v399 = vpop.f32.mrf.mxu0
  %400 = vmatprep.mubr.bf16.mxu0 0
  %401 = vmatmul.mubr.bf16.gmra.mxu0 %v264
  %v402 = vpop.f32.mrf.mxu0
  %v403 = vadd.f32 0.0, %v402
  %v404 = vpop.f32.mrf.mxu0
  %v405 = vpop.f32.mrf.mxu0
  %v406 = vadd.f32 0.0, %v405
  %v407 = vpop.f32.mrf.mxu0
  %408 = vmatprep.mubr.bf16.mxu0 0
  %409 = vmatmul.mubr.bf16.gmra.mxu0 %v267
  %v410 = vpop.f32.mrf.mxu0
  %v411 = vadd.f32 0.0, %v410
  %v412 = vpop.f32.mrf.mxu0
  %v413 = vpop.f32.mrf.mxu0
  %v414 = vadd.f32 0.0, %v413
  %v415 = vpop.f32.mrf.mxu0
  %416 = vmatprep.mubr.bf16.mxu0 0
  %417 = vmatmul.mubr.bf16.gmra.mxu0 %v270
  %v418 = vpop.f32.mrf.mxu0
  %v419 = vadd.f32 0.0, %v418
  %v420 = vpop.f32.mrf.mxu0
  %v421 = vpop.f32.mrf.mxu0
  %v422 = vadd.f32 0.0, %v421
  %v423 = vpop.f32.mrf.mxu0
  %424 = vmatprep.mubr.bf16.mxu0 0
  %425 = vmatmul.mubr.bf16.gmra.mxu0 %v273
  %v426 = vpop.f32.mrf.mxu0
  %v427 = vadd.f32 0.0, %v426
  %v428 = vpop.f32.mrf.mxu0
  %v429 = vpop.f32.mrf.mxu0
  %v430 = vadd.f32 0.0, %v429
  %v431 = vpop.f32.mrf.mxu0
  %432 = vmatprep.mubr.bf16.mxu0 0
  %433 = vmatmul.mubr.bf16.gmra.mxu0 %v276
  %v434 = vpop.f32.mrf.mxu0
  %v435 = vadd.f32 0.0, %v434
  %v436 = vpop.f32.mrf.mxu0
  %v437 = vpop.f32.mrf.mxu0
  %v438 = vadd.f32 0.0, %v437
  %v439 = vpop.f32.mrf.mxu0
  %440 = vmatprep.mubr.bf16.mxu0 0
  %441 = vmatmul.mubr.bf16.gmra.mxu0 %v279
  %v442 = vpop.f32.mrf.mxu0
  %v443 = vadd.f32 0.0, %v442
  %v444 = vpop.f32.mrf.mxu0
  %v445 = vpop.f32.mrf.mxu0
  %v446 = vadd.f32 0.0, %v445
  %v447 = vpop.f32.mrf.mxu0
  %448 = vmatprep.mubr.bf16.mxu0 0
  %449 = vmatmul.mubr.bf16.gmra.mxu0 %v282
  %v450 = vpop.f32.mrf.mxu0
  %v451 = vadd.f32 0.0, %v450
  %v452 = vpop.f32.mrf.mxu0
  %v453 = vpop.f32.mrf.mxu0
  %v454 = vadd.f32 0.0, %v453
  %v455 = vpop.f32.mrf.mxu0
  %456 = vmatprep.mubr.bf16.mxu0 0
  %457 = vmatmul.mubr.bf16.gmra.mxu0 %v285
  %v458 = vpop.f32.mrf.mxu0
  %v459 = vadd.f32 0.0, %v458
  %v460 = vpop.f32.mrf.mxu0
  %v461 = vpop.f32.mrf.mxu0
  %v462 = vadd.f32 0.0, %v461
  %v463 = vpop.f32.mrf.mxu0
  %464 = vmatprep.mubr.bf16.mxu0 0
  %465 = vmatmul.mubr.bf16.gmra.mxu0 %v288
  %v466 = vpop.f32.mrf.mxu0
  %v467 = vadd.f32 0.0, %v466
  %v468 = vpop.f32.mrf.mxu0
  %v469 = vpop.f32.mrf.mxu0
  %v470 = vadd.f32 0.0, %v469
  %v471 = vpop.f32.mrf.mxu0
  %472 = vmatprep.mubr.bf16.mxu0 0
  %473 = vmatmul.mubr.bf16.gmra.mxu0 %v291
  %v474 = vpop.f32.mrf.mxu0
  %v475 = vadd.f32 0.0, %v474
  %v476 = vpop.f32.mrf.mxu0
  %v477 = vpop.f32.mrf.mxu0
  %v478 = vadd.f32 0.0, %v477
  %v479 = vpop.f32.mrf.mxu0
  %480 = vmatprep.mubr.bf16.mxu0 0
  %481 = vmatmul.mubr.bf16.gmra.mxu0 %v294
  %v482 = vpop.f32.mrf.mxu0
  %v483 = vadd.f32 0.0, %v482
  %v484 = vpop.f32.mrf.mxu0
  %v485 = vpop.f32.mrf.mxu0
  %v486 = vadd.f32 0.0, %v485
  %v487 = vpop.f32.mrf.mxu0
  %488 = vmatprep.mubr.bf16.mxu0 0
  %489 = vmatmul.mubr.bf16.gmra.mxu0 %v297
  %v490 = vpop.f32.mrf.mxu0
  %v491 = vadd.f32 0.0, %v490
  %v492 = vpop.f32.mrf.mxu0
  %v493 = vpop.f32.mrf.mxu0
  %v494 = vadd.f32 0.0, %v493
  %v495 = vpop.f32.mrf.mxu0
  %496 = vmatprep.mubr.bf16.mxu0 0
  %497 = vmatmul.mubr.bf16.gmra.mxu0 %v300
  %v498 = vpop.f32.mrf.mxu0
  %v499 = vadd.f32 0.0, %v498
  %v500 = vpop.f32.mrf.mxu0
  %v501 = vpop.f32.mrf.mxu0
  %v502 = vadd.f32 0.0, %v501
  %v503 = vpop.f32.mrf.mxu0
  %504 = vmatprep.mubr.bf16.mxu0 0
  %505 = vmatmul.mubr.bf16.gmra.mxu0 %v303
  %v506 = vpop.f32.mrf.mxu0
  %v507 = vadd.f32 0.0, %v506
  %v508 = vpop.f32.mrf.mxu0
  %v509 = vpop.f32.mrf.mxu0
  %v510 = vadd.f32 0.0, %v509
  %v511 = vpop.f32.mrf.mxu0
  %512 = vmatprep.mubr.bf16.mxu0 0
  %513 = vmatmul.mubr.bf16.gmra.mxu0 %v306
  %v514 = vpop.f32.mrf.mxu0
  %v515 = vadd.f32 0.0, %v514
  %v516 = vpop.f32.mrf.mxu0
  %v517 = vpop.f32.mrf.mxu0
  %v518 = vadd.f32 0.0, %v517
  %v519 = vpop.f32.mrf.mxu0
  %520 = vmatprep.mubr.bf16.mxu0 0
  %521 = vmatmul.mubr.bf16.gmra.mxu0 %v309
  %v522 = vpop.f32.mrf.mxu0
  %v523 = vadd.f32 0.0, %v522
  %v524 = vpop.f32.mrf.mxu0
  %v525 = vpop.f32.mrf.mxu0
  %v526 = vadd.f32 0.0, %v525
  %v527 = vpop.f32.mrf.mxu0
  %528 = vmatprep.mubr.bf16.mxu0 0
  %529 = vmatmul.mubr.bf16.gmra.mxu0 %v312
  %v530 = vpop.f32.mrf.mxu0
  %v531 = vadd.f32 0.0, %v530
  %v532 = vpop.f32.mrf.mxu0
  %v533 = vpop.f32.mrf.mxu0
  %v534 = vadd.f32 0.0, %v533
  %v535 = vpop.f32.mrf.mxu0
  %536 = vmatprep.mubr.bf16.mxu0 0
  %537 = vmatmul.mubr.bf16.gmra.mxu0 %v315
  %v538 = vpop.f32.mrf.mxu0
  %v539 = vadd.f32 0.0, %v538
  %v540 = vpop.f32.mrf.mxu0
  %v541 = vpop.f32.mrf.mxu0
  %v542 = vadd.f32 0.0, %v541
  %v543 = vpop.f32.mrf.mxu0
  %544 = vmatprep.mubr.bf16.mxu0 0
  %545 = vmatmul.mubr.bf16.gmra.mxu0 %v318
  %v546 = vpop.f32.mrf.mxu0
  %v547 = vadd.f32 0.0, %v546
  %v548 = vpop.f32.mrf.mxu0
  %v549 = vpop.f32.mrf.mxu0
  %v550 = vadd.f32 0.0, %v549
  %v551 = vpop.f32.mrf.mxu0
  %552 = vmatprep.mubr.bf16.mxu0 0
  %553 = vmatmul.mubr.bf16.gmra.mxu0 %v321
  %v554 = vpop.f32.mrf.mxu0
  %v555 = vadd.f32 0.0, %v554
  %v556 = vpop.f32.mrf.mxu0
  %v557 = vpop.f32.mrf.mxu0
  %v558 = vadd.f32 0.0, %v557
  %v559 = vpop.f32.mrf.mxu0
  %560 = vmatprep.mubr.bf16.mxu0 0
  %561 = vmatmul.mubr.bf16.gmra.mxu0 %v324
  %v562 = vpop.f32.mrf.mxu0
  %v563 = vadd.f32 0.0, %v562
  %v564 = vpop.f32.mrf.mxu0
  %v565 = vpop.f32.mrf.mxu0
  %v566 = vadd.f32 0.0, %v565
  %v567 = vpop.f32.mrf.mxu0
  %568 = vmatprep.mubr.bf16.mxu0 0
  %569 = vmatmul.mubr.bf16.gmra.mxu0 %v327
  %v570 = vpop.f32.mrf.mxu0
  %v571 = vadd.f32 0.0, %v570
  %v572 = vpop.f32.mrf.mxu0
  %v573 = vpop.f32.mrf.mxu0
  %v574 = vadd.f32 0.0, %v573
  %v575 = vpop.f32.mrf.mxu0
  %576 = vmatprep.mubr.bf16.mxu0 0
  %577 = vmatmul.mubr.bf16.gmra.mxu0 %v330
  %v578 = vpop.f32.mrf.mxu0
  %v579 = vadd.f32 0.0, %v578
  %v580 = vpop.f32.mrf.mxu0
  %v581 = vpop.f32.mrf.mxu0
  %v582 = vadd.f32 0.0, %v581
  %v583 = vpop.f32.mrf.mxu0
  %584 = vmatprep.mubr.bf16.mxu0 0
  %585 = vmatmul.mubr.bf16.gmra.mxu0 %v333
  %v586 = vpop.f32.mrf.mxu0
  %v587 = vadd.f32 0.0, %v586
  %v588 = vpop.f32.mrf.mxu0
  %v589 = vpop.f32.mrf.mxu0
  %v590 = vadd.f32 0.0, %v589
  %v591 = vpop.f32.mrf.mxu0
  %592 = vmatprep.mubr.bf16.mxu0 0
  %593 = vmatmul.mubr.bf16.gmra.mxu0 %v336
  %v594 = vpop.f32.mrf.mxu0
  %v595 = vadd.f32 0.0, %v594
  %v596 = vpop.f32.mrf.mxu0
  %v597 = vpop.f32.mrf.mxu0
  %v598 = vadd.f32 0.0, %v597
  %v599 = vpop.f32.mrf.mxu0
  %600 = vmatprep.mubr.bf16.mxu0 0
  %601 = vmatmul.mubr.bf16.gmra.mxu0 %v339
  %v602 = vpop.f32.mrf.mxu0
  %v603 = vadd.f32 0.0, %v602
  %v604 = vpop.f32.mrf.mxu0
  %v605 = vpop.f32.mrf.mxu0
  %v606 = vadd.f32 0.0, %v605
  %v607 = vpop.f32.mrf.mxu0
  %608 = vmatprep.mubr.bf16.mxu0 0
  %609 = vmatmul.mubr.bf16.gmra.mxu0 %v342
  %v610 = vpop.f32.mrf.mxu0
  %v611 = vadd.f32 0.0, %v610
  %v612 = vpop.f32.mrf.mxu0
  %v613 = vpop.f32.mrf.mxu0
  %v614 = vadd.f32 0.0, %v613
  %v615 = vpop.f32.mrf.mxu0
  %616 = vmatprep.mubr.bf16.mxu0 0
  %617 = vmatmul.mubr.bf16.gmra.mxu0 %v345
  %v618 = vpop.f32.mrf.mxu0
  %v619 = vadd.f32 0.0, %v618
  %v620 = vpop.f32.mrf.mxu0
  %v621 = vpop.f32.mrf.mxu0
  %v622 = vadd.f32 0.0, %v621
  %v623 = vpop.f32.mrf.mxu0
  %624 = vmatprep.mubr.bf16.mxu0 0
  %625 = vmatmul.mubr.bf16.gmra.mxu0 %v348
  %v626 = vpop.f32.mrf.mxu0
  %v627 = vadd.f32 0.0, %v626
  %v628 = vpop.f32.mrf.mxu0
  %v629 = vpop.f32.mrf.mxu0
  %v630 = vadd.f32 0.0, %v629
  %v631 = vpop.f32.mrf.mxu0
  %632 = vmatprep.mubr.bf16.mxu0 0
  %633 = vmatmul.mubr.bf16.gmra.mxu0 %v351
  %v634 = vpop.f32.mrf.mxu0
  %v635 = vadd.f32 0.0, %v634
  %v636 = vpop.f32.mrf.mxu0
  %v637 = vpop.f32.mrf.mxu0
  %v638 = vadd.f32 0.0, %v637
  %v639 = vpop.f32.mrf.mxu0
  %640 = vmatprep.mubr.bf16.mxu0 0
  %641 = vmatmul.mubr.bf16.gmra.mxu0 %v354
  %v642 = vpop.f32.mrf.mxu0
  %v643 = vadd.f32 0.0, %v642
  %v644 = vpop.f32.mrf.mxu0
  %v645 = vpop.f32.mrf.mxu0
  %v646 = vadd.f32 0.0, %v645
  %v647 = vpop.f32.mrf.mxu0
  %648 = vdwg.mxu0
  %v649 = vpack.c.bf16 %v398, %v395
  %v650 = vpack.c.bf16 %v406, %v403
  %v651 = vpack.c.bf16 %v414, %v411
  %v652 = vpack.c.bf16 %v422, %v419
  %v653 = vpack.c.bf16 %v430, %v427
  %v654 = vpack.c.bf16 %v438, %v435
  %v655 = vpack.c.bf16 %v446, %v443
  %v656 = vpack.c.bf16 %v454, %v451
  %v657 = vpack.c.bf16 %v462, %v459
  %v658 = vpack.c.bf16 %v470, %v467
  %v659 = vpack.c.bf16 %v478, %v475
  %v660 = vpack.c.bf16 %v486, %v483
  %v661 = vpack.c.bf16 %v494, %v491
  %v662 = vpack.c.bf16 %v502, %v499
  %v663 = vpack.c.bf16 %v510, %v507
  %v664 = vpack.c.bf16 %v518, %v515
  %v665 = vpack.c.bf16 %v526, %v523
  %v666 = vpack.c.bf16 %v534, %v531
  %v667 = vpack.c.bf16 %v542, %v539
  %v668 = vpack.c.bf16 %v550, %v547
  %v669 = vpack.c.bf16 %v558, %v555
  %v670 = vpack.c.bf16 %v566, %v563
  %v671 = vpack.c.bf16 %v574, %v571
  %v672 = vpack.c.bf16 %v582, %v579
  %v673 = vpack.c.bf16 %v590, %v587
  %v674 = vpack.c.bf16 %v598, %v595
  %v675 = vpack.c.bf16 %v606, %v603
  %v676 = vpack.c.bf16 %v614, %v611
  %v677 = vpack.c.bf16 %v622, %v619
  %v678 = vpack.c.bf16 %v630, %v627
  %v679 = vpack.c.bf16 %v638, %v635
  %v680 = vpack.c.bf16 %v646, %v643
  %v713 = vunpack.c.l.b16 %v649
  %v714 = vunpack.c.h.b16 %v649
  %v715 = vunpack.c.l.b16 %v650
  %v716 = vunpack.c.h.b16 %v650
  %v717 = vunpack.c.l.b16 %v651
  %v718 = vunpack.c.h.b16 %v651
  %v719 = vunpack.c.l.b16 %v652
  %v720 = vunpack.c.h.b16 %v652
  %v721 = vunpack.c.l.b16 %v653
  %v722 = vunpack.c.h.b16 %v653
  %v723 = vunpack.c.l.b16 %v654
  %v724 = vunpack.c.h.b16 %v654
  %v725 = vunpack.c.l.b16 %v655
  %v726 = vunpack.c.h.b16 %v655
  %v727 = vunpack.c.l.b16 %v656
  %v728 = vunpack.c.h.b16 %v656
  %v729 = vunpack.c.l.b16 %v657
  %v730 = vunpack.c.h.b16 %v657
  %v731 = vunpack.c.l.b16 %v658
  %v732 = vunpack.c.h.b16 %v658
  %v733 = vunpack.c.l.b16 %v659
  %v734 = vunpack.c.h.b16 %v659
  %v735 = vunpack.c.l.b16 %v660
  %v736 = vunpack.c.h.b16 %v660
  %v737 = vunpack.c.l.b16 %v661
  %v738 = vunpack.c.h.b16 %v661
  %v739 = vunpack.c.l.b16 %v662
  %v740 = vunpack.c.h.b16 %v662
  %v741 = vunpack.c.l.b16 %v663
  %v742 = vunpack.c.h.b16 %v663
  %v743 = vunpack.c.l.b16 %v664
  %v744 = vunpack.c.h.b16 %v664
  %v745 = vunpack.c.l.b16 %v665
  %v746 = vunpack.c.h.b16 %v665
  %v747 = vunpack.c.l.b16 %v666
  %v748 = vunpack.c.h.b16 %v666
  %v749 = vunpack.c.l.b16 %v667
  %v750 = vunpack.c.h.b16 %v667
  %v751 = vunpack.c.l.b16 %v668
  %v752 = vunpack.c.h.b16 %v668
  %v753 = vunpack.c.l.b16 %v669
  %v754 = vunpack.c.h.b16 %v669
  %v755 = vunpack.c.l.b16 %v670
  %v756 = vunpack.c.h.b16 %v670
  %v757 = vunpack.c.l.b16 %v671
  %v758 = vunpack.c.h.b16 %v671
  %v759 = vunpack.c.l.b16 %v672
  %v760 = vunpack.c.h.b16 %v672
  %v761 = vunpack.c.l.b16 %v673
  %v762 = vunpack.c.h.b16 %v673
  %v763 = vunpack.c.l.b16 %v674
  %v764 = vunpack.c.h.b16 %v674
  %v765 = vunpack.c.l.b16 %v675
  %v766 = vunpack.c.h.b16 %v675
  %v767 = vunpack.c.l.b16 %v676
  %v768 = vunpack.c.h.b16 %v676
  %v769 = vunpack.c.l.b16 %v677
  %v770 = vunpack.c.h.b16 %v677
  %v771 = vunpack.c.l.b16 %v678
  %v772 = vunpack.c.h.b16 %v678
  %v773 = vunpack.c.l.b16 %v679
  %v774 = vunpack.c.h.b16 %v679
  %v775 = vunpack.c.l.b16 %v680
  %v776 = vunpack.c.h.b16 %v680
  %v777 = vpack.c.b16 %v713, %v713
  %v778 = vpack.c.b16 %v714, %v714
  %v779 = vpack.c.b16 %v715, %v715
  %v780 = vpack.c.b16 %v716, %v716
  %v781 = vpack.c.b16 %v717, %v717
  %v782 = vpack.c.b16 %v718, %v718
  %v783 = vpack.c.b16 %v719, %v719
  %v784 = vpack.c.b16 %v720, %v720
  %v785 = vpack.c.b16 %v721, %v721
  %v786 = vpack.c.b16 %v722, %v722
  %v787 = vpack.c.b16 %v723, %v723
  %v788 = vpack.c.b16 %v724, %v724
  %v789 = vpack.c.b16 %v725, %v725
  %v790 = vpack.c.b16 %v726, %v726
  %v791 = vpack.c.b16 %v727, %v727
  %v792 = vpack.c.b16 %v728, %v728
  %v793 = vpack.c.b16 %v729, %v729
  %v794 = vpack.c.b16 %v730, %v730
  %v795 = vpack.c.b16 %v731, %v731
  %v796 = vpack.c.b16 %v732, %v732
  %v797 = vpack.c.b16 %v733, %v733
  %v798 = vpack.c.b16 %v734, %v734
  %v799 = vpack.c.b16 %v735, %v735
  %v800 = vpack.c.b16 %v736, %v736
  %v801 = vpack.c.b16 %v737, %v737
  %v802 = vpack.c.b16 %v738, %v738
  %v803 = vpack.c.b16 %v739, %v739
  %v804 = vpack.c.b16 %v740, %v740
  %v805 = vpack.c.b16 %v741, %v741
  %v806 = vpack.c.b16 %v742, %v742
  %v807 = vpack.c.b16 %v743, %v743
  %v808 = vpack.c.b16 %v744, %v744
  %v809 = vpack.c.b16 %v745, %v745
  %v810 = vpack.c.b16 %v746, %v746
  %v811 = vpack.c.b16 %v747, %v747
  %v812 = vpack.c.b16 %v748, %v748
  %v813 = vpack.c.b16 %v749, %v749
  %v814 = vpack.c.b16 %v750, %v750
  %v815 = vpack.c.b16 %v751, %v751
  %v816 = vpack.c.b16 %v752, %v752
  %v817 = vpack.c.b16 %v753, %v753
  %v818 = vpack.c.b16 %v754, %v754
  %v819 = vpack.c.b16 %v755, %v755
  %v820 = vpack.c.b16 %v756, %v756
  %v821 = vpack.c.b16 %v757, %v757
  %v822 = vpack.c.b16 %v758, %v758
  %v823 = vpack.c.b16 %v759, %v759
  %v824 = vpack.c.b16 %v760, %v760
  %v825 = vpack.c.b16 %v761, %v761
  %v826 = vpack.c.b16 %v762, %v762
  %v827 = vpack.c.b16 %v763, %v763
  %v828 = vpack.c.b16 %v764, %v764
  %v829 = vpack.c.b16 %v765, %v765
  %v830 = vpack.c.b16 %v766, %v766
  %v831 = vpack.c.b16 %v767, %v767
  %v832 = vpack.c.b16 %v768, %v768
  %v833 = vpack.c.b16 %v769, %v769
  %v834 = vpack.c.b16 %v770, %v770
  %v835 = vpack.c.b16 %v771, %v771
  %v836 = vpack.c.b16 %v772, %v772
  %v837 = vpack.c.b16 %v773, %v773
  %v838 = vpack.c.b16 %v774, %v774
  %v839 = vpack.c.b16 %v775, %v775
  %v840 = vpack.c.b16 %v776, %v776
  %vm905 = vcmask 257024
  %906 = vst.msk [vmem:[%s2] sm:$0xf] %vm905, %v777
  %907 = vst.msk [vmem:[%s2 + $0x4] sm:$0xf] %vm905, %v778
  %908 = vst.msk [vmem:[%s2 + $0x8] sm:$0xf] %vm905, %v779
  %909 = vst.msk [vmem:[%s2 + $0xc] sm:$0xf] %vm905, %v780
  %910 = vst.msk [vmem:[%s2 + $0x10] sm:$0xf] %vm905, %v781
  %911 = vst.msk [vmem:[%s2 + $0x14] sm:$0xf] %vm905, %v782
  %912 = vst.msk [vmem:[%s2 + $0x18] sm:$0xf] %vm905, %v783
  %913 = vst.msk [vmem:[%s2 + $0x1c] sm:$0xf] %vm905, %v784
  %914 = vst.msk [vmem:[%s2 + $0x20] sm:$0xf] %vm905, %v785
  %915 = vst.msk [vmem:[%s2 + $0x24] sm:$0xf] %vm905, %v786
  %916 = vst.msk [vmem:[%s2 + $0x28] sm:$0xf] %vm905, %v787
  %917 = vst.msk [vmem:[%s2 + $0x2c] sm:$0xf] %vm905, %v788
  %918 = vst.msk [vmem:[%s2 + $0x30] sm:$0xf] %vm905, %v789
  %919 = vst.msk [vmem:[%s2 + $0x34] sm:$0xf] %vm905, %v790
  %920 = vst.msk [vmem:[%s2 + $0x38] sm:$0xf] %vm905, %v791
  %921 = vst.msk [vmem:[%s2 + $0x3c] sm:$0xf] %vm905, %v792
  %922 = vst.msk [vmem:[%s2 + $0x40] sm:$0xf] %vm905, %v793
  %923 = vst.msk [vmem:[%s2 + $0x44] sm:$0xf] %vm905, %v794
  %924 = vst.msk [vmem:[%s2 + $0x48] sm:$0xf] %vm905, %v795
  %925 = vst.msk [vmem:[%s2 + $0x4c] sm:$0xf] %vm905, %v796
  %926 = vst.msk [vmem:[%s2 + $0x50] sm:$0xf] %vm905, %v797
  %927 = vst.msk [vmem:[%s2 + $0x54] sm:$0xf] %vm905, %v798
  %928 = vst.msk [vmem:[%s2 + $0x58] sm:$0xf] %vm905, %v799
  %929 = vst.msk [vmem:[%s2 + $0x5c] sm:$0xf] %vm905, %v800
  %930 = vst.msk [vmem:[%s2 + $0x60] sm:$0xf] %vm905, %v801
  %931 = vst.msk [vmem:[%s2 + $0x64] sm:$0xf] %vm905, %v802
  %932 = vst.msk [vmem:[%s2 + $0x68] sm:$0xf] %vm905, %v803
  %933 = vst.msk [vmem:[%s2 + $0x6c] sm:$0xf] %vm905, %v804
  %934 = vst.msk [vmem:[%s2 + $0x70] sm:$0xf] %vm905, %v805
  %935 = vst.msk [vmem:[%s2 + $0x74] sm:$0xf] %vm905, %v806
  %936 = vst.msk [vmem:[%s2 + $0x78] sm:$0xf] %vm905, %v807
  %937 = vst.msk [vmem:[%s2 + $0x7c] sm:$0xf] %vm905, %v808
  %938 = vst.msk [vmem:[%s2 + $0x80] sm:$0xf] %vm905, %v809
  %939 = vst.msk [vmem:[%s2 + $0x84] sm:$0xf] %vm905, %v810
  %940 = vst.msk [vmem:[%s2 + $0x88] sm:$0xf] %vm905, %v811
  %941 = vst.msk [vmem:[%s2 + $0x8c] sm:$0xf] %vm905, %v812
  %942 = vst.msk [vmem:[%s2 + $0x90] sm:$0xf] %vm905, %v813
  %943 = vst.msk [vmem:[%s2 + $0x94] sm:$0xf] %vm905, %v814
  %944 = vst.msk [vmem:[%s2 + $0x98] sm:$0xf] %vm905, %v815
  %945 = vst.msk [vmem:[%s2 + $0x9c] sm:$0xf] %vm905, %v816
  %946 = vst.msk [vmem:[%s2 + $0xa0] sm:$0xf] %vm905, %v817
  %947 = vst.msk [vmem:[%s2 + $0xa4] sm:$0xf] %vm905, %v818
  %948 = vst.msk [vmem:[%s2 + $0xa8] sm:$0xf] %vm905, %v819
  %949 = vst.msk [vmem:[%s2 + $0xac] sm:$0xf] %vm905, %v820
  %950 = vst.msk [vmem:[%s2 + $0xb0] sm:$0xf] %vm905, %v821
  %951 = vst.msk [vmem:[%s2 + $0xb4] sm:$0xf] %vm905, %v822
  %952 = vst.msk [vmem:[%s2 + $0xb8] sm:$0xf] %vm905, %v823
  %953 = vst.msk [vmem:[%s2 + $0xbc] sm:$0xf] %vm905, %v824
  %954 = vst.msk [vmem:[%s2 + $0xc0] sm:$0xf] %vm905, %v825
  %955 = vst.msk [vmem:[%s2 + $0xc4] sm:$0xf] %vm905, %v826
  %956 = vst.msk [vmem:[%s2 + $0xc8] sm:$0xf] %vm905, %v827
  %957 = vst.msk [vmem:[%s2 + $0xcc] sm:$0xf] %vm905, %v828
  %958 = vst.msk [vmem:[%s2 + $0xd0] sm:$0xf] %vm905, %v829
  %959 = vst.msk [vmem:[%s2 + $0xd4] sm:$0xf] %vm905, %v830
  %960 = vst.msk [vmem:[%s2 + $0xd8] sm:$0xf] %vm905, %v831
  %961 = vst.msk [vmem:[%s2 + $0xdc] sm:$0xf] %vm905, %v832
  %962 = vst.msk [vmem:[%s2 + $0xe0] sm:$0xf] %vm905, %v833
  %963 = vst.msk [vmem:[%s2 + $0xe4] sm:$0xf] %vm905, %v834
  %964 = vst.msk [vmem:[%s2 + $0xe8] sm:$0xf] %vm905, %v835
  %965 = vst.msk [vmem:[%s2 + $0xec] sm:$0xf] %vm905, %v836
  %966 = vst.msk [vmem:[%s2 + $0xf0] sm:$0xf] %vm905, %v837
  %967 = vst.msk [vmem:[%s2 + $0xf4] sm:$0xf] %vm905, %v838
  %968 = vst.msk [vmem:[%s2 + $0xf8] sm:$0xf] %vm905, %v839
  %969 = vst.msk [vmem:[%s2 + $0xfc] sm:$0xf] %vm905, %v840
  %vm970 = vcmask 261120
  %v971 = vsel %vm970, %v395, 0.0
  %v972 = vsel %vm970, %v398, 0.0
  %v973 = vadd.f32 %v971, %v972
  %v974 = vsel %vm970, %v403, 0.0
  %v975 = vadd.f32 %v973, %v974
  %v976 = vsel %vm970, %v406, 0.0
  %v977 = vadd.f32 %v975, %v976
  %v978 = vsel %vm970, %v411, 0.0
  %v979 = vadd.f32 %v977, %v978
  %v980 = vsel %vm970, %v414, 0.0
  %v981 = vadd.f32 %v979, %v980
  %v982 = vsel %vm970, %v419, 0.0
  %v983 = vadd.f32 %v981, %v982
  %v984 = vsel %vm970, %v422, 0.0
  %v985 = vadd.f32 %v983, %v984
  %v986 = vsel %vm970, %v427, 0.0
  %v987 = vadd.f32 %v985, %v986
  %v988 = vsel %vm970, %v430, 0.0
  %v989 = vadd.f32 %v987, %v988
  %v990 = vsel %vm970, %v435, 0.0
  %v991 = vadd.f32 %v989, %v990
  %v992 = vsel %vm970, %v438, 0.0
  %v993 = vadd.f32 %v991, %v992
  %v994 = vsel %vm970, %v443, 0.0
  %v995 = vadd.f32 %v993, %v994
  %v996 = vsel %vm970, %v446, 0.0
  %v997 = vadd.f32 %v995, %v996
  %v998 = vsel %vm970, %v451, 0.0
  %v999 = vadd.f32 %v997, %v998
  %v1000 = vsel %vm970, %v454, 0.0
  %v1001 = vadd.f32 %v999, %v1000
  %v1002 = vsel %vm970, %v459, 0.0
  %v1003 = vadd.f32 %v1001, %v1002
  %v1004 = vsel %vm970, %v462, 0.0
  %v1005 = vadd.f32 %v1003, %v1004
  %v1006 = vsel %vm970, %v467, 0.0
  %v1007 = vadd.f32 %v1005, %v1006
  %v1008 = vsel %vm970, %v470, 0.0
  %v1009 = vadd.f32 %v1007, %v1008
  %v1010 = vsel %vm970, %v475, 0.0
  %v1011 = vadd.f32 %v1009, %v1010
  %v1012 = vsel %vm970, %v478, 0.0
  %v1013 = vadd.f32 %v1011, %v1012
  %v1014 = vsel %vm970, %v483, 0.0
  %v1015 = vadd.f32 %v1013, %v1014
  %v1016 = vsel %vm970, %v486, 0.0
  %v1017 = vadd.f32 %v1015, %v1016
  %v1018 = vsel %vm970, %v491, 0.0
  %v1019 = vadd.f32 %v1017, %v1018
  %v1020 = vsel %vm970, %v494, 0.0
  %v1021 = vadd.f32 %v1019, %v1020
  %v1022 = vsel %vm970, %v499, 0.0
  %v1023 = vadd.f32 %v1021, %v1022
  %v1024 = vsel %vm970, %v502, 0.0
  %v1025 = vadd.f32 %v1023, %v1024
  %v1026 = vsel %vm970, %v507, 0.0
  %v1027 = vadd.f32 %v1025, %v1026
  %v1028 = vsel %vm970, %v510, 0.0
  %v1029 = vadd.f32 %v1027, %v1028
  %v1030 = vsel %vm970, %v515, 0.0
  %v1031 = vadd.f32 %v1029, %v1030
  %v1032 = vsel %vm970, %v518, 0.0
  %v1033 = vadd.f32 %v1031, %v1032
  %v1034 = vsel %vm970, %v523, 0.0
  %v1035 = vadd.f32 %v1033, %v1034
  %v1036 = vsel %vm970, %v526, 0.0
  %v1037 = vadd.f32 %v1035, %v1036
  %v1038 = vsel %vm970, %v531, 0.0
  %v1039 = vadd.f32 %v1037, %v1038
  %v1040 = vsel %vm970, %v534, 0.0
  %v1041 = vadd.f32 %v1039, %v1040
  %v1042 = vsel %vm970, %v539, 0.0
  %v1043 = vadd.f32 %v1041, %v1042
  %v1044 = vsel %vm970, %v542, 0.0
  %v1045 = vadd.f32 %v1043, %v1044
  %v1046 = vsel %vm970, %v547, 0.0
  %v1047 = vadd.f32 %v1045, %v1046
  %v1048 = vsel %vm970, %v550, 0.0
  %v1049 = vadd.f32 %v1047, %v1048
  %v1050 = vsel %vm970, %v555, 0.0
  %v1051 = vadd.f32 %v1049, %v1050
  %v1052 = vsel %vm970, %v558, 0.0
  %v1053 = vadd.f32 %v1051, %v1052
  %v1054 = vsel %vm970, %v563, 0.0
  %v1055 = vadd.f32 %v1053, %v1054
  %v1056 = vsel %vm970, %v566, 0.0
  %v1057 = vadd.f32 %v1055, %v1056
  %v1058 = vsel %vm970, %v571, 0.0
  %v1059 = vadd.f32 %v1057, %v1058
  %v1060 = vsel %vm970, %v574, 0.0
  %v1061 = vadd.f32 %v1059, %v1060
  %v1062 = vsel %vm970, %v579, 0.0
  %v1063 = vadd.f32 %v1061, %v1062
  %v1064 = vsel %vm970, %v582, 0.0
  %v1065 = vadd.f32 %v1063, %v1064
  %v1066 = vsel %vm970, %v587, 0.0
  %v1067 = vadd.f32 %v1065, %v1066
  %v1068 = vsel %vm970, %v590, 0.0
  %v1069 = vadd.f32 %v1067, %v1068
  %v1070 = vsel %vm970, %v595, 0.0
  %v1071 = vadd.f32 %v1069, %v1070
  %v1072 = vsel %vm970, %v598, 0.0
  %v1073 = vadd.f32 %v1071, %v1072
  %v1074 = vsel %vm970, %v603, 0.0
  %v1075 = vadd.f32 %v1073, %v1074
  %v1076 = vsel %vm970, %v606, 0.0
  %v1077 = vadd.f32 %v1075, %v1076
  %v1078 = vsel %vm970, %v611, 0.0
  %v1079 = vadd.f32 %v1077, %v1078
  %v1080 = vsel %vm970, %v614, 0.0
  %v1081 = vadd.f32 %v1079, %v1080
  %v1082 = vsel %vm970, %v619, 0.0
  %v1083 = vadd.f32 %v1081, %v1082
  %v1084 = vsel %vm970, %v622, 0.0
  %v1085 = vadd.f32 %v1083, %v1084
  %v1086 = vsel %vm970, %v627, 0.0
  %v1087 = vadd.f32 %v1085, %v1086
  %v1088 = vsel %vm970, %v630, 0.0
  %v1089 = vadd.f32 %v1087, %v1088
  %v1090 = vsel %vm970, %v635, 0.0
  %v1091 = vadd.f32 %v1089, %v1090
  %v1092 = vsel %vm970, %v638, 0.0
  %v1093 = vadd.f32 %v1091, %v1092
  %v1094 = vsel %vm970, %v643, 0.0
  %v1095 = vadd.f32 %v1093, %v1094
  %v1096 = vsel %vm970, %v646, 0.0
  %v1097 = vadd.f32 %v1095, %v1096
  %1098 = vst.msk [vmem:[%s3] sm:$0xff] %vm970, %v1097
  %v1099 = vmul.f32 %v395, %v395
  %v1100 = vmul.f32 %v398, %v398
  %v1101 = vmul.f32 %v403, %v403
  %v1102 = vmul.f32 %v406, %v406
  %v1103 = vmul.f32 %v411, %v411
  %v1104 = vmul.f32 %v414, %v414
  %v1105 = vmul.f32 %v419, %v419
  %v1106 = vmul.f32 %v422, %v422
  %v1107 = vmul.f32 %v427, %v427
  %v1108 = vmul.f32 %v430, %v430
  %v1109 = vmul.f32 %v435, %v435
  %v1110 = vmul.f32 %v438, %v438
  %v1111 = vmul.f32 %v443, %v443
  %v1112 = vmul.f32 %v446, %v446
  %v1113 = vmul.f32 %v451, %v451
  %v1114 = vmul.f32 %v454, %v454
  %v1115 = vmul.f32 %v459, %v459
  %v1116 = vmul.f32 %v462, %v462
  %v1117 = vmul.f32 %v467, %v467
  %v1118 = vmul.f32 %v470, %v470
  %v1119 = vmul.f32 %v475, %v475
  %v1120 = vmul.f32 %v478, %v478
  %v1121 = vmul.f32 %v483, %v483
  %v1122 = vmul.f32 %v486, %v486
  %v1123 = vmul.f32 %v491, %v491
  %v1124 = vmul.f32 %v494, %v494
  %v1125 = vmul.f32 %v499, %v499
  %v1126 = vmul.f32 %v502, %v502
  %v1127 = vmul.f32 %v507, %v507
  %v1128 = vmul.f32 %v510, %v510
  %v1129 = vmul.f32 %v515, %v515
  %v1130 = vmul.f32 %v518, %v518
  %v1131 = vmul.f32 %v523, %v523
  %v1132 = vmul.f32 %v526, %v526
  %v1133 = vmul.f32 %v531, %v531
  %v1134 = vmul.f32 %v534, %v534
  %v1135 = vmul.f32 %v539, %v539
  %v1136 = vmul.f32 %v542, %v542
  %v1137 = vmul.f32 %v547, %v547
  %v1138 = vmul.f32 %v550, %v550
  %v1139 = vmul.f32 %v555, %v555
  %v1140 = vmul.f32 %v558, %v558
  %v1141 = vmul.f32 %v563, %v563
  %v1142 = vmul.f32 %v566, %v566
  %v1143 = vmul.f32 %v571, %v571
  %v1144 = vmul.f32 %v574, %v574
  %v1145 = vmul.f32 %v579, %v579
  %v1146 = vmul.f32 %v582, %v582
  %v1147 = vmul.f32 %v587, %v587
  %v1148 = vmul.f32 %v590, %v590
  %v1149 = vmul.f32 %v595, %v595
  %v1150 = vmul.f32 %v598, %v598
  %v1151 = vmul.f32 %v603, %v603
  %v1152 = vmul.f32 %v606, %v606
  %v1153 = vmul.f32 %v611, %v611
  %v1154 = vmul.f32 %v614, %v614
  %v1155 = vmul.f32 %v619, %v619
  %v1156 = vmul.f32 %v622, %v622
  %v1157 = vmul.f32 %v627, %v627
  %v1158 = vmul.f32 %v630, %v630
  %v1159 = vmul.f32 %v635, %v635
  %v1160 = vmul.f32 %v638, %v638
  %v1161 = vmul.f32 %v643, %v643
  %v1162 = vmul.f32 %v646, %v646
  %v1163 = vsel %vm970, %v1099, 0.0
  %v1164 = vsel %vm970, %v1100, 0.0
  %v1165 = vadd.f32 %v1163, %v1164
  %v1166 = vsel %vm970, %v1101, 0.0
  %v1167 = vadd.f32 %v1165, %v1166
  %v1168 = vsel %vm970, %v1102, 0.0
  %v1169 = vadd.f32 %v1167, %v1168
  %v1170 = vsel %vm970, %v1103, 0.0
  %v1171 = vadd.f32 %v1169, %v1170
  %v1172 = vsel %vm970, %v1104, 0.0
  %v1173 = vadd.f32 %v1171, %v1172
  %v1174 = vsel %vm970, %v1105, 0.0
  %v1175 = vadd.f32 %v1173, %v1174
  %v1176 = vsel %vm970, %v1106, 0.0
  %v1177 = vadd.f32 %v1175, %v1176
  %v1178 = vsel %vm970, %v1107, 0.0
  %v1179 = vadd.f32 %v1177, %v1178
  %v1180 = vsel %vm970, %v1108, 0.0
  %v1181 = vadd.f32 %v1179, %v1180
  %v1182 = vsel %vm970, %v1109, 0.0
  %v1183 = vadd.f32 %v1181, %v1182
  %v1184 = vsel %vm970, %v1110, 0.0
  %v1185 = vadd.f32 %v1183, %v1184
  %v1186 = vsel %vm970, %v1111, 0.0
  %v1187 = vadd.f32 %v1185, %v1186
  %v1188 = vsel %vm970, %v1112, 0.0
  %v1189 = vadd.f32 %v1187, %v1188
  %v1190 = vsel %vm970, %v1113, 0.0
  %v1191 = vadd.f32 %v1189, %v1190
  %v1192 = vsel %vm970, %v1114, 0.0
  %v1193 = vadd.f32 %v1191, %v1192
  %v1194 = vsel %vm970, %v1115, 0.0
  %v1195 = vadd.f32 %v1193, %v1194
  %v1196 = vsel %vm970, %v1116, 0.0
  %v1197 = vadd.f32 %v1195, %v1196
  %v1198 = vsel %vm970, %v1117, 0.0
  %v1199 = vadd.f32 %v1197, %v1198
  %v1200 = vsel %vm970, %v1118, 0.0
  %v1201 = vadd.f32 %v1199, %v1200
  %v1202 = vsel %vm970, %v1119, 0.0
  %v1203 = vadd.f32 %v1201, %v1202
  %v1204 = vsel %vm970, %v1120, 0.0
  %v1205 = vadd.f32 %v1203, %v1204
  %v1206 = vsel %vm970, %v1121, 0.0
  %v1207 = vadd.f32 %v1205, %v1206
  %v1208 = vsel %vm970, %v1122, 0.0
  %v1209 = vadd.f32 %v1207, %v1208
  %v1210 = vsel %vm970, %v1123, 0.0
  %v1211 = vadd.f32 %v1209, %v1210
  %v1212 = vsel %vm970, %v1124, 0.0
  %v1213 = vadd.f32 %v1211, %v1212
  %v1214 = vsel %vm970, %v1125, 0.0
  %v1215 = vadd.f32 %v1213, %v1214
  %v1216 = vsel %vm970, %v1126, 0.0
  %v1217 = vadd.f32 %v1215, %v1216
  %v1218 = vsel %vm970, %v1127, 0.0
  %v1219 = vadd.f32 %v1217, %v1218
  %v1220 = vsel %vm970, %v1128, 0.0
  %v1221 = vadd.f32 %v1219, %v1220
  %v1222 = vsel %vm970, %v1129, 0.0
  %v1223 = vadd.f32 %v1221, %v1222
  %v1224 = vsel %vm970, %v1130, 0.0
  %v1225 = vadd.f32 %v1223, %v1224
  %v1226 = vsel %vm970, %v1131, 0.0
  %v1227 = vadd.f32 %v1225, %v1226
  %v1228 = vsel %vm970, %v1132, 0.0
  %v1229 = vadd.f32 %v1227, %v1228
  %v1230 = vsel %vm970, %v1133, 0.0
  %v1231 = vadd.f32 %v1229, %v1230
  %v1232 = vsel %vm970, %v1134, 0.0
  %v1233 = vadd.f32 %v1231, %v1232
  %v1234 = vsel %vm970, %v1135, 0.0
  %v1235 = vadd.f32 %v1233, %v1234
  %v1236 = vsel %vm970, %v1136, 0.0
  %v1237 = vadd.f32 %v1235, %v1236
  %v1238 = vsel %vm970, %v1137, 0.0
  %v1239 = vadd.f32 %v1237, %v1238
  %v1240 = vsel %vm970, %v1138, 0.0
  %v1241 = vadd.f32 %v1239, %v1240
  %v1242 = vsel %vm970, %v1139, 0.0
  %v1243 = vadd.f32 %v1241, %v1242
  %v1244 = vsel %vm970, %v1140, 0.0
  %v1245 = vadd.f32 %v1243, %v1244
  %v1246 = vsel %vm970, %v1141, 0.0
  %v1247 = vadd.f32 %v1245, %v1246
  %v1248 = vsel %vm970, %v1142, 0.0
  %v1249 = vadd.f32 %v1247, %v1248
  %v1250 = vsel %vm970, %v1143, 0.0
  %v1251 = vadd.f32 %v1249, %v1250
  %v1252 = vsel %vm970, %v1144, 0.0
  %v1253 = vadd.f32 %v1251, %v1252
  %v1254 = vsel %vm970, %v1145, 0.0
  %v1255 = vadd.f32 %v1253, %v1254
  %v1256 = vsel %vm970, %v1146, 0.0
  %v1257 = vadd.f32 %v1255, %v1256
  %v1258 = vsel %vm970, %v1147, 0.0
  %v1259 = vadd.f32 %v1257, %v1258
  %v1260 = vsel %vm970, %v1148, 0.0
  %v1261 = vadd.f32 %v1259, %v1260
  %v1262 = vsel %vm970, %v1149, 0.0
  %v1263 = vadd.f32 %v1261, %v1262
  %v1264 = vsel %vm970, %v1150, 0.0
  %v1265 = vadd.f32 %v1263, %v1264
  %v1266 = vsel %vm970, %v1151, 0.0
  %v1267 = vadd.f32 %v1265, %v1266
  %v1268 = vsel %vm970, %v1152, 0.0
  %v1269 = vadd.f32 %v1267, %v1268
  %v1270 = vsel %vm970, %v1153, 0.0
  %v1271 = vadd.f32 %v1269, %v1270
  %v1272 = vsel %vm970, %v1154, 0.0
  %v1273 = vadd.f32 %v1271, %v1272
  %v1274 = vsel %vm970, %v1155, 0.0
  %v1275 = vadd.f32 %v1273, %v1274
  %v1276 = vsel %vm970, %v1156, 0.0
  %v1277 = vadd.f32 %v1275, %v1276
  %v1278 = vsel %vm970, %v1157, 0.0
  %v1279 = vadd.f32 %v1277, %v1278
  %v1280 = vsel %vm970, %v1158, 0.0
  %v1281 = vadd.f32 %v1279, %v1280
  %v1282 = vsel %vm970, %v1159, 0.0
  %v1283 = vadd.f32 %v1281, %v1282
  %v1284 = vsel %vm970, %v1160, 0.0
  %v1285 = vadd.f32 %v1283, %v1284
  %v1286 = vsel %vm970, %v1161, 0.0
  %v1287 = vadd.f32 %v1285, %v1286
  %v1288 = vsel %vm970, %v1162, 0.0
  %v1289 = vadd.f32 %v1287, %v1288
  %1290 = vst.msk [vmem:[%s4] sm:$0xff] %vm970, %v1289
  // Predicated region
  $region10: #{upblock_forward.6} parent=0 // pred_check
    _
  $region11: #{upblock_forward.6} parent=0 // pred_check_branch
    %1292 = sbr.rel (0) target = $region13
  $region12: #{upblock_forward.6} parent=0 // pred_region
    _
  $region13: #{upblock_forward.6} parent=0 // pred_fallthru
    _
  // Predicated region
  $region14: #{upblock_forward.6} parent=0 // pred_check
    _
  $region15: #{upblock_forward.6} parent=0 // pred_check_branch
    %1294 = sbr.rel (0) target = $region17
  $region16: #{upblock_forward.6} parent=0 // pred_region
    _
  $region17: #{upblock_forward.6} parent=0 // pred_fallthru
    _
  // Predicated region
  $region18: #{upblock_forward.6} parent=0 // pred_check
    _
  $region19: #{upblock_forward.6} parent=0 // pred_check_branch
    %1296 = sbr.rel (0) target = $region21
  $region20: #{upblock_forward.6} parent=0 // pred_region
    _
  $region21: #{upblock_forward.6} parent=0 // pred_fallthru
    _
  // Predicated region
  $region22: #{upblock_forward.6} parent=0 // pred_check
    _
  $region23: #{upblock_forward.6} parent=0 // pred_check_branch
    %1298 = sbr.rel (0) target = $region25
  $region24: #{upblock_forward.6} parent=0 // pred_region
    _
  $region25: #{upblock_forward.6} parent=0 // pred_fallthru
    _
  // Predicated region
  $region26: #{upblock_forward.6} parent=0 // pred_check
    _
  $region27: #{upblock_forward.6} parent=0 // pred_check_branch
    %1300 = sbr.rel (0) target = $region29
  $region28: #{upblock_forward.6} parent=0 // pred_region
    _
  $region29: #{upblock_forward.6} parent=0 // pred_fallthru
    _
  // Predicated region
  $region30: #{upblock_forward.6} parent=0 // pred_check
    _
  $region31: #{upblock_forward.6} parent=0 // pred_check_branch
    %1302 = sbr.rel (0) target = $region33
  $region32: #{upblock_forward.6} parent=0 // pred_region
    _
  $region33: #{upblock_forward.6} parent=0 // pred_fallthru
    _

// kernel: upblock_forward.8
$region0: #{upblock_forward.8}
  #allocation0 [shape = 'u32[]', space=smem, size = 0x4, offset = 0x4, fixed_abs, tag = 'smem constant byte address 0x4 - core index']
  #allocation1 [shape = 'u32[144,128]{1,0:T(1,128)}', space=vmem, size = 0x12000, scoped, tag = 'internal scratch']
  %s0 = inlined_call_operand.vmem [shape: bf16[2048,72], index: 0, kind: input, shape index: {}]
  %s1 = inlined_call_operand.vmem [shape: bf16[72,8], index: 1, kind: input, shape index: {}]
  %s2 = inlined_call_operand.vmem [shape: bf16[2048,8], index: 2, kind: output, shape index: {0}]
  %s3 = inlined_call_operand.vmem [shape: f32[16,8], index: 3, kind: output, shape index: {1}]
  %s4 = inlined_call_operand.vmem [shape: f32[16,8], index: 4, kind: output, shape index: {2}]
  %5 = xla_tuple %s2, %s3, %s4
  %s6 = sld [smem:[#allocation0]]
  $region57: #{upblock_forward.8} parent=0
    _
  %s8 = ssub.s32 1, %s6
  %s9 = scalar_select 0, %s8, %s6
  loop: start=0, step=1, limit=4
  $region2: #{upblock_forward.8} parent=0 // loop_pre_header
    _
  $region3: #{upblock_forward.8} parent=0 // loop_header
    %s11 = sphi 0, %s15
    %p12 = scmp.ge.s32.totalorder %s11, 4
    %s21 = sphi 0, %s23
    %s24 = sphi 0, %s21
    %s25 = sphi 0, %s24
    %s41 = sphi 0, %s25
    %s45 = sphi 0, %s45
    %s47 = sphi 0, %s45
    %s48 = sphi 0, %s47
    %s62 = sphi 0, %s48
    %s68 = sphi 0, %s70
    %s71 = sphi 0, %s68
    %s72 = sphi 0, %s71
    %s88 = sphi 0, %s72
    %s94 = sphi 0, %s96
    %s97 = sphi 0, %s94
    %s98 = sphi 0, %s97
    %s114 = sphi 0, %s98
    %s120 = sphi 0, %s122
    %s123 = sphi 0, %s120
    %s124 = sphi 0, %s123
    %s140 = sphi 0, %s124
  $region4: #{upblock_forward.8} parent=0 // loop_header_branch
    %14 = sbr.rel (%p12) target = $region8
  $region5: #{upblock_forward.8} parent=0 // loop_body
    %s16 = ssub.s32 %s11, 1
    %s17 = ssub.s32 %s11, 2
    %s18 = sadd.s32 %s11, 1
    %s19 = ssub.s32 %s11, %s18
    %p20 = scmp.eq.s32.totalorder %s19, 0
    %s22 = sadd.s32 %s21, 1
    %s23 = scalar_select %p20, %s21, %s22
    %p26 = pneg %p20
    %p27 = scmp.eq.s32.totalorder %s11, 1
    %p28 = por %p26, %p27
    %p29 = scmp.ne.s32.totalorder %s21, %s24
    %p30 = scmp.eq.s32.totalorder %s11, 0
    %p31 = por %p29, %p30
    %p32 = scmp.ne.s32.totalorder %s21, %s24
    %p33 = scmp.eq.s32.totalorder %s16, 1
    %p34 = por %p32, %p33
    %p35 = scmp.ne.s32.totalorder %s24, %s25
    %p36 = scmp.eq.s32.totalorder %s16, 0
    %p37 = por %p35, %p36
    %p38 = scmp.ne.s32.totalorder %s24, %s25
    %p39 = scmp.eq.s32.totalorder %s17, 1
    %p40 = por %p38, %p39
    %p42 = scmp.ne.s32.totalorder %s25, %s41
    %p43 = scmp.eq.s32.totalorder %s17, 0
    %p44 = por %p42, %p43
    %s46 = sadd.s32 %s45, 1
    %p49 = scmp.eq.s32.totalorder %s11, 1
    %p50 = scmp.ne.s32.totalorder %s45, %s47
    %p51 = scmp.eq.s32.totalorder %s11, 0
    %p52 = por %p50, %p51
    %p53 = scmp.ne.s32.totalorder %s45, %s47
    %p54 = scmp.eq.s32.totalorder %s16, 1
    %p55 = por %p53, %p54
    %p56 = scmp.ne.s32.totalorder %s47, %s48
    %p57 = scmp.eq.s32.totalorder %s16, 0
    %p58 = por %p56, %p57
    %p59 = scmp.ne.s32.totalorder %s47, %s48
    %p60 = scmp.eq.s32.totalorder %s17, 1
    %p61 = por %p59, %p60
    %p63 = scmp.ne.s32.totalorder %s48, %s62
    %p64 = scmp.eq.s32.totalorder %s17, 0
    %p65 = por %p63, %p64
    %s66 = ssub.s32 %s11, %s18
    %p67 = scmp.eq.s32.totalorder %s66, 0
    %s69 = sadd.s32 %s68, 1
    %s70 = scalar_select %p67, %s68, %s69
    %p73 = pneg %p67
    %p74 = scmp.eq.s32.totalorder %s11, 1
    %p75 = por %p73, %p74
    %p76 = scmp.ne.s32.totalorder %s68, %s71
    %p77 = scmp.eq.s32.totalorder %s11, 0
    %p78 = por %p76, %p77
    %p79 = scmp.ne.s32.totalorder %s68, %s71
    %p80 = scmp.eq.s32.totalorder %s16, 1
    %p81 = por %p79, %p80
    %p82 = scmp.ne.s32.totalorder %s71, %s72
    %p83 = scmp.eq.s32.totalorder %s16, 0
    %p84 = por %p82, %p83
    %p85 = scmp.ne.s32.totalorder %s71, %s72
    %p86 = scmp.eq.s32.totalorder %s17, 1
    %p87 = por %p85, %p86
    %p89 = scmp.ne.s32.totalorder %s72, %s88
    %p90 = scmp.eq.s32.totalorder %s17, 0
    %p91 = por %p89, %p90
    %s92 = ssub.s32 %s11, %s18
    %p93 = scmp.eq.s32.totalorder %s92, 0
    %s95 = sadd.s32 %s94, 1
    %s96 = scalar_select %p93, %s94, %s95
    %p99 = pneg %p93
    %p100 = scmp.eq.s32.totalorder %s11, 1
    %p101 = por %p99, %p100
    %p102 = scmp.ne.s32.totalorder %s94, %s97
    %p103 = scmp.eq.s32.totalorder %s11, 0
    %p104 = por %p102, %p103
    %p105 = scmp.ne.s32.totalorder %s94, %s97
    %p106 = scmp.eq.s32.totalorder %s16, 1
    %p107 = por %p105, %p106
    %p108 = scmp.ne.s32.totalorder %s97, %s98
    %p109 = scmp.eq.s32.totalorder %s16, 0
    %p110 = por %p108, %p109
    %p111 = scmp.ne.s32.totalorder %s97, %s98
    %p112 = scmp.eq.s32.totalorder %s17, 1
    %p113 = por %p111, %p112
    %p115 = scmp.ne.s32.totalorder %s98, %s114
    %p116 = scmp.eq.s32.totalorder %s17, 0
    %p117 = por %p115, %p116
    %s118 = ssub.s32 %s11, %s18
    %p119 = scmp.eq.s32.totalorder %s118, 0
    %s121 = sadd.s32 %s120, 1
    %s122 = scalar_select %p119, %s120, %s121
    %p125 = pneg %p119
    %p126 = scmp.eq.s32.totalorder %s11, 1
    %p127 = por %p125, %p126
    %p128 = scmp.ne.s32.totalorder %s120, %s123
    %p129 = scmp.eq.s32.totalorder %s11, 0
    %p130 = por %p128, %p129
    %p131 = scmp.ne.s32.totalorder %s120, %s123
    %p132 = scmp.eq.s32.totalorder %s16, 1
    %p133 = por %p131, %p132
    %p134 = scmp.ne.s32.totalorder %s123, %s124
    %p135 = scmp.eq.s32.totalorder %s16, 0
    %p136 = por %p134, %p135
    %p137 = scmp.ne.s32.totalorder %s123, %s124
    %p138 = scmp.eq.s32.totalorder %s17, 1
    %p139 = por %p137, %p138
    %p141 = scmp.ne.s32.totalorder %s124, %s140
    %p142 = scmp.eq.s32.totalorder %s17, 0
    %p143 = por %p141, %p142
    %p144 = scmp.le.s32.totalorder 1, %s11
    %p145 = scmp.lt.s32.totalorder %s11, 3
    %p146 = pnand %p144, %p145
    %p147 = pneg %p146
    // Predicated region
    $region9: #{upblock_forward.8} parent=5 // pred_check
      _
    $region10: #{upblock_forward.8} parent=5 // pred_check_branch
      %149 = sbr.rel (%p146) target = $region12
    $region11: #{upblock_forward.8} parent=5 // pred_region
      %s150 = ssub.s32 %s11, 1
      // Predicated region
      $region13: #{upblock_forward.8} parent=11 // pred_check
        %p151 = pneg %p58
      $region14: #{upblock_forward.8} parent=11 // pred_check_branch
        %153 = sbr.rel (%p151) target = $region16
      $region15: #{upblock_forward.8} parent=11 // pred_region
        _
      $region16: #{upblock_forward.8} parent=11 // pred_fallthru
        _
    $region12: #{upblock_forward.8} parent=5 // pred_fallthru
      _
    %p154 = scmp.lt.s32.totalorder %s11, 2
    // Predicated region
    $region17: #{upblock_forward.8} parent=5 // pred_check
      %p155 = pneg %p154
    $region18: #{upblock_forward.8} parent=5 // pred_check_branch
      %157 = sbr.rel (%p155) target = $region20
    $region19: #{upblock_forward.8} parent=5 // pred_region
      // Predicated region
      $region21: #{upblock_forward.8} parent=19 // pred_check
        %p158 = pneg %p31
      $region22: #{upblock_forward.8} parent=19 // pred_check_branch
        %160 = sbr.rel (%p158) target = $region24
      $region23: #{upblock_forward.8} parent=19 // pred_region
        %s161 = smul.u32 128, %s11
        %p162 = scmp.lt.s32.totalorder %s161, 255
        %s163 = scalar_select %p162, %s161, 255
        %s164 = smul.addr %s163, 4
        %s165 = scalar_lea.vmem %s0, %s164
        %s166 = smul.u32 128, %s11
      $region24: #{upblock_forward.8} parent=19 // pred_fallthru
        _
    $region20: #{upblock_forward.8} parent=5 // pred_fallthru
      _
    %p167 = scmp.le.s32.totalorder 1, %s11
    %p168 = scmp.lt.s32.totalorder %s11, 3
    %p169 = pnand %p167, %p168
    %p170 = pneg %p169
    // Predicated region
    $region25: #{upblock_forward.8} parent=5 // pred_check
      _
    $region26: #{upblock_forward.8} parent=5 // pred_check_branch
      %172 = sbr.rel (%p169) target = $region28
    $region27: #{upblock_forward.8} parent=5 // pred_region
      %s173 = ssub.s32 %s11, 1
      %s174 = smul.u32 128, %s16
      %p175 = scmp.lt.s32.totalorder %s174, 255
      %s176 = scalar_select %p175, %s174, 255
      %s177 = smul.addr %s176, 4
      %s178 = scalar_lea.vmem %s0, %s177
      %p179 = pneg %p37
      %p180 = pneg %p34
      %p181 = pneg %p58
      %p182 = pneg %p55
      %p183 = pneg %p84
      %p184 = pneg %p81
      %s185 = smul.u32 128, %s16
      %p186 = scmp.lt.s32.totalorder %s185, 255
      %s187 = scalar_select %p186, %s185, 255
      %s188 = smul.addr %s187, 4
      %s189 = scalar_lea.vmem %s2, %s188
      %p190 = pneg %p110
      %p191 = pneg %p107
      %p192 = scmp.lt.s32.totalorder %s16, 1
      %s193 = scalar_select %p192, %s16, 1
      %s194 = smul.addr %s193, 8
      %s195 = scalar_lea.vmem %s3, %s194
      %p196 = pneg %p136
      %p197 = pneg %p133
      %p198 = scmp.lt.s32.totalorder %s16, 1
      %s199 = scalar_select %p198, %s16, 1
      %s200 = smul.addr %s199, 8
      %s201 = scalar_lea.vmem %s4, %s200
      %s202 = smul.u32 128, %s16
      %p203 = scmp.lt.s32.totalorder %s202, 255
      %s204 = scalar_select %p203, %s202, 255
      %s205 = smul.addr %s204, 4
      %s206 = scalar_lea.vmem %s0, %s205
      %s207 = smul.u32 128, %s16
      %s208 = smul.u32 128, %s16
      %p209 = scmp.lt.s32.totalorder %s208, 255
      %s210 = scalar_select %p209, %s208, 255
      %s211 = smul.addr %s210, 4
      %s212 = scalar_lea.vmem %s2, %s211
      %s213 = smul.u32 128, %s16
      %p214 = scmp.lt.s32.totalorder %s16, 1
      %s215 = scalar_select %p214, %s16, 1
      %s216 = smul.addr %s215, 8
      %s217 = scalar_lea.vmem %s3, %s216
      %p218 = scmp.lt.s32.totalorder %s16, 1
      %s219 = scalar_select %p218, %s16, 1
      %s220 = smul.addr %s219, 8
      %s221 = scalar_lea.vmem %s4, %s220
      %v223 = vld [vmem:[%s206] sm:$0xf]
      %v224 = vld [vmem:[%s206 + $0x4] sm:$0xf]
      %v225 = vld [vmem:[%s206 + $0x8] sm:$0xf]
      %v226 = vld [vmem:[%s206 + $0xc] sm:$0xf]
      %v227 = vld [vmem:[%s206 + $0x10] sm:$0xf]
      %v228 = vld [vmem:[%s206 + $0x14] sm:$0xf]
      %v229 = vld [vmem:[%s206 + $0x18] sm:$0xf]
      %v230 = vld [vmem:[%s206 + $0x1c] sm:$0xf]
      %v231 = vld [vmem:[%s206 + $0x20] sm:$0xf]
      %v232 = vld [vmem:[%s206 + $0x24] sm:$0xf]
      %v233 = vld [vmem:[%s206 + $0x28] sm:$0xf]
      %v234 = vld [vmem:[%s206 + $0x2c] sm:$0xf]
      %v235 = vld [vmem:[%s206 + $0x30] sm:$0xf]
      %v236 = vld [vmem:[%s206 + $0x34] sm:$0xf]
      %v237 = vld [vmem:[%s206 + $0x38] sm:$0xf]
      %v238 = vld [vmem:[%s206 + $0x3c] sm:$0xf]
      %v239 = vld [vmem:[%s206 + $0x40] sm:$0xf]
      %v240 = vld [vmem:[%s206 + $0x44] sm:$0xf]
      %v241 = vld [vmem:[%s206 + $0x48] sm:$0xf]
      %v242 = vld [vmem:[%s206 + $0x4c] sm:$0xf]
      %v243 = vld [vmem:[%s206 + $0x50] sm:$0xf]
      %v244 = vld [vmem:[%s206 + $0x54] sm:$0xf]
      %v245 = vld [vmem:[%s206 + $0x58] sm:$0xf]
      %v246 = vld [vmem:[%s206 + $0x5c] sm:$0xf]
      %v247 = vld [vmem:[%s206 + $0x60] sm:$0xf]
      %v248 = vld [vmem:[%s206 + $0x64] sm:$0xf]
      %v249 = vld [vmem:[%s206 + $0x68] sm:$0xf]
      %v250 = vld [vmem:[%s206 + $0x6c] sm:$0xf]
      %v251 = vld [vmem:[%s206 + $0x70] sm:$0xf]
      %v252 = vld [vmem:[%s206 + $0x74] sm:$0xf]
      %v253 = vld [vmem:[%s206 + $0x78] sm:$0xf]
      %v254 = vld [vmem:[%s206 + $0x7c] sm:$0xf]
      %v255 = vld [vmem:[%s206 + $0x80] sm:$0xf]
      %v256 = vld [vmem:[%s206 + $0x84] sm:$0xf]
      %v257 = vld [vmem:[%s206 + $0x88] sm:$0xf]
      %v258 = vld [vmem:[%s206 + $0x8c] sm:$0xf]
      %v259 = vld [vmem:[%s206 + $0x90] sm:$0xf]
      %v260 = vld [vmem:[%s206 + $0x94] sm:$0xf]
      %v261 = vld [vmem:[%s206 + $0x98] sm:$0xf]
      %v262 = vld [vmem:[%s206 + $0x9c] sm:$0xf]
      %v263 = vld [vmem:[%s206 + $0xa0] sm:$0xf]
      %v264 = vld [vmem:[%s206 + $0xa4] sm:$0xf]
      %v265 = vld [vmem:[%s206 + $0xa8] sm:$0xf]
      %v266 = vld [vmem:[%s206 + $0xac] sm:$0xf]
      %v267 = vld [vmem:[%s206 + $0xb0] sm:$0xf]
      %v268 = vld [vmem:[%s206 + $0xb4] sm:$0xf]
      %v269 = vld [vmem:[%s206 + $0xb8] sm:$0xf]
      %v270 = vld [vmem:[%s206 + $0xbc] sm:$0xf]
      %v271 = vld [vmem:[%s206 + $0xc0] sm:$0xf]
      %v272 = vld [vmem:[%s206 + $0xc4] sm:$0xf]
      %v273 = vld [vmem:[%s206 + $0xc8] sm:$0xf]
      %v274 = vld [vmem:[%s206 + $0xcc] sm:$0xf]
      %v275 = vld [vmem:[%s206 + $0xd0] sm:$0xf]
      %v276 = vld [vmem:[%s206 + $0xd4] sm:$0xf]
      %v277 = vld [vmem:[%s206 + $0xd8] sm:$0xf]
      %v278 = vld [vmem:[%s206 + $0xdc] sm:$0xf]
      %v279 = vld [vmem:[%s206 + $0xe0] sm:$0xf]
      %v280 = vld [vmem:[%s206 + $0xe4] sm:$0xf]
      %v281 = vld [vmem:[%s206 + $0xe8] sm:$0xf]
      %v282 = vld [vmem:[%s206 + $0xec] sm:$0xf]
      %v283 = vld [vmem:[%s206 + $0xf0] sm:$0xf]
      %v284 = vld [vmem:[%s206 + $0xf4] sm:$0xf]
      %v285 = vld [vmem:[%s206 + $0xf8] sm:$0xf]
      %v286 = vld [vmem:[%s206 + $0xfc] sm:$0xf]
      %v287 = vld [vmem:[%s206 + $0x100] sm:$0xf]
      %v288 = vld [vmem:[%s206 + $0x104] sm:$0xf]
      %v289 = vld [vmem:[%s206 + $0x108] sm:$0xf]
      %v290 = vld [vmem:[%s206 + $0x10c] sm:$0xf]
      %v291 = vld [vmem:[%s206 + $0x110] sm:$0xf]
      %v292 = vld [vmem:[%s206 + $0x114] sm:$0xf]
      %v293 = vld [vmem:[%s206 + $0x118] sm:$0xf]
      %v294 = vld [vmem:[%s206 + $0x11c] sm:$0xf]
      %v295 = vld [vmem:[%s206 + $0x120] sm:$0xf]
      %v296 = vld [vmem:[%s206 + $0x124] sm:$0xf]
      %v297 = vld [vmem:[%s206 + $0x128] sm:$0xf]
      %v298 = vld [vmem:[%s206 + $0x12c] sm:$0xf]
      %v299 = vld [vmem:[%s206 + $0x130] sm:$0xf]
      %v300 = vld [vmem:[%s206 + $0x134] sm:$0xf]
      %v301 = vld [vmem:[%s206 + $0x138] sm:$0xf]
      %v302 = vld [vmem:[%s206 + $0x13c] sm:$0xf]
      %v303 = vld [vmem:[%s206 + $0x140] sm:$0xf]
      %v304 = vld [vmem:[%s206 + $0x144] sm:$0xf]
      %v305 = vld [vmem:[%s206 + $0x148] sm:$0xf]
      %v306 = vld [vmem:[%s206 + $0x14c] sm:$0xf]
      %v307 = vld [vmem:[%s206 + $0x150] sm:$0xf]
      %v308 = vld [vmem:[%s206 + $0x154] sm:$0xf]
      %v309 = vld [vmem:[%s206 + $0x158] sm:$0xf]
      %v310 = vld [vmem:[%s206 + $0x15c] sm:$0xf]
      %v311 = vld [vmem:[%s206 + $0x160] sm:$0xf]
      %v312 = vld [vmem:[%s206 + $0x164] sm:$0xf]
      %v313 = vld [vmem:[%s206 + $0x168] sm:$0xf]
      %v314 = vld [vmem:[%s206 + $0x16c] sm:$0xf]
      %v315 = vld [vmem:[%s206 + $0x170] sm:$0xf]
      %v316 = vld [vmem:[%s206 + $0x174] sm:$0xf]
      %v317 = vld [vmem:[%s206 + $0x178] sm:$0xf]
      %v318 = vld [vmem:[%s206 + $0x17c] sm:$0xf]
      %v319 = vld [vmem:[%s206 + $0x180] sm:$0xf]
      %v320 = vld [vmem:[%s206 + $0x184] sm:$0xf]
      %v321 = vld [vmem:[%s206 + $0x188] sm:$0xf]
      %v322 = vld [vmem:[%s206 + $0x18c] sm:$0xf]
      %v323 = vld [vmem:[%s206 + $0x190] sm:$0xf]
      %v324 = vld [vmem:[%s206 + $0x194] sm:$0xf]
      %v325 = vld [vmem:[%s206 + $0x198] sm:$0xf]
      %v326 = vld [vmem:[%s206 + $0x19c] sm:$0xf]
      %v327 = vld [vmem:[%s206 + $0x1a0] sm:$0xf]
      %v328 = vld [vmem:[%s206 + $0x1a4] sm:$0xf]
      %v329 = vld [vmem:[%s206 + $0x1a8] sm:$0xf]
      %v330 = vld [vmem:[%s206 + $0x1ac] sm:$0xf]
      %v331 = vld [vmem:[%s206 + $0x1b0] sm:$0xf]
      %v332 = vld [vmem:[%s206 + $0x1b4] sm:$0xf]
      %v333 = vld [vmem:[%s206 + $0x1b8] sm:$0xf]
      %v334 = vld [vmem:[%s206 + $0x1bc] sm:$0xf]
      %v335 = vld [vmem:[%s206 + $0x1c0] sm:$0xf]
      %v336 = vld [vmem:[%s206 + $0x1c4] sm:$0xf]
      %v337 = vld [vmem:[%s206 + $0x1c8] sm:$0xf]
      %v338 = vld [vmem:[%s206 + $0x1cc] sm:$0xf]
      %v339 = vld [vmem:[%s206 + $0x1d0] sm:$0xf]
      %v340 = vld [vmem:[%s206 + $0x1d4] sm:$0xf]
      %v341 = vld [vmem:[%s206 + $0x1d8] sm:$0xf]
      %v342 = vld [vmem:[%s206 + $0x1dc] sm:$0xf]
      %v343 = vld [vmem:[%s206 + $0x1e0] sm:$0xf]
      %v344 = vld [vmem:[%s206 + $0x1e4] sm:$0xf]
      %v345 = vld [vmem:[%s206 + $0x1e8] sm:$0xf]
      %v346 = vld [vmem:[%s206 + $0x1ec] sm:$0xf]
      %v347 = vld [vmem:[%s206 + $0x1f0] sm:$0xf]
      %v348 = vld [vmem:[%s206 + $0x1f4] sm:$0xf]
      %v349 = vld [vmem:[%s206 + $0x1f8] sm:$0xf]
      %v350 = vld [vmem:[%s206 + $0x1fc] sm:$0xf]
      %v351 = vld [vmem:[%s1] sm:$0xf]
      %v352 = vld [vmem:[%s1 + $0x4] sm:$0xf]
      %v353 = vld [vmem:[%s1 + $0x8] sm:$0xf]
      %v354 = vld [vmem:[%s1 + $0xc] sm:$0xf]
      %v355 = vld [vmem:[%s1 + $0x10] sm:$0xf]
      %v356 = vld [vmem:[%s1 + $0x14] sm:$0xf]
      %v357 = vld [vmem:[%s1 + $0x18] sm:$0xf]
      %v358 = vld [vmem:[%s1 + $0x1c] sm:$0xf]
      %v359 = vld [vmem:[%s1 + $0x20] sm:$0xf]
      %v488 = vunpack.c.l.b16 %v223
      %v489 = vunpack.c.l.b16 %v224
      %v490 = vunpack.c.l.b16 %v225
      %v491 = vunpack.c.l.b16 %v226
      %v492 = vunpack.c.l.b16 %v227
      %v493 = vunpack.c.l.b16 %v228
      %v494 = vunpack.c.l.b16 %v229
      %v495 = vunpack.c.l.b16 %v230
      %v496 = vunpack.c.l.b16 %v231
      %v497 = vunpack.c.l.b16 %v232
      %v498 = vunpack.c.l.b16 %v233
      %v499 = vunpack.c.l.b16 %v234
      %v500 = vunpack.c.l.b16 %v235
      %v501 = vunpack.c.l.b16 %v236
      %v502 = vunpack.c.l.b16 %v237
      %v503 = vunpack.c.l.b16 %v238
      %v504 = vunpack.c.l.b16 %v239
      %v505 = vunpack.c.l.b16 %v240
      %v506 = vunpack.c.l.b16 %v241
      %v507 = vunpack.c.l.b16 %v242
      %v508 = vunpack.c.l.b16 %v243
      %v509 = vunpack.c.l.b16 %v244
      %v510 = vunpack.c.l.b16 %v245
      %v511 = vunpack.c.l.b16 %v246
      %v512 = vunpack.c.l.b16 %v247
      %v513 = vunpack.c.l.b16 %v248
      %v514 = vunpack.c.l.b16 %v249
      %v515 = vunpack.c.l.b16 %v250
      %v516 = vunpack.c.l.b16 %v251
      %v517 = vunpack.c.l.b16 %v252
      %v518 = vunpack.c.l.b16 %v253
      %v519 = vunpack.c.l.b16 %v254
      %v520 = vunpack.c.l.b16 %v255
      %v521 = vunpack.c.l.b16 %v256
      %v522 = vunpack.c.l.b16 %v257
      %v523 = vunpack.c.l.b16 %v258
      %v524 = vunpack.c.l.b16 %v259
      %v525 = vunpack.c.l.b16 %v260
      %v526 = vunpack.c.l.b16 %v261
      %v527 = vunpack.c.l.b16 %v262
      %v528 = vunpack.c.l.b16 %v263
      %v529 = vunpack.c.l.b16 %v264
      %v530 = vunpack.c.l.b16 %v265
      %v531 = vunpack.c.l.b16 %v266
      %v532 = vunpack.c.l.b16 %v267
      %v533 = vunpack.c.l.b16 %v268
      %v534 = vunpack.c.l.b16 %v269
      %v535 = vunpack.c.l.b16 %v270
      %v536 = vunpack.c.l.b16 %v271
      %v537 = vunpack.c.l.b16 %v272
      %v538 = vunpack.c.l.b16 %v273
      %v539 = vunpack.c.l.b16 %v274
      %v540 = vunpack.c.l.b16 %v275
      %v541 = vunpack.c.l.b16 %v276
      %v542 = vunpack.c.l.b16 %v277
      %v543 = vunpack.c.l.b16 %v278
      %v544 = vunpack.c.l.b16 %v279
      %v545 = vunpack.c.l.b16 %v280
      %v546 = vunpack.c.l.b16 %v281
      %v547 = vunpack.c.l.b16 %v282
      %v548 = vunpack.c.l.b16 %v283
      %v549 = vunpack.c.l.b16 %v284
      %v550 = vunpack.c.l.b16 %v285
      %v551 = vunpack.c.l.b16 %v286
      %v552 = vunpack.c.l.b16 %v287
      %v553 = vunpack.c.l.b16 %v288
      %v554 = vunpack.c.l.b16 %v289
      %v555 = vunpack.c.l.b16 %v290
      %v556 = vunpack.c.l.b16 %v291
      %v557 = vunpack.c.l.b16 %v292
      %v558 = vunpack.c.l.b16 %v293
      %v559 = vunpack.c.l.b16 %v294
      %v560 = vunpack.c.l.b16 %v295
      %v561 = vunpack.c.l.b16 %v296
      %v562 = vunpack.c.l.b16 %v297
      %v563 = vunpack.c.l.b16 %v298
      %v564 = vunpack.c.l.b16 %v299
      %v565 = vunpack.c.l.b16 %v300
      %v566 = vunpack.c.l.b16 %v301
      %v567 = vunpack.c.l.b16 %v302
      %v568 = vunpack.c.l.b16 %v303
      %v569 = vunpack.c.l.b16 %v304
      %v570 = vunpack.c.l.b16 %v305
      %v571 = vunpack.c.l.b16 %v306
      %v572 = vunpack.c.l.b16 %v307
      %v573 = vunpack.c.l.b16 %v308
      %v574 = vunpack.c.l.b16 %v309
      %v575 = vunpack.c.l.b16 %v310
      %v576 = vunpack.c.l.b16 %v311
      %v577 = vunpack.c.l.b16 %v312
      %v578 = vunpack.c.l.b16 %v313
      %v579 = vunpack.c.l.b16 %v314
      %v580 = vunpack.c.l.b16 %v315
      %v581 = vunpack.c.l.b16 %v316
      %v582 = vunpack.c.l.b16 %v317
      %v583 = vunpack.c.l.b16 %v318
      %v584 = vunpack.c.l.b16 %v319
      %v585 = vunpack.c.l.b16 %v320
      %v586 = vunpack.c.l.b16 %v321
      %v587 = vunpack.c.l.b16 %v322
      %v588 = vunpack.c.l.b16 %v323
      %v589 = vunpack.c.l.b16 %v324
      %v590 = vunpack.c.l.b16 %v325
      %v591 = vunpack.c.l.b16 %v326
      %v592 = vunpack.c.l.b16 %v327
      %v593 = vunpack.c.l.b16 %v328
      %v594 = vunpack.c.l.b16 %v329
      %v595 = vunpack.c.l.b16 %v330
      %v596 = vunpack.c.l.b16 %v331
      %v597 = vunpack.c.l.b16 %v332
      %v598 = vunpack.c.l.b16 %v333
      %v599 = vunpack.c.l.b16 %v334
      %v600 = vunpack.c.l.b16 %v335
      %v601 = vunpack.c.l.b16 %v336
      %v602 = vunpack.c.l.b16 %v337
      %v603 = vunpack.c.l.b16 %v338
      %v604 = vunpack.c.l.b16 %v339
      %v605 = vunpack.c.l.b16 %v340
      %v606 = vunpack.c.l.b16 %v341
      %v607 = vunpack.c.l.b16 %v342
      %v608 = vunpack.c.l.b16 %v343
      %v609 = vunpack.c.l.b16 %v344
      %v610 = vunpack.c.l.b16 %v345
      %v611 = vunpack.c.l.b16 %v346
      %v612 = vunpack.c.l.b16 %v347
      %v613 = vunpack.c.l.b16 %v348
      %v614 = vunpack.c.l.b16 %v349
      %v615 = vunpack.c.l.b16 %v350
      %v616 = vpack.c.b16 %v489, %v488
      %v617 = vpack.c.b16 %v491, %v490
      %v618 = vpack.c.b16 %v493, %v492
      %v619 = vpack.c.b16 %v495, %v494
      %v620 = vpack.c.b16 %v497, %v496
      %v621 = vpack.c.b16 %v499, %v498
      %v622 = vpack.c.b16 %v501, %v500
      %v623 = vpack.c.b16 %v503, %v502
      %v624 = vpack.c.b16 %v505, %v504
      %v625 = vpack.c.b16 %v507, %v506
      %v626 = vpack.c.b16 %v509, %v508
      %v627 = vpack.c.b16 %v511, %v510
      %v628 = vpack.c.b16 %v513, %v512
      %v629 = vpack.c.b16 %v515, %v514
      %v630 = vpack.c.b16 %v517, %v516
      %v631 = vpack.c.b16 %v519, %v518
      %v632 = vpack.c.b16 %v521, %v520
      %v633 = vpack.c.b16 %v523, %v522
      %v634 = vpack.c.b16 %v525, %v524
      %v635 = vpack.c.b16 %v527, %v526
      %v636 = vpack.c.b16 %v529, %v528
      %v637 = vpack.c.b16 %v531, %v530
      %v638 = vpack.c.b16 %v533, %v532
      %v639 = vpack.c.b16 %v535, %v534
      %v640 = vpack.c.b16 %v537, %v536
      %v641 = vpack.c.b16 %v539, %v538
      %v642 = vpack.c.b16 %v541, %v540
      %v643 = vpack.c.b16 %v543, %v542
      %v644 = vpack.c.b16 %v545, %v544
      %v645 = vpack.c.b16 %v547, %v546
      %v646 = vpack.c.b16 %v549, %v548
      %v647 = vpack.c.b16 %v551, %v550
      %v648 = vpack.c.b16 %v553, %v552
      %v649 = vpack.c.b16 %v555, %v554
      %v650 = vpack.c.b16 %v557, %v556
      %v651 = vpack.c.b16 %v559, %v558
      %v652 = vpack.c.b16 %v561, %v560
      %v653 = vpack.c.b16 %v563, %v562
      %v654 = vpack.c.b16 %v565, %v564
      %v655 = vpack.c.b16 %v567, %v566
      %v656 = vpack.c.b16 %v569, %v568
      %v657 = vpack.c.b16 %v571, %v570
      %v658 = vpack.c.b16 %v573, %v572
      %v659 = vpack.c.b16 %v575, %v574
      %v660 = vpack.c.b16 %v577, %v576
      %v661 = vpack.c.b16 %v579, %v578
      %v662 = vpack.c.b16 %v581, %v580
      %v663 = vpack.c.b16 %v583, %v582
      %v664 = vpack.c.b16 %v585, %v584
      %v665 = vpack.c.b16 %v587, %v586
      %v666 = vpack.c.b16 %v589, %v588
      %v667 = vpack.c.b16 %v591, %v590
      %v668 = vpack.c.b16 %v593, %v592
      %v669 = vpack.c.b16 %v595, %v594
      %v670 = vpack.c.b16 %v597, %v596
      %v671 = vpack.c.b16 %v599, %v598
      %v672 = vpack.c.b16 %v601, %v600
      %v673 = vpack.c.b16 %v603, %v602
      %v674 = vpack.c.b16 %v605, %v604
      %v675 = vpack.c.b16 %v607, %v606
      %v676 = vpack.c.b16 %v609, %v608
      %v677 = vpack.c.b16 %v611, %v610
      %v678 = vpack.c.b16 %v613, %v612
      %v679 = vpack.c.b16 %v615, %v614
      %v689 = vunpack.c.l.b16 %v351
      %v690 = vunpack.c.l.b16 %v352
      %v691 = vunpack.c.l.b16 %v353
      %v692 = vunpack.c.l.b16 %v354
      %v693 = vunpack.c.l.b16 %v355
      %v694 = vunpack.c.l.b16 %v356
      %v695 = vunpack.c.l.b16 %v357
      %v696 = vunpack.c.l.b16 %v358
      %v697 = vunpack.c.l.b16 %v359
      %v698 = vpack.c.b16 %v690, %v689
      %v699 = vpack.c.b16 %v692, %v691
      %v700 = vpack.c.b16 %v694, %v693
      %v701 = vpack.c.b16 %v696, %v695
      %v702 = vpack.c.b16 %v697, %v697
      %vm707 = vcmask 588800
      %v709 = vsel %vm707, %v616, 0
      %v712 = vsel %vm707, %v617, 0
      %v715 = vsel %vm707, %v618, 0
      %v718 = vsel %vm707, %v619, 0
      %v721 = vsel %vm707, %v620, 0
      %v724 = vsel %vm707, %v621, 0
      %v727 = vsel %vm707, %v622, 0
      %v730 = vsel %vm707, %v623, 0
      %v733 = vsel %vm707, %v624, 0
      %v736 = vsel %vm707, %v625, 0
      %v739 = vsel %vm707, %v626, 0
      %v742 = vsel %vm707, %v627, 0
      %v745 = vsel %vm707, %v628, 0
      %v748 = vsel %vm707, %v629, 0
      %v751 = vsel %vm707, %v630, 0
      %v754 = vsel %vm707, %v631, 0
      %v757 = vsel %vm707, %v632, 0
      %v760 = vsel %vm707, %v633, 0
      %v763 = vsel %vm707, %v634, 0
      %v766 = vsel %vm707, %v635, 0
      %v769 = vsel %vm707, %v636, 0
      %v772 = vsel %vm707, %v637, 0
      %v775 = vsel %vm707, %v638, 0
      %v778 = vsel %vm707, %v639, 0
      %v781 = vsel %vm707, %v640, 0
      %v784 = vsel %vm707, %v641, 0
      %v787 = vsel %vm707, %v642, 0
      %v790 = vsel %vm707, %v643, 0
      %v793 = vsel %vm707, %v644, 0
      %v796 = vsel %vm707, %v645, 0
      %v799 = vsel %vm707, %v646, 0
      %v802 = vsel %vm707, %v647, 0
      %v805 = vsel %vm707, %v648, 0
      %v808 = vsel %vm707, %v649, 0
      %v811 = vsel %vm707, %v650, 0
      %v814 = vsel %vm707, %v651, 0
      %v817 = vsel %vm707, %v652, 0
      %v820 = vsel %vm707, %v653, 0
      %v823 = vsel %vm707, %v654, 0
      %v826 = vsel %vm707, %v655, 0
      %v829 = vsel %vm707, %v656, 0
      %v832 = vsel %vm707, %v657, 0
      %v835 = vsel %vm707, %v658, 0
      %v838 = vsel %vm707, %v659, 0
      %v841 = vsel %vm707, %v660, 0
      %v844 = vsel %vm707, %v661, 0
      %v847 = vsel %vm707, %v662, 0
      %v850 = vsel %vm707, %v663, 0
      %v853 = vsel %vm707, %v664, 0
      %v856 = vsel %vm707, %v665, 0
      %v859 = vsel %vm707, %v666, 0
      %v862 = vsel %vm707, %v667, 0
      %v865 = vsel %vm707, %v668, 0
      %v868 = vsel %vm707, %v669, 0
      %v871 = vsel %vm707, %v670, 0
      %v874 = vsel %vm707, %v671, 0
      %v877 = vsel %vm707, %v672, 0
      %v880 = vsel %vm707, %v673, 0
      %v883 = vsel %vm707, %v674, 0
      %v886 = vsel %vm707, %v675, 0
      %v889 = vsel %vm707, %v676, 0
      %v892 = vsel %vm707, %v677, 0
      %v895 = vsel %vm707, %v678, 0
      %v898 = vsel %vm707, %v679, 0
      %vm900 = vcmask 1043456
      %v902 = vsel %vm900, %v702, 0
      %904 = vmatprep.subr.bf16.mxu0 0
      %905 = vmatpush1.bf16.msra.mxu0 0
      %906 = vmatprep.subr.bf16.mxu0 0
      %907 = vmatpush1.bf16.msra.mxu0 0
      %908 = vmatprep.subr.bf16.mxu0 0
      %909 = vmatpush1.bf16.msra.mxu0 0
      %910 = vmatprep.subr.bf16.mxu0 0
      %911 = vmatpush1.bf16.msra.mxu0 %v902
      %912 = vmatprep.subr.bf16.mxu0 0
      %913 = vmatpush1.bf16.msra.mxu0 %v701
      %914 = vmatprep.subr.bf16.mxu0 0
      %915 = vmatpush1.bf16.msra.mxu0 %v700
      %916 = vmatprep.subr.bf16.mxu0 0
      %917 = vmatpush1.bf16.msra.mxu0 %v699
      %918 = vmatprep.subr.bf16.mxu0 0
      %919 = vmatpush1.bf16.msra.mxu0 %v698
      %920 = vmatprep.subr.bf16.mxu0 0
      %921 = vmatpush2.bf16.msra.mxu0 0
      %922 = vmatprep.subr.bf16.mxu0 0
      %923 = vmatpush2.bf16.msra.mxu0 0
      %924 = vmatprep.subr.bf16.mxu0 0
      %925 = vmatpush2.bf16.msra.mxu0 0
      %926 = vmatprep.subr.bf16.mxu0 0
      %927 = vmatpush2.bf16.msra.mxu0 0
      %928 = vmatprep.subr.bf16.mxu0 0
      %929 = vmatpush2.bf16.msra.mxu0 0
      %930 = vmatprep.subr.bf16.mxu0 0
      %931 = vmatpush2.bf16.msra.mxu0 0
      %932 = vmatprep.subr.bf16.mxu0 0
      %933 = vmatpush2.bf16.msra.mxu0 0
      %934 = vmatprep.subr.bf16.mxu0 0
      %935 = vmatpush2.bf16.msra.mxu0 0
      %936 = vmatprep.mubr.bf16.mxu0 0
      %937 = vmatmul.mubr.bf16.gmra.mxu0 %v709
      %v938 = vpop.f32.mrf.mxu0
      %v939 = vadd.f32 0.0, %v938
      %v940 = vpop.f32.mrf.mxu0
      %v941 = vpop.f32.mrf.mxu0
      %v942 = vadd.f32 0.0, %v941
      %v943 = vpop.f32.mrf.mxu0
      %944 = vmatprep.mubr.bf16.mxu0 0
      %945 = vmatmul.mubr.bf16.gmra.mxu0 %v712
      %v946 = vpop.f32.mrf.mxu0
      %v947 = vadd.f32 0.0, %v946
      %v948 = vpop.f32.mrf.mxu0
      %v949 = vpop.f32.mrf.mxu0
      %v950 = vadd.f32 0.0, %v949
      %v951 = vpop.f32.mrf.mxu0
      %952 = vmatprep.mubr.bf16.mxu0 0
      %953 = vmatmul.mubr.bf16.gmra.mxu0 %v715
      %v954 = vpop.f32.mrf.mxu0
      %v955 = vadd.f32 0.0, %v954
      %v956 = vpop.f32.mrf.mxu0
      %v957 = vpop.f32.mrf.mxu0
      %v958 = vadd.f32 0.0, %v957
      %v959 = vpop.f32.mrf.mxu0
      %960 = vmatprep.mubr.bf16.mxu0 0
      %961 = vmatmul.mubr.bf16.gmra.mxu0 %v718
      %v962 = vpop.f32.mrf.mxu0
      %v963 = vadd.f32 0.0, %v962
      %v964 = vpop.f32.mrf.mxu0
      %v965 = vpop.f32.mrf.mxu0
      %v966 = vadd.f32 0.0, %v965
      %v967 = vpop.f32.mrf.mxu0
      %968 = vmatprep.mubr.bf16.mxu0 0
      %969 = vmatmul.mubr.bf16.gmra.mxu0 %v721
      %v970 = vpop.f32.mrf.mxu0
      %v971 = vadd.f32 0.0, %v970
      %v972 = vpop.f32.mrf.mxu0
      %v973 = vpop.f32.mrf.mxu0
      %v974 = vadd.f32 0.0, %v973
      %v975 = vpop.f32.mrf.mxu0
      %976 = vmatprep.mubr.bf16.mxu0 0
      %977 = vmatmul.mubr.bf16.gmra.mxu0 %v724
      %v978 = vpop.f32.mrf.mxu0
      %v979 = vadd.f32 0.0, %v978
      %v980 = vpop.f32.mrf.mxu0
      %v981 = vpop.f32.mrf.mxu0
      %v982 = vadd.f32 0.0, %v981
      %v983 = vpop.f32.mrf.mxu0
      %984 = vmatprep.mubr.bf16.mxu0 0
      %985 = vmatmul.mubr.bf16.gmra.mxu0 %v727
      %v986 = vpop.f32.mrf.mxu0
      %v987 = vadd.f32 0.0, %v986
      %v988 = vpop.f32.mrf.mxu0
      %v989 = vpop.f32.mrf.mxu0
      %v990 = vadd.f32 0.0, %v989
      %v991 = vpop.f32.mrf.mxu0
      %992 = vmatprep.mubr.bf16.mxu0 0
      %993 = vmatmul.mubr.bf16.gmra.mxu0 %v730
      %v994 = vpop.f32.mrf.mxu0
      %v995 = vadd.f32 0.0, %v994
      %v996 = vpop.f32.mrf.mxu0
      %v997 = vpop.f32.mrf.mxu0
      %v998 = vadd.f32 0.0, %v997
      %v999 = vpop.f32.mrf.mxu0
      %1000 = vmatprep.mubr.bf16.mxu0 0
      %1001 = vmatmul.mubr.bf16.gmra.mxu0 %v733
      %v1002 = vpop.f32.mrf.mxu0
      %v1003 = vadd.f32 0.0, %v1002
      %v1004 = vpop.f32.mrf.mxu0
      %v1005 = vpop.f32.mrf.mxu0
      %v1006 = vadd.f32 0.0, %v1005
      %v1007 = vpop.f32.mrf.mxu0
      %1008 = vmatprep.mubr.bf16.mxu0 0
      %1009 = vmatmul.mubr.bf16.gmra.mxu0 %v736
      %v1010 = vpop.f32.mrf.mxu0
      %v1011 = vadd.f32 0.0, %v1010
      %v1012 = vpop.f32.mrf.mxu0
      %v1013 = vpop.f32.mrf.mxu0
      %v1014 = vadd.f32 0.0, %v1013
      %v1015 = vpop.f32.mrf.mxu0
      %1016 = vmatprep.mubr.bf16.mxu0 0
      %1017 = vmatmul.mubr.bf16.gmra.mxu0 %v739
      %v1018 = vpop.f32.mrf.mxu0
      %v1019 = vadd.f32 0.0, %v1018
      %v1020 = vpop.f32.mrf.mxu0
      %v1021 = vpop.f32.mrf.mxu0
      %v1022 = vadd.f32 0.0, %v1021
      %v1023 = vpop.f32.mrf.mxu0
      %1024 = vmatprep.mubr.bf16.mxu0 0
      %1025 = vmatmul.mubr.bf16.gmra.mxu0 %v742
      %v1026 = vpop.f32.mrf.mxu0
      %v1027 = vadd.f32 0.0, %v1026
      %v1028 = vpop.f32.mrf.mxu0
      %v1029 = vpop.f32.mrf.mxu0
      %v1030 = vadd.f32 0.0, %v1029
      %v1031 = vpop.f32.mrf.mxu0
      %1032 = vmatprep.mubr.bf16.mxu0 0
      %1033 = vmatmul.mubr.bf16.gmra.mxu0 %v745
      %v1034 = vpop.f32.mrf.mxu0
      %v1035 = vadd.f32 0.0, %v1034
      %v1036 = vpop.f32.mrf.mxu0
      %v1037 = vpop.f32.mrf.mxu0
      %v1038 = vadd.f32 0.0, %v1037
      %v1039 = vpop.f32.mrf.mxu0
      %1040 = vmatprep.mubr.bf16.mxu0 0
      %1041 = vmatmul.mubr.bf16.gmra.mxu0 %v748
      %v1042 = vpop.f32.mrf.mxu0
      %v1043 = vadd.f32 0.0, %v1042
      %v1044 = vpop.f32.mrf.mxu0
      %v1045 = vpop.f32.mrf.mxu0
      %v1046 = vadd.f32 0.0, %v1045
      %v1047 = vpop.f32.mrf.mxu0
      %1048 = vmatprep.mubr.bf16.mxu0 0
      %1049 = vmatmul.mubr.bf16.gmra.mxu0 %v751
      %v1050 = vpop.f32.mrf.mxu0
      %v1051 = vadd.f32 0.0, %v1050
      %v1052 = vpop.f32.mrf.mxu0
      %v1053 = vpop.f32.mrf.mxu0
      %v1054 = vadd.f32 0.0, %v1053
      %v1055 = vpop.f32.mrf.mxu0
      %1056 = vmatprep.mubr.bf16.mxu0 0
      %1057 = vmatmul.mubr.bf16.gmra.mxu0 %v754
      %v1058 = vpop.f32.mrf.mxu0
      %v1059 = vadd.f32 0.0, %v1058
      %v1060 = vpop.f32.mrf.mxu0
      %v1061 = vpop.f32.mrf.mxu0
      %v1062 = vadd.f32 0.0, %v1061
      %v1063 = vpop.f32.mrf.mxu0
      %1064 = vmatprep.mubr.bf16.mxu0 0
      %1065 = vmatmul.mubr.bf16.gmra.mxu0 %v757
      %v1066 = vpop.f32.mrf.mxu0
      %v1067 = vadd.f32 0.0, %v1066
      %v1068 = vpop.f32.mrf.mxu0
      %v1069 = vpop.f32.mrf.mxu0
      %v1070 = vadd.f32 0.0, %v1069
      %v1071 = vpop.f32.mrf.mxu0
      %1072 = vmatprep.mubr.bf16.mxu0 0
      %1073 = vmatmul.mubr.bf16.gmra.mxu0 %v760
      %v1074 = vpop.f32.mrf.mxu0
      %v1075 = vadd.f32 0.0, %v1074
      %v1076 = vpop.f32.mrf.mxu0
      %v1077 = vpop.f32.mrf.mxu0
      %v1078 = vadd.f32 0.0, %v1077
      %v1079 = vpop.f32.mrf.mxu0
      %1080 = vmatprep.mubr.bf16.mxu0 0
      %1081 = vmatmul.mubr.bf16.gmra.mxu0 %v763
      %v1082 = vpop.f32.mrf.mxu0
      %v1083 = vadd.f32 0.0, %v1082
      %v1084 = vpop.f32.mrf.mxu0
      %v1085 = vpop.f32.mrf.mxu0
      %v1086 = vadd.f32 0.0, %v1085
      %v1087 = vpop.f32.mrf.mxu0
      %1088 = vmatprep.mubr.bf16.mxu0 0
      %1089 = vmatmul.mubr.bf16.gmra.mxu0 %v766
      %v1090 = vpop.f32.mrf.mxu0
      %v1091 = vadd.f32 0.0, %v1090
      %v1092 = vpop.f32.mrf.mxu0
      %v1093 = vpop.f32.mrf.mxu0
      %v1094 = vadd.f32 0.0, %v1093
      %v1095 = vpop.f32.mrf.mxu0
      %1096 = vmatprep.mubr.bf16.mxu0 0
      %1097 = vmatmul.mubr.bf16.gmra.mxu0 %v769
      %v1098 = vpop.f32.mrf.mxu0
      %v1099 = vadd.f32 0.0, %v1098
      %v1100 = vpop.f32.mrf.mxu0
      %v1101 = vpop.f32.mrf.mxu0
      %v1102 = vadd.f32 0.0, %v1101
      %v1103 = vpop.f32.mrf.mxu0
      %1104 = vmatprep.mubr.bf16.mxu0 0
      %1105 = vmatmul.mubr.bf16.gmra.mxu0 %v772
      %v1106 = vpop.f32.mrf.mxu0
      %v1107 = vadd.f32 0.0, %v1106
      %v1108 = vpop.f32.mrf.mxu0
      %v1109 = vpop.f32.mrf.mxu0
      %v1110 = vadd.f32 0.0, %v1109
      %v1111 = vpop.f32.mrf.mxu0
      %1112 = vmatprep.mubr.bf16.mxu0 0
      %1113 = vmatmul.mubr.bf16.gmra.mxu0 %v775
      %v1114 = vpop.f32.mrf.mxu0
      %v1115 = vadd.f32 0.0, %v1114
      %v1116 = vpop.f32.mrf.mxu0
      %v1117 = vpop.f32.mrf.mxu0
      %v1118 = vadd.f32 0.0, %v1117
      %v1119 = vpop.f32.mrf.mxu0
      %1120 = vmatprep.mubr.bf16.mxu0 0
      %1121 = vmatmul.mubr.bf16.gmra.mxu0 %v778
      %v1122 = vpop.f32.mrf.mxu0
      %v1123 = vadd.f32 0.0, %v1122
      %v1124 = vpop.f32.mrf.mxu0
      %v1125 = vpop.f32.mrf.mxu0
      %v1126 = vadd.f32 0.0, %v1125
      %v1127 = vpop.f32.mrf.mxu0
      %1128 = vmatprep.mubr.bf16.mxu0 0
      %1129 = vmatmul.mubr.bf16.gmra.mxu0 %v781
      %v1130 = vpop.f32.mrf.mxu0
      %v1131 = vadd.f32 0.0, %v1130
      %v1132 = vpop.f32.mrf.mxu0
      %v1133 = vpop.f32.mrf.mxu0
      %v1134 = vadd.f32 0.0, %v1133
      %v1135 = vpop.f32.mrf.mxu0
      %1136 = vmatprep.mubr.bf16.mxu0 0
      %1137 = vmatmul.mubr.bf16.gmra.mxu0 %v784
      %v1138 = vpop.f32.mrf.mxu0
      %v1139 = vadd.f32 0.0, %v1138
      %v1140 = vpop.f32.mrf.mxu0
      %v1141 = vpop.f32.mrf.mxu0
      %v1142 = vadd.f32 0.0, %v1141
      %v1143 = vpop.f32.mrf.mxu0
      %1144 = vmatprep.mubr.bf16.mxu0 0
      %1145 = vmatmul.mubr.bf16.gmra.mxu0 %v787
      %v1146 = vpop.f32.mrf.mxu0
      %v1147 = vadd.f32 0.0, %v1146
      %v1148 = vpop.f32.mrf.mxu0
      %v1149 = vpop.f32.mrf.mxu0
      %v1150 = vadd.f32 0.0, %v1149
      %v1151 = vpop.f32.mrf.mxu0
      %1152 = vmatprep.mubr.bf16.mxu0 0
      %1153 = vmatmul.mubr.bf16.gmra.mxu0 %v790
      %v1154 = vpop.f32.mrf.mxu0
      %v1155 = vadd.f32 0.0, %v1154
      %v1156 = vpop.f32.mrf.mxu0
      %v1157 = vpop.f32.mrf.mxu0
      %v1158 = vadd.f32 0.0, %v1157
      %v1159 = vpop.f32.mrf.mxu0
      %1160 = vmatprep.mubr.bf16.mxu0 0
      %1161 = vmatmul.mubr.bf16.gmra.mxu0 %v793
      %v1162 = vpop.f32.mrf.mxu0
      %v1163 = vadd.f32 0.0, %v1162
      %v1164 = vpop.f32.mrf.mxu0
      %v1165 = vpop.f32.mrf.mxu0
      %v1166 = vadd.f32 0.0, %v1165
      %v1167 = vpop.f32.mrf.mxu0
      %1168 = vmatprep.mubr.bf16.mxu0 0
      %1169 = vmatmul.mubr.bf16.gmra.mxu0 %v796
      %v1170 = vpop.f32.mrf.mxu0
      %v1171 = vadd.f32 0.0, %v1170
      %v1172 = vpop.f32.mrf.mxu0
      %v1173 = vpop.f32.mrf.mxu0
      %v1174 = vadd.f32 0.0, %v1173
      %v1175 = vpop.f32.mrf.mxu0
      %1176 = vmatprep.mubr.bf16.mxu0 0
      %1177 = vmatmul.mubr.bf16.gmra.mxu0 %v799
      %v1178 = vpop.f32.mrf.mxu0
      %v1179 = vadd.f32 0.0, %v1178
      %v1180 = vpop.f32.mrf.mxu0
      %v1181 = vpop.f32.mrf.mxu0
      %v1182 = vadd.f32 0.0, %v1181
      %v1183 = vpop.f32.mrf.mxu0
      %1184 = vmatprep.mubr.bf16.mxu0 0
      %1185 = vmatmul.mubr.bf16.gmra.mxu0 %v802
      %v1186 = vpop.f32.mrf.mxu0
      %v1187 = vadd.f32 0.0, %v1186
      %v1188 = vpop.f32.mrf.mxu0
      %v1189 = vpop.f32.mrf.mxu0
      %v1190 = vadd.f32 0.0, %v1189
      %v1191 = vpop.f32.mrf.mxu0
      %1192 = vmatprep.mubr.bf16.mxu0 0
      %1193 = vmatmul.mubr.bf16.gmra.mxu0 %v805
      %v1194 = vpop.f32.mrf.mxu0
      %v1195 = vadd.f32 0.0, %v1194
      %v1196 = vpop.f32.mrf.mxu0
      %v1197 = vpop.f32.mrf.mxu0
      %v1198 = vadd.f32 0.0, %v1197
      %v1199 = vpop.f32.mrf.mxu0
      %1200 = vmatprep.mubr.bf16.mxu0 0
      %1201 = vmatmul.mubr.bf16.gmra.mxu0 %v808
      %v1202 = vpop.f32.mrf.mxu0
      %v1203 = vadd.f32 0.0, %v1202
      %v1204 = vpop.f32.mrf.mxu0
      %v1205 = vpop.f32.mrf.mxu0
      %v1206 = vadd.f32 0.0, %v1205
      %v1207 = vpop.f32.mrf.mxu0
      %1208 = vmatprep.mubr.bf16.mxu0 0
      %1209 = vmatmul.mubr.bf16.gmra.mxu0 %v811
      %v1210 = vpop.f32.mrf.mxu0
      %v1211 = vadd.f32 0.0, %v1210
      %v1212 = vpop.f32.mrf.mxu0
      %v1213 = vpop.f32.mrf.mxu0
      %v1214 = vadd.f32 0.0, %v1213
      %v1215 = vpop.f32.mrf.mxu0
      %1216 = vmatprep.mubr.bf16.mxu0 0
      %1217 = vmatmul.mubr.bf16.gmra.mxu0 %v814
      %v1218 = vpop.f32.mrf.mxu0
      %v1219 = vadd.f32 0.0, %v1218
      %v1220 = vpop.f32.mrf.mxu0
      %v1221 = vpop.f32.mrf.mxu0
      %v1222 = vadd.f32 0.0, %v1221
      %v1223 = vpop.f32.mrf.mxu0
      %1224 = vmatprep.mubr.bf16.mxu0 0
      %1225 = vmatmul.mubr.bf16.gmra.mxu0 %v817
      %v1226 = vpop.f32.mrf.mxu0
      %v1227 = vadd.f32 0.0, %v1226
      %v1228 = vpop.f32.mrf.mxu0
      %v1229 = vpop.f32.mrf.mxu0
      %v1230 = vadd.f32 0.0, %v1229
      %v1231 = vpop.f32.mrf.mxu0
      %1232 = vmatprep.mubr.bf16.mxu0 0
      %1233 = vmatmul.mubr.bf16.gmra.mxu0 %v820
      %v1234 = vpop.f32.mrf.mxu0
      %v1235 = vadd.f32 0.0, %v1234
      %v1236 = vpop.f32.mrf.mxu0
      %v1237 = vpop.f32.mrf.mxu0
      %v1238 = vadd.f32 0.0, %v1237
      %v1239 = vpop.f32.mrf.mxu0
      %1240 = vmatprep.mubr.bf16.mxu0 0
      %1241 = vmatmul.mubr.bf16.gmra.mxu0 %v823
      %v1242 = vpop.f32.mrf.mxu0
      %v1243 = vadd.f32 0.0, %v1242
      %v1244 = vpop.f32.mrf.mxu0
      %v1245 = vpop.f32.mrf.mxu0
      %v1246 = vadd.f32 0.0, %v1245
      %v1247 = vpop.f32.mrf.mxu0
      %1248 = vmatprep.mubr.bf16.mxu0 0
      %1249 = vmatmul.mubr.bf16.gmra.mxu0 %v826
      %v1250 = vpop.f32.mrf.mxu0
      %v1251 = vadd.f32 0.0, %v1250
      %v1252 = vpop.f32.mrf.mxu0
      %v1253 = vpop.f32.mrf.mxu0
      %v1254 = vadd.f32 0.0, %v1253
      %v1255 = vpop.f32.mrf.mxu0
      %1256 = vmatprep.mubr.bf16.mxu0 0
      %1257 = vmatmul.mubr.bf16.gmra.mxu0 %v829
      %v1258 = vpop.f32.mrf.mxu0
      %v1259 = vadd.f32 0.0, %v1258
      %v1260 = vpop.f32.mrf.mxu0
      %v1261 = vpop.f32.mrf.mxu0
      %v1262 = vadd.f32 0.0, %v1261
      %v1263 = vpop.f32.mrf.mxu0
      %1264 = vmatprep.mubr.bf16.mxu0 0
      %1265 = vmatmul.mubr.bf16.gmra.mxu0 %v832
      %v1266 = vpop.f32.mrf.mxu0
      %v1267 = vadd.f32 0.0, %v1266
      %v1268 = vpop.f32.mrf.mxu0
      %v1269 = vpop.f32.mrf.mxu0
      %v1270 = vadd.f32 0.0, %v1269
      %v1271 = vpop.f32.mrf.mxu0
      %1272 = vmatprep.mubr.bf16.mxu0 0
      %1273 = vmatmul.mubr.bf16.gmra.mxu0 %v835
      %v1274 = vpop.f32.mrf.mxu0
      %v1275 = vadd.f32 0.0, %v1274
      %v1276 = vpop.f32.mrf.mxu0
      %v1277 = vpop.f32.mrf.mxu0
      %v1278 = vadd.f32 0.0, %v1277
      %v1279 = vpop.f32.mrf.mxu0
      %1280 = vmatprep.mubr.bf16.mxu0 0
      %1281 = vmatmul.mubr.bf16.gmra.mxu0 %v838
      %v1282 = vpop.f32.mrf.mxu0
      %v1283 = vadd.f32 0.0, %v1282
      %v1284 = vpop.f32.mrf.mxu0
      %v1285 = vpop.f32.mrf.mxu0
      %v1286 = vadd.f32 0.0, %v1285
      %v1287 = vpop.f32.mrf.mxu0
      %1288 = vmatprep.mubr.bf16.mxu0 0
      %1289 = vmatmul.mubr.bf16.gmra.mxu0 %v841
      %v1290 = vpop.f32.mrf.mxu0
      %v1291 = vadd.f32 0.0, %v1290
      %v1292 = vpop.f32.mrf.mxu0
      %v1293 = vpop.f32.mrf.mxu0
      %v1294 = vadd.f32 0.0, %v1293
      %v1295 = vpop.f32.mrf.mxu0
      %1296 = vmatprep.mubr.bf16.mxu0 0
      %1297 = vmatmul.mubr.bf16.gmra.mxu0 %v844
      %v1298 = vpop.f32.mrf.mxu0
      %v1299 = vadd.f32 0.0, %v1298
      %v1300 = vpop.f32.mrf.mxu0
      %v1301 = vpop.f32.mrf.mxu0
      %v1302 = vadd.f32 0.0, %v1301
      %v1303 = vpop.f32.mrf.mxu0
      %1304 = vmatprep.mubr.bf16.mxu0 0
      %1305 = vmatmul.mubr.bf16.gmra.mxu0 %v847
      %v1306 = vpop.f32.mrf.mxu0
      %v1307 = vadd.f32 0.0, %v1306
      %v1308 = vpop.f32.mrf.mxu0
      %v1309 = vpop.f32.mrf.mxu0
      %v1310 = vadd.f32 0.0, %v1309
      %v1311 = vpop.f32.mrf.mxu0
      %1312 = vmatprep.mubr.bf16.mxu0 0
      %1313 = vmatmul.mubr.bf16.gmra.mxu0 %v850
      %v1314 = vpop.f32.mrf.mxu0
      %v1315 = vadd.f32 0.0, %v1314
      %v1316 = vpop.f32.mrf.mxu0
      %v1317 = vpop.f32.mrf.mxu0
      %v1318 = vadd.f32 0.0, %v1317
      %v1319 = vpop.f32.mrf.mxu0
      %1320 = vmatprep.mubr.bf16.mxu0 0
      %1321 = vmatmul.mubr.bf16.gmra.mxu0 %v853
      %v1322 = vpop.f32.mrf.mxu0
      %v1323 = vadd.f32 0.0, %v1322
      %v1324 = vpop.f32.mrf.mxu0
      %v1325 = vpop.f32.mrf.mxu0
      %v1326 = vadd.f32 0.0, %v1325
      %v1327 = vpop.f32.mrf.mxu0
      %1328 = vmatprep.mubr.bf16.mxu0 0
      %1329 = vmatmul.mubr.bf16.gmra.mxu0 %v856
      %v1330 = vpop.f32.mrf.mxu0
      %v1331 = vadd.f32 0.0, %v1330
      %v1332 = vpop.f32.mrf.mxu0
      %v1333 = vpop.f32.mrf.mxu0
      %v1334 = vadd.f32 0.0, %v1333
      %v1335 = vpop.f32.mrf.mxu0
      %1336 = vmatprep.mubr.bf16.mxu0 0
      %1337 = vmatmul.mubr.bf16.gmra.mxu0 %v859
      %v1338 = vpop.f32.mrf.mxu0
      %v1339 = vadd.f32 0.0, %v1338
      %v1340 = vpop.f32.mrf.mxu0
      %v1341 = vpop.f32.mrf.mxu0
      %v1342 = vadd.f32 0.0, %v1341
      %v1343 = vpop.f32.mrf.mxu0
      %1344 = vmatprep.mubr.bf16.mxu0 0
      %1345 = vmatmul.mubr.bf16.gmra.mxu0 %v862
      %v1346 = vpop.f32.mrf.mxu0
      %v1347 = vadd.f32 0.0, %v1346
      %v1348 = vpop.f32.mrf.mxu0
      %v1349 = vpop.f32.mrf.mxu0
      %v1350 = vadd.f32 0.0, %v1349
      %v1351 = vpop.f32.mrf.mxu0
      %1352 = vmatprep.mubr.bf16.mxu0 0
      %1353 = vmatmul.mubr.bf16.gmra.mxu0 %v865
      %v1354 = vpop.f32.mrf.mxu0
      %v1355 = vadd.f32 0.0, %v1354
      %v1356 = vpop.f32.mrf.mxu0
      %v1357 = vpop.f32.mrf.mxu0
      %v1358 = vadd.f32 0.0, %v1357
      %v1359 = vpop.f32.mrf.mxu0
      %1360 = vmatprep.mubr.bf16.mxu0 0
      %1361 = vmatmul.mubr.bf16.gmra.mxu0 %v868
      %v1362 = vpop.f32.mrf.mxu0
      %v1363 = vadd.f32 0.0, %v1362
      %v1364 = vpop.f32.mrf.mxu0
      %v1365 = vpop.f32.mrf.mxu0
      %v1366 = vadd.f32 0.0, %v1365
      %v1367 = vpop.f32.mrf.mxu0
      %1368 = vmatprep.mubr.bf16.mxu0 0
      %1369 = vmatmul.mubr.bf16.gmra.mxu0 %v871
      %v1370 = vpop.f32.mrf.mxu0
      %v1371 = vadd.f32 0.0, %v1370
      %v1372 = vpop.f32.mrf.mxu0
      %v1373 = vpop.f32.mrf.mxu0
      %v1374 = vadd.f32 0.0, %v1373
      %v1375 = vpop.f32.mrf.mxu0
      %1376 = vmatprep.mubr.bf16.mxu0 0
      %1377 = vmatmul.mubr.bf16.gmra.mxu0 %v874
      %v1378 = vpop.f32.mrf.mxu0
      %v1379 = vadd.f32 0.0, %v1378
      %v1380 = vpop.f32.mrf.mxu0
      %v1381 = vpop.f32.mrf.mxu0
      %v1382 = vadd.f32 0.0, %v1381
      %v1383 = vpop.f32.mrf.mxu0
      %1384 = vmatprep.mubr.bf16.mxu0 0
      %1385 = vmatmul.mubr.bf16.gmra.mxu0 %v877
      %v1386 = vpop.f32.mrf.mxu0
      %v1387 = vadd.f32 0.0, %v1386
      %v1388 = vpop.f32.mrf.mxu0
      %v1389 = vpop.f32.mrf.mxu0
      %v1390 = vadd.f32 0.0, %v1389
      %v1391 = vpop.f32.mrf.mxu0
      %1392 = vmatprep.mubr.bf16.mxu0 0
      %1393 = vmatmul.mubr.bf16.gmra.mxu0 %v880
      %v1394 = vpop.f32.mrf.mxu0
      %v1395 = vadd.f32 0.0, %v1394
      %v1396 = vpop.f32.mrf.mxu0
      %v1397 = vpop.f32.mrf.mxu0
      %v1398 = vadd.f32 0.0, %v1397
      %v1399 = vpop.f32.mrf.mxu0
      %1400 = vmatprep.mubr.bf16.mxu0 0
      %1401 = vmatmul.mubr.bf16.gmra.mxu0 %v883
      %v1402 = vpop.f32.mrf.mxu0
      %v1403 = vadd.f32 0.0, %v1402
      %v1404 = vpop.f32.mrf.mxu0
      %v1405 = vpop.f32.mrf.mxu0
      %v1406 = vadd.f32 0.0, %v1405
      %v1407 = vpop.f32.mrf.mxu0
      %1408 = vmatprep.mubr.bf16.mxu0 0
      %1409 = vmatmul.mubr.bf16.gmra.mxu0 %v886
      %v1410 = vpop.f32.mrf.mxu0
      %v1411 = vadd.f32 0.0, %v1410
      %v1412 = vpop.f32.mrf.mxu0
      %v1413 = vpop.f32.mrf.mxu0
      %v1414 = vadd.f32 0.0, %v1413
      %v1415 = vpop.f32.mrf.mxu0
      %1416 = vmatprep.mubr.bf16.mxu0 0
      %1417 = vmatmul.mubr.bf16.gmra.mxu0 %v889
      %v1418 = vpop.f32.mrf.mxu0
      %v1419 = vadd.f32 0.0, %v1418
      %v1420 = vpop.f32.mrf.mxu0
      %v1421 = vpop.f32.mrf.mxu0
      %v1422 = vadd.f32 0.0, %v1421
      %v1423 = vpop.f32.mrf.mxu0
      %1424 = vmatprep.mubr.bf16.mxu0 0
      %1425 = vmatmul.mubr.bf16.gmra.mxu0 %v892
      %v1426 = vpop.f32.mrf.mxu0
      %v1427 = vadd.f32 0.0, %v1426
      %v1428 = vpop.f32.mrf.mxu0
      %v1429 = vpop.f32.mrf.mxu0
      %v1430 = vadd.f32 0.0, %v1429
      %v1431 = vpop.f32.mrf.mxu0
      %1432 = vmatprep.mubr.bf16.mxu0 0
      %1433 = vmatmul.mubr.bf16.gmra.mxu0 %v895
      %v1434 = vpop.f32.mrf.mxu0
      %v1435 = vadd.f32 0.0, %v1434
      %v1436 = vpop.f32.mrf.mxu0
      %v1437 = vpop.f32.mrf.mxu0
      %v1438 = vadd.f32 0.0, %v1437
      %v1439 = vpop.f32.mrf.mxu0
      %1440 = vmatprep.mubr.bf16.mxu0 0
      %1441 = vmatmul.mubr.bf16.gmra.mxu0 %v898
      %v1442 = vpop.f32.mrf.mxu0
      %v1443 = vadd.f32 0.0, %v1442
      %v1444 = vpop.f32.mrf.mxu0
      %v1445 = vpop.f32.mrf.mxu0
      %v1446 = vadd.f32 0.0, %v1445
      %v1447 = vpop.f32.mrf.mxu0
      %1448 = vdwg.mxu0
      %v1449 = vpack.c.bf16 %v942, %v939
      %v1450 = vpack.c.bf16 %v950, %v947
      %v1451 = vpack.c.bf16 %v958, %v955
      %v1452 = vpack.c.bf16 %v966, %v963
      %v1453 = vpack.c.bf16 %v974, %v971
      %v1454 = vpack.c.bf16 %v982, %v979
      %v1455 = vpack.c.bf16 %v990, %v987
      %v1456 = vpack.c.bf16 %v998, %v995
      %v1457 = vpack.c.bf16 %v1006, %v1003
      %v1458 = vpack.c.bf16 %v1014, %v1011
      %v1459 = vpack.c.bf16 %v1022, %v1019
      %v1460 = vpack.c.bf16 %v1030, %v1027
      %v1461 = vpack.c.bf16 %v1038, %v1035
      %v1462 = vpack.c.bf16 %v1046, %v1043
      %v1463 = vpack.c.bf16 %v1054, %v1051
      %v1464 = vpack.c.bf16 %v1062, %v1059
      %v1465 = vpack.c.bf16 %v1070, %v1067
      %v1466 = vpack.c.bf16 %v1078, %v1075
      %v1467 = vpack.c.bf16 %v1086, %v1083
      %v1468 = vpack.c.bf16 %v1094, %v1091
      %v1469 = vpack.c.bf16 %v1102, %v1099
      %v1470 = vpack.c.bf16 %v1110, %v1107
      %v1471 = vpack.c.bf16 %v1118, %v1115
      %v1472 = vpack.c.bf16 %v1126, %v1123
      %v1473 = vpack.c.bf16 %v1134, %v1131
      %v1474 = vpack.c.bf16 %v1142, %v1139
      %v1475 = vpack.c.bf16 %v1150, %v1147
      %v1476 = vpack.c.bf16 %v1158, %v1155
      %v1477 = vpack.c.bf16 %v1166, %v1163
      %v1478 = vpack.c.bf16 %v1174, %v1171
      %v1479 = vpack.c.bf16 %v1182, %v1179
      %v1480 = vpack.c.bf16 %v1190, %v1187
      %v1481 = vpack.c.bf16 %v1198, %v1195
      %v1482 = vpack.c.bf16 %v1206, %v1203
      %v1483 = vpack.c.bf16 %v1214, %v1211
      %v1484 = vpack.c.bf16 %v1222, %v1219
      %v1485 = vpack.c.bf16 %v1230, %v1227
      %v1486 = vpack.c.bf16 %v1238, %v1235
      %v1487 = vpack.c.bf16 %v1246, %v1243
      %v1488 = vpack.c.bf16 %v1254, %v1251
      %v1489 = vpack.c.bf16 %v1262, %v1259
      %v1490 = vpack.c.bf16 %v1270, %v1267
      %v1491 = vpack.c.bf16 %v1278, %v1275
      %v1492 = vpack.c.bf16 %v1286, %v1283
      %v1493 = vpack.c.bf16 %v1294, %v1291
      %v1494 = vpack.c.bf16 %v1302, %v1299
      %v1495 = vpack.c.bf16 %v1310, %v1307
      %v1496 = vpack.c.bf16 %v1318, %v1315
      %v1497 = vpack.c.bf16 %v1326, %v1323
      %v1498 = vpack.c.bf16 %v1334, %v1331
      %v1499 = vpack.c.bf16 %v1342, %v1339
      %v1500 = vpack.c.bf16 %v1350, %v1347
      %v1501 = vpack.c.bf16 %v1358, %v1355
      %v1502 = vpack.c.bf16 %v1366, %v1363
      %v1503 = vpack.c.bf16 %v1374, %v1371
      %v1504 = vpack.c.bf16 %v1382, %v1379
      %v1505 = vpack.c.bf16 %v1390, %v1387
      %v1506 = vpack.c.bf16 %v1398, %v1395
      %v1507 = vpack.c.bf16 %v1406, %v1403
      %v1508 = vpack.c.bf16 %v1414, %v1411
      %v1509 = vpack.c.bf16 %v1422, %v1419
      %v1510 = vpack.c.bf16 %v1430, %v1427
      %v1511 = vpack.c.bf16 %v1438, %v1435
      %v1512 = vpack.c.bf16 %v1446, %v1443
      %v1577 = vunpack.c.l.b16 %v1449
      %v1578 = vunpack.c.h.b16 %v1449
      %v1579 = vunpack.c.l.b16 %v1450
      %v1580 = vunpack.c.h.b16 %v1450
      %v1581 = vunpack.c.l.b16 %v1451
      %v1582 = vunpack.c.h.b16 %v1451
      %v1583 = vunpack.c.l.b16 %v1452
      %v1584 = vunpack.c.h.b16 %v1452
      %v1585 = vunpack.c.l.b16 %v1453
      %v1586 = vunpack.c.h.b16 %v1453
      %v1587 = vunpack.c.l.b16 %v1454
      %v1588 = vunpack.c.h.b16 %v1454
      %v1589 = vunpack.c.l.b16 %v1455
      %v1590 = vunpack.c.h.b16 %v1455
      %v1591 = vunpack.c.l.b16 %v1456
      %v1592 = vunpack.c.h.b16 %v1456
      %v1593 = vunpack.c.l.b16 %v1457
      %v1594 = vunpack.c.h.b16 %v1457
      %v1595 = vunpack.c.l.b16 %v1458
      %v1596 = vunpack.c.h.b16 %v1458
      %v1597 = vunpack.c.l.b16 %v1459
      %v1598 = vunpack.c.h.b16 %v1459
      %v1599 = vunpack.c.l.b16 %v1460
      %v1600 = vunpack.c.h.b16 %v1460
      %v1601 = vunpack.c.l.b16 %v1461
      %v1602 = vunpack.c.h.b16 %v1461
      %v1603 = vunpack.c.l.b16 %v1462
      %v1604 = vunpack.c.h.b16 %v1462
      %v1605 = vunpack.c.l.b16 %v1463
      %v1606 = vunpack.c.h.b16 %v1463
      %v1607 = vunpack.c.l.b16 %v1464
      %v1608 = vunpack.c.h.b16 %v1464
      %v1609 = vunpack.c.l.b16 %v1465
      %v1610 = vunpack.c.h.b16 %v1465
      %v1611 = vunpack.c.l.b16 %v1466
      %v1612 = vunpack.c.h.b16 %v1466
      %v1613 = vunpack.c.l.b16 %v1467
      %v1614 = vunpack.c.h.b16 %v1467
      %v1615 = vunpack.c.l.b16 %v1468
      %v1616 = vunpack.c.h.b16 %v1468
      %v1617 = vunpack.c.l.b16 %v1469
      %v1618 = vunpack.c.h.b16 %v1469
      %v1619 = vunpack.c.l.b16 %v1470
      %v1620 = vunpack.c.h.b16 %v1470
      %v1621 = vunpack.c.l.b16 %v1471
      %v1622 = vunpack.c.h.b16 %v1471
      %v1623 = vunpack.c.l.b16 %v1472
      %v1624 = vunpack.c.h.b16 %v1472
      %v1625 = vunpack.c.l.b16 %v1473
      %v1626 = vunpack.c.h.b16 %v1473
      %v1627 = vunpack.c.l.b16 %v1474
      %v1628 = vunpack.c.h.b16 %v1474
      %v1629 = vunpack.c.l.b16 %v1475
      %v1630 = vunpack.c.h.b16 %v1475
      %v1631 = vunpack.c.l.b16 %v1476
      %v1632 = vunpack.c.h.b16 %v1476
      %v1633 = vunpack.c.l.b16 %v1477
      %v1634 = vunpack.c.h.b16 %v1477
      %v1635 = vunpack.c.l.b16 %v1478
      %v1636 = vunpack.c.h.b16 %v1478
      %v1637 = vunpack.c.l.b16 %v1479
      %v1638 = vunpack.c.h.b16 %v1479
      %v1639 = vunpack.c.l.b16 %v1480
      %v1640 = vunpack.c.h.b16 %v1480
      %v1641 = vunpack.c.l.b16 %v1481
      %v1642 = vunpack.c.h.b16 %v1481
      %v1643 = vunpack.c.l.b16 %v1482
      %v1644 = vunpack.c.h.b16 %v1482
      %v1645 = vunpack.c.l.b16 %v1483
      %v1646 = vunpack.c.h.b16 %v1483
      %v1647 = vunpack.c.l.b16 %v1484
      %v1648 = vunpack.c.h.b16 %v1484
      %v1649 = vunpack.c.l.b16 %v1485
      %v1650 = vunpack.c.h.b16 %v1485
      %v1651 = vunpack.c.l.b16 %v1486
      %v1652 = vunpack.c.h.b16 %v1486
      %v1653 = vunpack.c.l.b16 %v1487
      %v1654 = vunpack.c.h.b16 %v1487
      %v1655 = vunpack.c.l.b16 %v1488
      %v1656 = vunpack.c.h.b16 %v1488
      %v1657 = vunpack.c.l.b16 %v1489
      %v1658 = vunpack.c.h.b16 %v1489
      %v1659 = vunpack.c.l.b16 %v1490
      %v1660 = vunpack.c.h.b16 %v1490
      %v1661 = vunpack.c.l.b16 %v1491
      %v1662 = vunpack.c.h.b16 %v1491
      %v1663 = vunpack.c.l.b16 %v1492
      %v1664 = vunpack.c.h.b16 %v1492
      %v1665 = vunpack.c.l.b16 %v1493
      %v1666 = vunpack.c.h.b16 %v1493
      %v1667 = vunpack.c.l.b16 %v1494
      %v1668 = vunpack.c.h.b16 %v1494
      %v1669 = vunpack.c.l.b16 %v1495
      %v1670 = vunpack.c.h.b16 %v1495
      %v1671 = vunpack.c.l.b16 %v1496
      %v1672 = vunpack.c.h.b16 %v1496
      %v1673 = vunpack.c.l.b16 %v1497
      %v1674 = vunpack.c.h.b16 %v1497
      %v1675 = vunpack.c.l.b16 %v1498
      %v1676 = vunpack.c.h.b16 %v1498
      %v1677 = vunpack.c.l.b16 %v1499
      %v1678 = vunpack.c.h.b16 %v1499
      %v1679 = vunpack.c.l.b16 %v1500
      %v1680 = vunpack.c.h.b16 %v1500
      %v1681 = vunpack.c.l.b16 %v1501
      %v1682 = vunpack.c.h.b16 %v1501
      %v1683 = vunpack.c.l.b16 %v1502
      %v1684 = vunpack.c.h.b16 %v1502
      %v1685 = vunpack.c.l.b16 %v1503
      %v1686 = vunpack.c.h.b16 %v1503
      %v1687 = vunpack.c.l.b16 %v1504
      %v1688 = vunpack.c.h.b16 %v1504
      %v1689 = vunpack.c.l.b16 %v1505
      %v1690 = vunpack.c.h.b16 %v1505
      %v1691 = vunpack.c.l.b16 %v1506
      %v1692 = vunpack.c.h.b16 %v1506
      %v1693 = vunpack.c.l.b16 %v1507
      %v1694 = vunpack.c.h.b16 %v1507
      %v1695 = vunpack.c.l.b16 %v1508
      %v1696 = vunpack.c.h.b16 %v1508
      %v1697 = vunpack.c.l.b16 %v1509
      %v1698 = vunpack.c.h.b16 %v1509
      %v1699 = vunpack.c.l.b16 %v1510
      %v1700 = vunpack.c.h.b16 %v1510
      %v1701 = vunpack.c.l.b16 %v1511
      %v1702 = vunpack.c.h.b16 %v1511
      %v1703 = vunpack.c.l.b16 %v1512
      %v1704 = vunpack.c.h.b16 %v1512
      %v1705 = vpack.c.b16 %v1577, %v1577
      %v1706 = vpack.c.b16 %v1578, %v1578
      %v1707 = vpack.c.b16 %v1579, %v1579
      %v1708 = vpack.c.b16 %v1580, %v1580
      %v1709 = vpack.c.b16 %v1581, %v1581
      %v1710 = vpack.c.b16 %v1582, %v1582
      %v1711 = vpack.c.b16 %v1583, %v1583
      %v1712 = vpack.c.b16 %v1584, %v1584
      %v1713 = vpack.c.b16 %v1585, %v1585
      %v1714 = vpack.c.b16 %v1586, %v1586
      %v1715 = vpack.c.b16 %v1587, %v1587
      %v1716 = vpack.c.b16 %v1588, %v1588
      %v1717 = vpack.c.b16 %v1589, %v1589
      %v1718 = vpack.c.b16 %v1590, %v1590
      %v1719 = vpack.c.b16 %v1591, %v1591
      %v1720 = vpack.c.b16 %v1592, %v1592
      %v1721 = vpack.c.b16 %v1593, %v1593
      %v1722 = vpack.c.b16 %v1594, %v1594
      %v1723 = vpack.c.b16 %v1595, %v1595
      %v1724 = vpack.c.b16 %v1596, %v1596
      %v1725 = vpack.c.b16 %v1597, %v1597
      %v1726 = vpack.c.b16 %v1598, %v1598
      %v1727 = vpack.c.b16 %v1599, %v1599
      %v1728 = vpack.c.b16 %v1600, %v1600
      %v1729 = vpack.c.b16 %v1601, %v1601
      %v1730 = vpack.c.b16 %v1602, %v1602
      %v1731 = vpack.c.b16 %v1603, %v1603
      %v1732 = vpack.c.b16 %v1604, %v1604
      %v1733 = vpack.c.b16 %v1605, %v1605
      %v1734 = vpack.c.b16 %v1606, %v1606
      %v1735 = vpack.c.b16 %v1607, %v1607
      %v1736 = vpack.c.b16 %v1608, %v1608
      %v1737 = vpack.c.b16 %v1609, %v1609
      %v1738 = vpack.c.b16 %v1610, %v1610
      %v1739 = vpack.c.b16 %v1611, %v1611
      %v1740 = vpack.c.b16 %v1612, %v1612
      %v1741 = vpack.c.b16 %v1613, %v1613
      %v1742 = vpack.c.b16 %v1614, %v1614
      %v1743 = vpack.c.b16 %v1615, %v1615
      %v1744 = vpack.c.b16 %v1616, %v1616
      %v1745 = vpack.c.b16 %v1617, %v1617
      %v1746 = vpack.c.b16 %v1618, %v1618
      %v1747 = vpack.c.b16 %v1619, %v1619
      %v1748 = vpack.c.b16 %v1620, %v1620
      %v1749 = vpack.c.b16 %v1621, %v1621
      %v1750 = vpack.c.b16 %v1622, %v1622
      %v1751 = vpack.c.b16 %v1623, %v1623
      %v1752 = vpack.c.b16 %v1624, %v1624
      %v1753 = vpack.c.b16 %v1625, %v1625
      %v1754 = vpack.c.b16 %v1626, %v1626
      %v1755 = vpack.c.b16 %v1627, %v1627
      %v1756 = vpack.c.b16 %v1628, %v1628
      %v1757 = vpack.c.b16 %v1629, %v1629
      %v1758 = vpack.c.b16 %v1630, %v1630
      %v1759 = vpack.c.b16 %v1631, %v1631
      %v1760 = vpack.c.b16 %v1632, %v1632
      %v1761 = vpack.c.b16 %v1633, %v1633
      %v1762 = vpack.c.b16 %v1634, %v1634
      %v1763 = vpack.c.b16 %v1635, %v1635
      %v1764 = vpack.c.b16 %v1636, %v1636
      %v1765 = vpack.c.b16 %v1637, %v1637
      %v1766 = vpack.c.b16 %v1638, %v1638
      %v1767 = vpack.c.b16 %v1639, %v1639
      %v1768 = vpack.c.b16 %v1640, %v1640
      %v1769 = vpack.c.b16 %v1641, %v1641
      %v1770 = vpack.c.b16 %v1642, %v1642
      %v1771 = vpack.c.b16 %v1643, %v1643
      %v1772 = vpack.c.b16 %v1644, %v1644
      %v1773 = vpack.c.b16 %v1645, %v1645
      %v1774 = vpack.c.b16 %v1646, %v1646
      %v1775 = vpack.c.b16 %v1647, %v1647
      %v1776 = vpack.c.b16 %v1648, %v1648
      %v1777 = vpack.c.b16 %v1649, %v1649
      %v1778 = vpack.c.b16 %v1650, %v1650
      %v1779 = vpack.c.b16 %v1651, %v1651
      %v1780 = vpack.c.b16 %v1652, %v1652
      %v1781 = vpack.c.b16 %v1653, %v1653
      %v1782 = vpack.c.b16 %v1654, %v1654
      %v1783 = vpack.c.b16 %v1655, %v1655
      %v1784 = vpack.c.b16 %v1656, %v1656
      %v1785 = vpack.c.b16 %v1657, %v1657
      %v1786 = vpack.c.b16 %v1658, %v1658
      %v1787 = vpack.c.b16 %v1659, %v1659
      %v1788 = vpack.c.b16 %v1660, %v1660
      %v1789 = vpack.c.b16 %v1661, %v1661
      %v1790 = vpack.c.b16 %v1662, %v1662
      %v1791 = vpack.c.b16 %v1663, %v1663
      %v1792 = vpack.c.b16 %v1664, %v1664
      %v1793 = vpack.c.b16 %v1665, %v1665
      %v1794 = vpack.c.b16 %v1666, %v1666
      %v1795 = vpack.c.b16 %v1667, %v1667
      %v1796 = vpack.c.b16 %v1668, %v1668
      %v1797 = vpack.c.b16 %v1669, %v1669
      %v1798 = vpack.c.b16 %v1670, %v1670
      %v1799 = vpack.c.b16 %v1671, %v1671
      %v1800 = vpack.c.b16 %v1672, %v1672
      %v1801 = vpack.c.b16 %v1673, %v1673
      %v1802 = vpack.c.b16 %v1674, %v1674
      %v1803 = vpack.c.b16 %v1675, %v1675
      %v1804 = vpack.c.b16 %v1676, %v1676
      %v1805 = vpack.c.b16 %v1677, %v1677
      %v1806 = vpack.c.b16 %v1678, %v1678
      %v1807 = vpack.c.b16 %v1679, %v1679
      %v1808 = vpack.c.b16 %v1680, %v1680
      %v1809 = vpack.c.b16 %v1681, %v1681
      %v1810 = vpack.c.b16 %v1682, %v1682
      %v1811 = vpack.c.b16 %v1683, %v1683
      %v1812 = vpack.c.b16 %v1684, %v1684
      %v1813 = vpack.c.b16 %v1685, %v1685
      %v1814 = vpack.c.b16 %v1686, %v1686
      %v1815 = vpack.c.b16 %v1687, %v1687
      %v1816 = vpack.c.b16 %v1688, %v1688
      %v1817 = vpack.c.b16 %v1689, %v1689
      %v1818 = vpack.c.b16 %v1690, %v1690
      %v1819 = vpack.c.b16 %v1691, %v1691
      %v1820 = vpack.c.b16 %v1692, %v1692
      %v1821 = vpack.c.b16 %v1693, %v1693
      %v1822 = vpack.c.b16 %v1694, %v1694
      %v1823 = vpack.c.b16 %v1695, %v1695
      %v1824 = vpack.c.b16 %v1696, %v1696
      %v1825 = vpack.c.b16 %v1697, %v1697
      %v1826 = vpack.c.b16 %v1698, %v1698
      %v1827 = vpack.c.b16 %v1699, %v1699
      %v1828 = vpack.c.b16 %v1700, %v1700
      %v1829 = vpack.c.b16 %v1701, %v1701
      %v1830 = vpack.c.b16 %v1702, %v1702
      %v1831 = vpack.c.b16 %v1703, %v1703
      %v1832 = vpack.c.b16 %v1704, %v1704
      %vm1961 = vcmask 60416
      %1962 = vst.msk [vmem:[%s212] sm:$0xf] %vm1961, %v1705
      %1963 = vst.msk [vmem:[%s212 + $0x4] sm:$0xf] %vm1961, %v1706
      %1964 = vst.msk [vmem:[%s212 + $0x8] sm:$0xf] %vm1961, %v1707
      %1965 = vst.msk [vmem:[%s212 + $0xc] sm:$0xf] %vm1961, %v1708
      %1966 = vst.msk [vmem:[%s212 + $0x10] sm:$0xf] %vm1961, %v1709
      %1967 = vst.msk [vmem:[%s212 + $0x14] sm:$0xf] %vm1961, %v1710
      %1968 = vst.msk [vmem:[%s212 + $0x18] sm:$0xf] %vm1961, %v1711
      %1969 = vst.msk [vmem:[%s212 + $0x1c] sm:$0xf] %vm1961, %v1712
      %1970 = vst.msk [vmem:[%s212 + $0x20] sm:$0xf] %vm1961, %v1713
      %1971 = vst.msk [vmem:[%s212 + $0x24] sm:$0xf] %vm1961, %v1714
      %1972 = vst.msk [vmem:[%s212 + $0x28] sm:$0xf] %vm1961, %v1715
      %1973 = vst.msk [vmem:[%s212 + $0x2c] sm:$0xf] %vm1961, %v1716
      %1974 = vst.msk [vmem:[%s212 + $0x30] sm:$0xf] %vm1961, %v1717
      %1975 = vst.msk [vmem:[%s212 + $0x34] sm:$0xf] %vm1961, %v1718
      %1976 = vst.msk [vmem:[%s212 + $0x38] sm:$0xf] %vm1961, %v1719
      %1977 = vst.msk [vmem:[%s212 + $0x3c] sm:$0xf] %vm1961, %v1720
      %1978 = vst.msk [vmem:[%s212 + $0x40] sm:$0xf] %vm1961, %v1721
      %1979 = vst.msk [vmem:[%s212 + $0x44] sm:$0xf] %vm1961, %v1722
      %1980 = vst.msk [vmem:[%s212 + $0x48] sm:$0xf] %vm1961, %v1723
      %1981 = vst.msk [vmem:[%s212 + $0x4c] sm:$0xf] %vm1961, %v1724
      %1982 = vst.msk [vmem:[%s212 + $0x50] sm:$0xf] %vm1961, %v1725
      %1983 = vst.msk [vmem:[%s212 + $0x54] sm:$0xf] %vm1961, %v1726
      %1984 = vst.msk [vmem:[%s212 + $0x58] sm:$0xf] %vm1961, %v1727
      %1985 = vst.msk [vmem:[%s212 + $0x5c] sm:$0xf] %vm1961, %v1728
      %1986 = vst.msk [vmem:[%s212 + $0x60] sm:$0xf] %vm1961, %v1729
      %1987 = vst.msk [vmem:[%s212 + $0x64] sm:$0xf] %vm1961, %v1730
      %1988 = vst.msk [vmem:[%s212 + $0x68] sm:$0xf] %vm1961, %v1731
      %1989 = vst.msk [vmem:[%s212 + $0x6c] sm:$0xf] %vm1961, %v1732
      %1990 = vst.msk [vmem:[%s212 + $0x70] sm:$0xf] %vm1961, %v1733
      %1991 = vst.msk [vmem:[%s212 + $0x74] sm:$0xf] %vm1961, %v1734
      %1992 = vst.msk [vmem:[%s212 + $0x78] sm:$0xf] %vm1961, %v1735
      %1993 = vst.msk [vmem:[%s212 + $0x7c] sm:$0xf] %vm1961, %v1736
      %1994 = vst.msk [vmem:[%s212 + $0x80] sm:$0xf] %vm1961, %v1737
      %1995 = vst.msk [vmem:[%s212 + $0x84] sm:$0xf] %vm1961, %v1738
      %1996 = vst.msk [vmem:[%s212 + $0x88] sm:$0xf] %vm1961, %v1739
      %1997 = vst.msk [vmem:[%s212 + $0x8c] sm:$0xf] %vm1961, %v1740
      %1998 = vst.msk [vmem:[%s212 + $0x90] sm:$0xf] %vm1961, %v1741
      %1999 = vst.msk [vmem:[%s212 + $0x94] sm:$0xf] %vm1961, %v1742
      %2000 = vst.msk [vmem:[%s212 + $0x98] sm:$0xf] %vm1961, %v1743
      %2001 = vst.msk [vmem:[%s212 + $0x9c] sm:$0xf] %vm1961, %v1744
      %2002 = vst.msk [vmem:[%s212 + $0xa0] sm:$0xf] %vm1961, %v1745
      %2003 = vst.msk [vmem:[%s212 + $0xa4] sm:$0xf] %vm1961, %v1746
      %2004 = vst.msk [vmem:[%s212 + $0xa8] sm:$0xf] %vm1961, %v1747
      %2005 = vst.msk [vmem:[%s212 + $0xac] sm:$0xf] %vm1961, %v1748
      %2006 = vst.msk [vmem:[%s212 + $0xb0] sm:$0xf] %vm1961, %v1749
      %2007 = vst.msk [vmem:[%s212 + $0xb4] sm:$0xf] %vm1961, %v1750
      %2008 = vst.msk [vmem:[%s212 + $0xb8] sm:$0xf] %vm1961, %v1751
      %2009 = vst.msk [vmem:[%s212 + $0xbc] sm:$0xf] %vm1961, %v1752
      %2010 = vst.msk [vmem:[%s212 + $0xc0] sm:$0xf] %vm1961, %v1753
      %2011 = vst.msk [vmem:[%s212 + $0xc4] sm:$0xf] %vm1961, %v1754
      %2012 = vst.msk [vmem:[%s212 + $0xc8] sm:$0xf] %vm1961, %v1755
      %2013 = vst.msk [vmem:[%s212 + $0xcc] sm:$0xf] %vm1961, %v1756
      %2014 = vst.msk [vmem:[%s212 + $0xd0] sm:$0xf] %vm1961, %v1757
      %2015 = vst.msk [vmem:[%s212 + $0xd4] sm:$0xf] %vm1961, %v1758
      %2016 = vst.msk [vmem:[%s212 + $0xd8] sm:$0xf] %vm1961, %v1759
      %2017 = vst.msk [vmem:[%s212 + $0xdc] sm:$0xf] %vm1961, %v1760
      %2018 = vst.msk [vmem:[%s212 + $0xe0] sm:$0xf] %vm1961, %v1761
      %2019 = vst.msk [vmem:[%s212 + $0xe4] sm:$0xf] %vm1961, %v1762
      %2020 = vst.msk [vmem:[%s212 + $0xe8] sm:$0xf] %vm1961, %v1763
      %2021 = vst.msk [vmem:[%s212 + $0xec] sm:$0xf] %vm1961, %v1764
      %2022 = vst.msk [vmem:[%s212 + $0xf0] sm:$0xf] %vm1961, %v1765
      %2023 = vst.msk [vmem:[%s212 + $0xf4] sm:$0xf] %vm1961, %v1766
      %2024 = vst.msk [vmem:[%s212 + $0xf8] sm:$0xf] %vm1961, %v1767
      %2025 = vst.msk [vmem:[%s212 + $0xfc] sm:$0xf] %vm1961, %v1768
      %2026 = vst.msk [vmem:[%s212 + $0x100] sm:$0xf] %vm1961, %v1769
      %2027 = vst.msk [vmem:[%s212 + $0x104] sm:$0xf] %vm1961, %v1770
      %2028 = vst.msk [vmem:[%s212 + $0x108] sm:$0xf] %vm1961, %v1771
      %2029 = vst.msk [vmem:[%s212 + $0x10c] sm:$0xf] %vm1961, %v1772
      %2030 = vst.msk [vmem:[%s212 + $0x110] sm:$0xf] %vm1961, %v1773
      %2031 = vst.msk [vmem:[%s212 + $0x114] sm:$0xf] %vm1961, %v1774
      %2032 = vst.msk [vmem:[%s212 + $0x118] sm:$0xf] %vm1961, %v1775
      %2033 = vst.msk [vmem:[%s212 + $0x11c] sm:$0xf] %vm1961, %v1776
      %2034 = vst.msk [vmem:[%s212 + $0x120] sm:$0xf] %vm1961, %v1777
      %2035 = vst.msk [vmem:[%s212 + $0x124] sm:$0xf] %vm1961, %v1778
      %2036 = vst.msk [vmem:[%s212 + $0x128] sm:$0xf] %vm1961, %v1779
      %2037 = vst.msk [vmem:[%s212 + $0x12c] sm:$0xf] %vm1961, %v1780
      %2038 = vst.msk [vmem:[%s212 + $0x130] sm:$0xf] %vm1961, %v1781
      %2039 = vst.msk [vmem:[%s212 + $0x134] sm:$0xf] %vm1961, %v1782
      %2040 = vst.msk [vmem:[%s212 + $0x138] sm:$0xf] %vm1961, %v1783
      %2041 = vst.msk [vmem:[%s212 + $0x13c] sm:$0xf] %vm1961, %v1784
      %2042 = vst.msk [vmem:[%s212 + $0x140] sm:$0xf] %vm1961, %v1785
      %2043 = vst.msk [vmem:[%s212 + $0x144] sm:$0xf] %vm1961, %v1786
      %2044 = vst.msk [vmem:[%s212 + $0x148] sm:$0xf] %vm1961, %v1787
      %2045 = vst.msk [vmem:[%s212 + $0x14c] sm:$0xf] %vm1961, %v1788
      %2046 = vst.msk [vmem:[%s212 + $0x150] sm:$0xf] %vm1961, %v1789
      %2047 = vst.msk [vmem:[%s212 + $0x154] sm:$0xf] %vm1961, %v1790
      %2048 = vst.msk [vmem:[%s212 + $0x158] sm:$0xf] %vm1961, %v1791
      %2049 = vst.msk [vmem:[%s212 + $0x15c] sm:$0xf] %vm1961, %v1792
      %2050 = vst.msk [vmem:[%s212 + $0x160] sm:$0xf] %vm1961, %v1793
      %2051 = vst.msk [vmem:[%s212 + $0x164] sm:$0xf] %vm1961, %v1794
      %2052 = vst.msk [vmem:[%s212 + $0x168] sm:$0xf] %vm1961, %v1795
      %2053 = vst.msk [vmem:[%s212 + $0x16c] sm:$0xf] %vm1961, %v1796
      %2054 = vst.msk [vmem:[%s212 + $0x170] sm:$0xf] %vm1961, %v1797
      %2055 = vst.msk [vmem:[%s212 + $0x174] sm:$0xf] %vm1961, %v1798
      %2056 = vst.msk [vmem:[%s212 + $0x178] sm:$0xf] %vm1961, %v1799
      %2057 = vst.msk [vmem:[%s212 + $0x17c] sm:$0xf] %vm1961, %v1800
      %2058 = vst.msk [vmem:[%s212 + $0x180] sm:$0xf] %vm1961, %v1801
      %2059 = vst.msk [vmem:[%s212 + $0x184] sm:$0xf] %vm1961, %v1802
      %2060 = vst.msk [vmem:[%s212 + $0x188] sm:$0xf] %vm1961, %v1803
      %2061 = vst.msk [vmem:[%s212 + $0x18c] sm:$0xf] %vm1961, %v1804
      %2062 = vst.msk [vmem:[%s212 + $0x190] sm:$0xf] %vm1961, %v1805
      %2063 = vst.msk [vmem:[%s212 + $0x194] sm:$0xf] %vm1961, %v1806
      %2064 = vst.msk [vmem:[%s212 + $0x198] sm:$0xf] %vm1961, %v1807
      %2065 = vst.msk [vmem:[%s212 + $0x19c] sm:$0xf] %vm1961, %v1808
      %2066 = vst.msk [vmem:[%s212 + $0x1a0] sm:$0xf] %vm1961, %v1809
      %2067 = vst.msk [vmem:[%s212 + $0x1a4] sm:$0xf] %vm1961, %v1810
      %2068 = vst.msk [vmem:[%s212 + $0x1a8] sm:$0xf] %vm1961, %v1811
      %2069 = vst.msk [vmem:[%s212 + $0x1ac] sm:$0xf] %vm1961, %v1812
      %2070 = vst.msk [vmem:[%s212 + $0x1b0] sm:$0xf] %vm1961, %v1813
      %2071 = vst.msk [vmem:[%s212 + $0x1b4] sm:$0xf] %vm1961, %v1814
      %2072 = vst.msk [vmem:[%s212 + $0x1b8] sm:$0xf] %vm1961, %v1815
      %2073 = vst.msk [vmem:[%s212 + $0x1bc] sm:$0xf] %vm1961, %v1816
      %2074 = vst.msk [vmem:[%s212 + $0x1c0] sm:$0xf] %vm1961, %v1817
      %2075 = vst.msk [vmem:[%s212 + $0x1c4] sm:$0xf] %vm1961, %v1818
      %2076 = vst.msk [vmem:[%s212 + $0x1c8] sm:$0xf] %vm1961, %v1819
      %2077 = vst.msk [vmem:[%s212 + $0x1cc] sm:$0xf] %vm1961, %v1820
      %2078 = vst.msk [vmem:[%s212 + $0x1d0] sm:$0xf] %vm1961, %v1821
      %2079 = vst.msk [vmem:[%s212 + $0x1d4] sm:$0xf] %vm1961, %v1822
      %2080 = vst.msk [vmem:[%s212 + $0x1d8] sm:$0xf] %vm1961, %v1823
      %2081 = vst.msk [vmem:[%s212 + $0x1dc] sm:$0xf] %vm1961, %v1824
      %2082 = vst.msk [vmem:[%s212 + $0x1e0] sm:$0xf] %vm1961, %v1825
      %2083 = vst.msk [vmem:[%s212 + $0x1e4] sm:$0xf] %vm1961, %v1826
      %2084 = vst.msk [vmem:[%s212 + $0x1e8] sm:$0xf] %vm1961, %v1827
      %2085 = vst.msk [vmem:[%s212 + $0x1ec] sm:$0xf] %vm1961, %v1828
      %2086 = vst.msk [vmem:[%s212 + $0x1f0] sm:$0xf] %vm1961, %v1829
      %2087 = vst.msk [vmem:[%s212 + $0x1f4] sm:$0xf] %vm1961, %v1830
      %2088 = vst.msk [vmem:[%s212 + $0x1f8] sm:$0xf] %vm1961, %v1831
      %2089 = vst.msk [vmem:[%s212 + $0x1fc] sm:$0xf] %vm1961, %v1832
      %vm2090 = vcmask 64512
      %v2091 = vsel %vm2090, %v939, 0.0
      %v2092 = vsel %vm2090, %v942, 0.0
      %v2093 = vadd.f32 %v2091, %v2092
      %v2094 = vsel %vm2090, %v947, 0.0
      %v2095 = vadd.f32 %v2093, %v2094
      %v2096 = vsel %vm2090, %v950, 0.0
      %v2097 = vadd.f32 %v2095, %v2096
      %v2098 = vsel %vm2090, %v955, 0.0
      %v2099 = vadd.f32 %v2097, %v2098
      %v2100 = vsel %vm2090, %v958, 0.0
      %v2101 = vadd.f32 %v2099, %v2100
      %v2102 = vsel %vm2090, %v963, 0.0
      %v2103 = vadd.f32 %v2101, %v2102
      %v2104 = vsel %vm2090, %v966, 0.0
      %v2105 = vadd.f32 %v2103, %v2104
      %v2106 = vsel %vm2090, %v971, 0.0
      %v2107 = vadd.f32 %v2105, %v2106
      %v2108 = vsel %vm2090, %v974, 0.0
      %v2109 = vadd.f32 %v2107, %v2108
      %v2110 = vsel %vm2090, %v979, 0.0
      %v2111 = vadd.f32 %v2109, %v2110
      %v2112 = vsel %vm2090, %v982, 0.0
      %v2113 = vadd.f32 %v2111, %v2112
      %v2114 = vsel %vm2090, %v987, 0.0
      %v2115 = vadd.f32 %v2113, %v2114
      %v2116 = vsel %vm2090, %v990, 0.0
      %v2117 = vadd.f32 %v2115, %v2116
      %v2118 = vsel %vm2090, %v995, 0.0
      %v2119 = vadd.f32 %v2117, %v2118
      %v2120 = vsel %vm2090, %v998, 0.0
      %v2121 = vadd.f32 %v2119, %v2120
      %v2122 = vsel %vm2090, %v1003, 0.0
      %v2123 = vadd.f32 %v2121, %v2122
      %v2124 = vsel %vm2090, %v1006, 0.0
      %v2125 = vadd.f32 %v2123, %v2124
      %v2126 = vsel %vm2090, %v1011, 0.0
      %v2127 = vadd.f32 %v2125, %v2126
      %v2128 = vsel %vm2090, %v1014, 0.0
      %v2129 = vadd.f32 %v2127, %v2128
      %v2130 = vsel %vm2090, %v1019, 0.0
      %v2131 = vadd.f32 %v2129, %v2130
      %v2132 = vsel %vm2090, %v1022, 0.0
      %v2133 = vadd.f32 %v2131, %v2132
      %v2134 = vsel %vm2090, %v1027, 0.0
      %v2135 = vadd.f32 %v2133, %v2134
      %v2136 = vsel %vm2090, %v1030, 0.0
      %v2137 = vadd.f32 %v2135, %v2136
      %v2138 = vsel %vm2090, %v1035, 0.0
      %v2139 = vadd.f32 %v2137, %v2138
      %v2140 = vsel %vm2090, %v1038, 0.0
      %v2141 = vadd.f32 %v2139, %v2140
      %v2142 = vsel %vm2090, %v1043, 0.0
      %v2143 = vadd.f32 %v2141, %v2142
      %v2144 = vsel %vm2090, %v1046, 0.0
      %v2145 = vadd.f32 %v2143, %v2144
      %v2146 = vsel %vm2090, %v1051, 0.0
      %v2147 = vadd.f32 %v2145, %v2146
      %v2148 = vsel %vm2090, %v1054, 0.0
      %v2149 = vadd.f32 %v2147, %v2148
      %v2150 = vsel %vm2090, %v1059, 0.0
      %v2151 = vadd.f32 %v2149, %v2150
      %v2152 = vsel %vm2090, %v1062, 0.0
      %v2153 = vadd.f32 %v2151, %v2152
      %v2154 = vsel %vm2090, %v1067, 0.0
      %v2155 = vadd.f32 %v2153, %v2154
      %v2156 = vsel %vm2090, %v1070, 0.0
      %v2157 = vadd.f32 %v2155, %v2156
      %v2158 = vsel %vm2090, %v1075, 0.0
      %v2159 = vadd.f32 %v2157, %v2158
      %v2160 = vsel %vm2090, %v1078, 0.0
      %v2161 = vadd.f32 %v2159, %v2160
      %v2162 = vsel %vm2090, %v1083, 0.0
      %v2163 = vadd.f32 %v2161, %v2162
      %v2164 = vsel %vm2090, %v1086, 0.0
      %v2165 = vadd.f32 %v2163, %v2164
      %v2166 = vsel %vm2090, %v1091, 0.0
      %v2167 = vadd.f32 %v2165, %v2166
      %v2168 = vsel %vm2090, %v1094, 0.0
      %v2169 = vadd.f32 %v2167, %v2168
      %v2170 = vsel %vm2090, %v1099, 0.0
      %v2171 = vadd.f32 %v2169, %v2170
      %v2172 = vsel %vm2090, %v1102, 0.0
      %v2173 = vadd.f32 %v2171, %v2172
      %v2174 = vsel %vm2090, %v1107, 0.0
      %v2175 = vadd.f32 %v2173, %v2174
      %v2176 = vsel %vm2090, %v1110, 0.0
      %v2177 = vadd.f32 %v2175, %v2176
      %v2178 = vsel %vm2090, %v1115, 0.0
      %v2179 = vadd.f32 %v2177, %v2178
      %v2180 = vsel %vm2090, %v1118, 0.0
      %v2181 = vadd.f32 %v2179, %v2180
      %v2182 = vsel %vm2090, %v1123, 0.0
      %v2183 = vadd.f32 %v2181, %v2182
      %v2184 = vsel %vm2090, %v1126, 0.0
      %v2185 = vadd.f32 %v2183, %v2184
      %v2186 = vsel %vm2090, %v1131, 0.0
      %v2187 = vadd.f32 %v2185, %v2186
      %v2188 = vsel %vm2090, %v1134, 0.0
      %v2189 = vadd.f32 %v2187, %v2188
      %v2190 = vsel %vm2090, %v1139, 0.0
      %v2191 = vadd.f32 %v2189, %v2190
      %v2192 = vsel %vm2090, %v1142, 0.0
      %v2193 = vadd.f32 %v2191, %v2192
      %v2194 = vsel %vm2090, %v1147, 0.0
      %v2195 = vadd.f32 %v2193, %v2194
      %v2196 = vsel %vm2090, %v1150, 0.0
      %v2197 = vadd.f32 %v2195, %v2196
      %v2198 = vsel %vm2090, %v1155, 0.0
      %v2199 = vadd.f32 %v2197, %v2198
      %v2200 = vsel %vm2090, %v1158, 0.0
      %v2201 = vadd.f32 %v2199, %v2200
      %v2202 = vsel %vm2090, %v1163, 0.0
      %v2203 = vadd.f32 %v2201, %v2202
      %v2204 = vsel %vm2090, %v1166, 0.0
      %v2205 = vadd.f32 %v2203, %v2204
      %v2206 = vsel %vm2090, %v1171, 0.0
      %v2207 = vadd.f32 %v2205, %v2206
      %v2208 = vsel %vm2090, %v1174, 0.0
      %v2209 = vadd.f32 %v2207, %v2208
      %v2210 = vsel %vm2090, %v1179, 0.0
      %v2211 = vadd.f32 %v2209, %v2210
      %v2212 = vsel %vm2090, %v1182, 0.0
      %v2213 = vadd.f32 %v2211, %v2212
      %v2214 = vsel %vm2090, %v1187, 0.0
      %v2215 = vadd.f32 %v2213, %v2214
      %v2216 = vsel %vm2090, %v1190, 0.0
      %v2217 = vadd.f32 %v2215, %v2216
      %v2218 = vsel %vm2090, %v1195, 0.0
      %v2219 = vadd.f32 %v2217, %v2218
      %v2220 = vsel %vm2090, %v1198, 0.0
      %v2221 = vadd.f32 %v2219, %v2220
      %v2222 = vsel %vm2090, %v1203, 0.0
      %v2223 = vadd.f32 %v2221, %v2222
      %v2224 = vsel %vm2090, %v1206, 0.0
      %v2225 = vadd.f32 %v2223, %v2224
      %v2226 = vsel %vm2090, %v1211, 0.0
      %v2227 = vadd.f32 %v2225, %v2226
      %v2228 = vsel %vm2090, %v1214, 0.0
      %v2229 = vadd.f32 %v2227, %v2228
      %v2230 = vsel %vm2090, %v1219, 0.0
      %v2231 = vadd.f32 %v2229, %v2230
      %v2232 = vsel %vm2090, %v1222, 0.0
      %v2233 = vadd.f32 %v2231, %v2232
      %v2234 = vsel %vm2090, %v1227, 0.0
      %v2235 = vadd.f32 %v2233, %v2234
      %v2236 = vsel %vm2090, %v1230, 0.0
      %v2237 = vadd.f32 %v2235, %v2236
      %v2238 = vsel %vm2090, %v1235, 0.0
      %v2239 = vadd.f32 %v2237, %v2238
      %v2240 = vsel %vm2090, %v1238, 0.0
      %v2241 = vadd.f32 %v2239, %v2240
      %v2242 = vsel %vm2090, %v1243, 0.0
      %v2243 = vadd.f32 %v2241, %v2242
      %v2244 = vsel %vm2090, %v1246, 0.0
      %v2245 = vadd.f32 %v2243, %v2244
      %v2246 = vsel %vm2090, %v1251, 0.0
      %v2247 = vadd.f32 %v2245, %v2246
      %v2248 = vsel %vm2090, %v1254, 0.0
      %v2249 = vadd.f32 %v2247, %v2248
      %v2250 = vsel %vm2090, %v1259, 0.0
      %v2251 = vadd.f32 %v2249, %v2250
      %v2252 = vsel %vm2090, %v1262, 0.0
      %v2253 = vadd.f32 %v2251, %v2252
      %v2254 = vsel %vm2090, %v1267, 0.0
      %v2255 = vadd.f32 %v2253, %v2254
      %v2256 = vsel %vm2090, %v1270, 0.0
      %v2257 = vadd.f32 %v2255, %v2256
      %v2258 = vsel %vm2090, %v1275, 0.0
      %v2259 = vadd.f32 %v2257, %v2258
      %v2260 = vsel %vm2090, %v1278, 0.0
      %v2261 = vadd.f32 %v2259, %v2260
      %v2262 = vsel %vm2090, %v1283, 0.0
      %v2263 = vadd.f32 %v2261, %v2262
      %v2264 = vsel %vm2090, %v1286, 0.0
      %v2265 = vadd.f32 %v2263, %v2264
      %v2266 = vsel %vm2090, %v1291, 0.0
      %v2267 = vadd.f32 %v2265, %v2266
      %v2268 = vsel %vm2090, %v1294, 0.0
      %v2269 = vadd.f32 %v2267, %v2268
      %v2270 = vsel %vm2090, %v1299, 0.0
      %v2271 = vadd.f32 %v2269, %v2270
      %v2272 = vsel %vm2090, %v1302, 0.0
      %v2273 = vadd.f32 %v2271, %v2272
      %v2274 = vsel %vm2090, %v1307, 0.0
      %v2275 = vadd.f32 %v2273, %v2274
      %v2276 = vsel %vm2090, %v1310, 0.0
      %v2277 = vadd.f32 %v2275, %v2276
      %v2278 = vsel %vm2090, %v1315, 0.0
      %v2279 = vadd.f32 %v2277, %v2278
      %v2280 = vsel %vm2090, %v1318, 0.0
      %v2281 = vadd.f32 %v2279, %v2280
      %v2282 = vsel %vm2090, %v1323, 0.0
      %v2283 = vadd.f32 %v2281, %v2282
      %v2284 = vsel %vm2090, %v1326, 0.0
      %v2285 = vadd.f32 %v2283, %v2284
      %v2286 = vsel %vm2090, %v1331, 0.0
      %v2287 = vadd.f32 %v2285, %v2286
      %v2288 = vsel %vm2090, %v1334, 0.0
      %v2289 = vadd.f32 %v2287, %v2288
      %v2290 = vsel %vm2090, %v1339, 0.0
      %v2291 = vadd.f32 %v2289, %v2290
      %v2292 = vsel %vm2090, %v1342, 0.0
      %v2293 = vadd.f32 %v2291, %v2292
      %v2294 = vsel %vm2090, %v1347, 0.0
      %v2295 = vadd.f32 %v2293, %v2294
      %v2296 = vsel %vm2090, %v1350, 0.0
      %v2297 = vadd.f32 %v2295, %v2296
      %v2298 = vsel %vm2090, %v1355, 0.0
      %v2299 = vadd.f32 %v2297, %v2298
      %v2300 = vsel %vm2090, %v1358, 0.0
      %v2301 = vadd.f32 %v2299, %v2300
      %v2302 = vsel %vm2090, %v1363, 0.0
      %v2303 = vadd.f32 %v2301, %v2302
      %v2304 = vsel %vm2090, %v1366, 0.0
      %v2305 = vadd.f32 %v2303, %v2304
      %v2306 = vsel %vm2090, %v1371, 0.0
      %v2307 = vadd.f32 %v2305, %v2306
      %v2308 = vsel %vm2090, %v1374, 0.0
      %v2309 = vadd.f32 %v2307, %v2308
      %v2310 = vsel %vm2090, %v1379, 0.0
      %v2311 = vadd.f32 %v2309, %v2310
      %v2312 = vsel %vm2090, %v1382, 0.0
      %v2313 = vadd.f32 %v2311, %v2312
      %v2314 = vsel %vm2090, %v1387, 0.0
      %v2315 = vadd.f32 %v2313, %v2314
      %v2316 = vsel %vm2090, %v1390, 0.0
      %v2317 = vadd.f32 %v2315, %v2316
      %v2318 = vsel %vm2090, %v1395, 0.0
      %v2319 = vadd.f32 %v2317, %v2318
      %v2320 = vsel %vm2090, %v1398, 0.0
      %v2321 = vadd.f32 %v2319, %v2320
      %v2322 = vsel %vm2090, %v1403, 0.0
      %v2323 = vadd.f32 %v2321, %v2322
      %v2324 = vsel %vm2090, %v1406, 0.0
      %v2325 = vadd.f32 %v2323, %v2324
      %v2326 = vsel %vm2090, %v1411, 0.0
      %v2327 = vadd.f32 %v2325, %v2326
      %v2328 = vsel %vm2090, %v1414, 0.0
      %v2329 = vadd.f32 %v2327, %v2328
      %v2330 = vsel %vm2090, %v1419, 0.0
      %v2331 = vadd.f32 %v2329, %v2330
      %v2332 = vsel %vm2090, %v1422, 0.0
      %v2333 = vadd.f32 %v2331, %v2332
      %v2334 = vsel %vm2090, %v1427, 0.0
      %v2335 = vadd.f32 %v2333, %v2334
      %v2336 = vsel %vm2090, %v1430, 0.0
      %v2337 = vadd.f32 %v2335, %v2336
      %v2338 = vsel %vm2090, %v1435, 0.0
      %v2339 = vadd.f32 %v2337, %v2338
      %v2340 = vsel %vm2090, %v1438, 0.0
      %v2341 = vadd.f32 %v2339, %v2340
      %v2342 = vsel %vm2090, %v1443, 0.0
      %v2343 = vadd.f32 %v2341, %v2342
      %v2344 = vsel %vm2090, %v1446, 0.0
      %v2345 = vadd.f32 %v2343, %v2344
      %2346 = vst.msk [vmem:[%s217] sm:$0xff] %vm2090, %v2345
      %v2347 = vmul.f32 %v939, %v939
      %v2348 = vmul.f32 %v942, %v942
      %v2349 = vmul.f32 %v947, %v947
      %v2350 = vmul.f32 %v950, %v950
      %v2351 = vmul.f32 %v955, %v955
      %v2352 = vmul.f32 %v958, %v958
      %v2353 = vmul.f32 %v963, %v963
      %v2354 = vmul.f32 %v966, %v966
      %v2355 = vmul.f32 %v971, %v971
      %v2356 = vmul.f32 %v974, %v974
      %v2357 = vmul.f32 %v979, %v979
      %v2358 = vmul.f32 %v982, %v982
      %v2359 = vmul.f32 %v987, %v987
      %v2360 = vmul.f32 %v990, %v990
      %v2361 = vmul.f32 %v995, %v995
      %v2362 = vmul.f32 %v998, %v998
      %v2363 = vmul.f32 %v1003, %v1003
      %v2364 = vmul.f32 %v1006, %v1006
      %v2365 = vmul.f32 %v1011, %v1011
      %v2366 = vmul.f32 %v1014, %v1014
      %v2367 = vmul.f32 %v1019, %v1019
      %v2368 = vmul.f32 %v1022, %v1022
      %v2369 = vmul.f32 %v1027, %v1027
      %v2370 = vmul.f32 %v1030, %v1030
      %v2371 = vmul.f32 %v1035, %v1035
      %v2372 = vmul.f32 %v1038, %v1038
      %v2373 = vmul.f32 %v1043, %v1043
      %v2374 = vmul.f32 %v1046, %v1046
      %v2375 = vmul.f32 %v1051, %v1051
      %v2376 = vmul.f32 %v1054, %v1054
      %v2377 = vmul.f32 %v1059, %v1059
      %v2378 = vmul.f32 %v1062, %v1062
      %v2379 = vmul.f32 %v1067, %v1067
      %v2380 = vmul.f32 %v1070, %v1070
      %v2381 = vmul.f32 %v1075, %v1075
      %v2382 = vmul.f32 %v1078, %v1078
      %v2383 = vmul.f32 %v1083, %v1083
      %v2384 = vmul.f32 %v1086, %v1086
      %v2385 = vmul.f32 %v1091, %v1091
      %v2386 = vmul.f32 %v1094, %v1094
      %v2387 = vmul.f32 %v1099, %v1099
      %v2388 = vmul.f32 %v1102, %v1102
      %v2389 = vmul.f32 %v1107, %v1107
      %v2390 = vmul.f32 %v1110, %v1110
      %v2391 = vmul.f32 %v1115, %v1115
      %v2392 = vmul.f32 %v1118, %v1118
      %v2393 = vmul.f32 %v1123, %v1123
      %v2394 = vmul.f32 %v1126, %v1126
      %v2395 = vmul.f32 %v1131, %v1131
      %v2396 = vmul.f32 %v1134, %v1134
      %v2397 = vmul.f32 %v1139, %v1139
      %v2398 = vmul.f32 %v1142, %v1142
      %v2399 = vmul.f32 %v1147, %v1147
      %v2400 = vmul.f32 %v1150, %v1150
      %v2401 = vmul.f32 %v1155, %v1155
      %v2402 = vmul.f32 %v1158, %v1158
      %v2403 = vmul.f32 %v1163, %v1163
      %v2404 = vmul.f32 %v1166, %v1166
      %v2405 = vmul.f32 %v1171, %v1171
      %v2406 = vmul.f32 %v1174, %v1174
      %v2407 = vmul.f32 %v1179, %v1179
      %v2408 = vmul.f32 %v1182, %v1182
      %v2409 = vmul.f32 %v1187, %v1187
      %v2410 = vmul.f32 %v1190, %v1190
      %v2411 = vmul.f32 %v1195, %v1195
      %v2412 = vmul.f32 %v1198, %v1198
      %v2413 = vmul.f32 %v1203, %v1203
      %v2414 = vmul.f32 %v1206, %v1206
      %v2415 = vmul.f32 %v1211, %v1211
      %v2416 = vmul.f32 %v1214, %v1214
      %v2417 = vmul.f32 %v1219, %v1219
      %v2418 = vmul.f32 %v1222, %v1222
      %v2419 = vmul.f32 %v1227, %v1227
      %v2420 = vmul.f32 %v1230, %v1230
      %v2421 = vmul.f32 %v1235, %v1235
      %v2422 = vmul.f32 %v1238, %v1238
      %v2423 = vmul.f32 %v1243, %v1243
      %v2424 = vmul.f32 %v1246, %v1246
      %v2425 = vmul.f32 %v1251, %v1251
      %v2426 = vmul.f32 %v1254, %v1254
      %v2427 = vmul.f32 %v1259, %v1259
      %v2428 = vmul.f32 %v1262, %v1262
      %v2429 = vmul.f32 %v1267, %v1267
      %v2430 = vmul.f32 %v1270, %v1270
      %v2431 = vmul.f32 %v1275, %v1275
      %v2432 = vmul.f32 %v1278, %v1278
      %v2433 = vmul.f32 %v1283, %v1283
      %v2434 = vmul.f32 %v1286, %v1286
      %v2435 = vmul.f32 %v1291, %v1291
      %v2436 = vmul.f32 %v1294, %v1294
      %v2437 = vmul.f32 %v1299, %v1299
      %v2438 = vmul.f32 %v1302, %v1302
      %v2439 = vmul.f32 %v1307, %v1307
      %v2440 = vmul.f32 %v1310, %v1310
      %v2441 = vmul.f32 %v1315, %v1315
      %v2442 = vmul.f32 %v1318, %v1318
      %v2443 = vmul.f32 %v1323, %v1323
      %v2444 = vmul.f32 %v1326, %v1326
      %v2445 = vmul.f32 %v1331, %v1331
      %v2446 = vmul.f32 %v1334, %v1334
      %v2447 = vmul.f32 %v1339, %v1339
      %v2448 = vmul.f32 %v1342, %v1342
      %v2449 = vmul.f32 %v1347, %v1347
      %v2450 = vmul.f32 %v1350, %v1350
      %v2451 = vmul.f32 %v1355, %v1355
      %v2452 = vmul.f32 %v1358, %v1358
      %v2453 = vmul.f32 %v1363, %v1363
      %v2454 = vmul.f32 %v1366, %v1366
      %v2455 = vmul.f32 %v1371, %v1371
      %v2456 = vmul.f32 %v1374, %v1374
      %v2457 = vmul.f32 %v1379, %v1379
      %v2458 = vmul.f32 %v1382, %v1382
      %v2459 = vmul.f32 %v1387, %v1387
      %v2460 = vmul.f32 %v1390, %v1390
      %v2461 = vmul.f32 %v1395, %v1395
      %v2462 = vmul.f32 %v1398, %v1398
      %v2463 = vmul.f32 %v1403, %v1403
      %v2464 = vmul.f32 %v1406, %v1406
      %v2465 = vmul.f32 %v1411, %v1411
      %v2466 = vmul.f32 %v1414, %v1414
      %v2467 = vmul.f32 %v1419, %v1419
      %v2468 = vmul.f32 %v1422, %v1422
      %v2469 = vmul.f32 %v1427, %v1427
      %v2470 = vmul.f32 %v1430, %v1430
      %v2471 = vmul.f32 %v1435, %v1435
      %v2472 = vmul.f32 %v1438, %v1438
      %v2473 = vmul.f32 %v1443, %v1443
      %v2474 = vmul.f32 %v1446, %v1446
      %v2475 = vsel %vm2090, %v2347, 0.0
      %v2476 = vsel %vm2090, %v2348, 0.0
      %v2477 = vadd.f32 %v2475, %v2476
      %v2478 = vsel %vm2090, %v2349, 0.0
      %v2479 = vadd.f32 %v2477, %v2478
      %v2480 = vsel %vm2090, %v2350, 0.0
      %v2481 = vadd.f32 %v2479, %v2480
      %v2482 = vsel %vm2090, %v2351, 0.0
      %v2483 = vadd.f32 %v2481, %v2482
      %v2484 = vsel %vm2090, %v2352, 0.0
      %v2485 = vadd.f32 %v2483, %v2484
      %v2486 = vsel %vm2090, %v2353, 0.0
      %v2487 = vadd.f32 %v2485, %v2486
      %v2488 = vsel %vm2090, %v2354, 0.0
      %v2489 = vadd.f32 %v2487, %v2488
      %v2490 = vsel %vm2090, %v2355, 0.0
      %v2491 = vadd.f32 %v2489, %v2490
      %v2492 = vsel %vm2090, %v2356, 0.0
      %v2493 = vadd.f32 %v2491, %v2492
      %v2494 = vsel %vm2090, %v2357, 0.0
      %v2495 = vadd.f32 %v2493, %v2494
      %v2496 = vsel %vm2090, %v2358, 0.0
      %v2497 = vadd.f32 %v2495, %v2496
      %v2498 = vsel %vm2090, %v2359, 0.0
      %v2499 = vadd.f32 %v2497, %v2498
      %v2500 = vsel %vm2090, %v2360, 0.0
      %v2501 = vadd.f32 %v2499, %v2500
      %v2502 = vsel %vm2090, %v2361, 0.0
      %v2503 = vadd.f32 %v2501, %v2502
      %v2504 = vsel %vm2090, %v2362, 0.0
      %v2505 = vadd.f32 %v2503, %v2504
      %v2506 = vsel %vm2090, %v2363, 0.0
      %v2507 = vadd.f32 %v2505, %v2506
      %v2508 = vsel %vm2090, %v2364, 0.0
      %v2509 = vadd.f32 %v2507, %v2508
      %v2510 = vsel %vm2090, %v2365, 0.0
      %v2511 = vadd.f32 %v2509, %v2510
      %v2512 = vsel %vm2090, %v2366, 0.0
      %v2513 = vadd.f32 %v2511, %v2512
      %v2514 = vsel %vm2090, %v2367, 0.0
      %v2515 = vadd.f32 %v2513, %v2514
      %v2516 = vsel %vm2090, %v2368, 0.0
      %v2517 = vadd.f32 %v2515, %v2516
      %v2518 = vsel %vm2090, %v2369, 0.0
      %v2519 = vadd.f32 %v2517, %v2518
      %v2520 = vsel %vm2090, %v2370, 0.0
      %v2521 = vadd.f32 %v2519, %v2520
      %v2522 = vsel %vm2090, %v2371, 0.0
      %v2523 = vadd.f32 %v2521, %v2522
      %v2524 = vsel %vm2090, %v2372, 0.0
      %v2525 = vadd.f32 %v2523, %v2524
      %v2526 = vsel %vm2090, %v2373, 0.0
      %v2527 = vadd.f32 %v2525, %v2526
      %v2528 = vsel %vm2090, %v2374, 0.0
      %v2529 = vadd.f32 %v2527, %v2528
      %v2530 = vsel %vm2090, %v2375, 0.0
      %v2531 = vadd.f32 %v2529, %v2530
      %v2532 = vsel %vm2090, %v2376, 0.0
      %v2533 = vadd.f32 %v2531, %v2532
      %v2534 = vsel %vm2090, %v2377, 0.0
      %v2535 = vadd.f32 %v2533, %v2534
      %v2536 = vsel %vm2090, %v2378, 0.0
      %v2537 = vadd.f32 %v2535, %v2536
      %v2538 = vsel %vm2090, %v2379, 0.0
      %v2539 = vadd.f32 %v2537, %v2538
      %v2540 = vsel %vm2090, %v2380, 0.0
      %v2541 = vadd.f32 %v2539, %v2540
      %v2542 = vsel %vm2090, %v2381, 0.0
      %v2543 = vadd.f32 %v2541, %v2542
      %v2544 = vsel %vm2090, %v2382, 0.0
      %v2545 = vadd.f32 %v2543, %v2544
      %v2546 = vsel %vm2090, %v2383, 0.0
      %v2547 = vadd.f32 %v2545, %v2546
      %v2548 = vsel %vm2090, %v2384, 0.0
      %v2549 = vadd.f32 %v2547, %v2548
      %v2550 = vsel %vm2090, %v2385, 0.0
      %v2551 = vadd.f32 %v2549, %v2550
      %v2552 = vsel %vm2090, %v2386, 0.0
      %v2553 = vadd.f32 %v2551, %v2552
      %v2554 = vsel %vm2090, %v2387, 0.0
      %v2555 = vadd.f32 %v2553, %v2554
      %v2556 = vsel %vm2090, %v2388, 0.0
      %v2557 = vadd.f32 %v2555, %v2556
      %v2558 = vsel %vm2090, %v2389, 0.0
      %v2559 = vadd.f32 %v2557, %v2558
      %v2560 = vsel %vm2090, %v2390, 0.0
      %v2561 = vadd.f32 %v2559, %v2560
      %v2562 = vsel %vm2090, %v2391, 0.0
      %v2563 = vadd.f32 %v2561, %v2562
      %v2564 = vsel %vm2090, %v2392, 0.0
      %v2565 = vadd.f32 %v2563, %v2564
      %v2566 = vsel %vm2090, %v2393, 0.0
      %v2567 = vadd.f32 %v2565, %v2566
      %v2568 = vsel %vm2090, %v2394, 0.0
      %v2569 = vadd.f32 %v2567, %v2568
      %v2570 = vsel %vm2090, %v2395, 0.0
      %v2571 = vadd.f32 %v2569, %v2570
      %v2572 = vsel %vm2090, %v2396, 0.0
      %v2573 = vadd.f32 %v2571, %v2572
      %v2574 = vsel %vm2090, %v2397, 0.0
      %v2575 = vadd.f32 %v2573, %v2574
      %v2576 = vsel %vm2090, %v2398, 0.0
      %v2577 = vadd.f32 %v2575, %v2576
      %v2578 = vsel %vm2090, %v2399, 0.0
      %v2579 = vadd.f32 %v2577, %v2578
      %v2580 = vsel %vm2090, %v2400, 0.0
      %v2581 = vadd.f32 %v2579, %v2580
      %v2582 = vsel %vm2090, %v2401, 0.0
      %v2583 = vadd.f32 %v2581, %v2582
      %v2584 = vsel %vm2090, %v2402, 0.0
      %v2585 = vadd.f32 %v2583, %v2584
      %v2586 = vsel %vm2090, %v2403, 0.0
      %v2587 = vadd.f32 %v2585, %v2586
      %v2588 = vsel %vm2090, %v2404, 0.0
      %v2589 = vadd.f32 %v2587, %v2588
      %v2590 = vsel %vm2090, %v2405, 0.0
      %v2591 = vadd.f32 %v2589, %v2590
      %v2592 = vsel %vm2090, %v2406, 0.0
      %v2593 = vadd.f32 %v2591, %v2592
      %v2594 = vsel %vm2090, %v2407, 0.0
      %v2595 = vadd.f32 %v2593, %v2594
      %v2596 = vsel %vm2090, %v2408, 0.0
      %v2597 = vadd.f32 %v2595, %v2596
      %v2598 = vsel %vm2090, %v2409, 0.0
      %v2599 = vadd.f32 %v2597, %v2598
      %v2600 = vsel %vm2090, %v2410, 0.0
      %v2601 = vadd.f32 %v2599, %v2600
      %v2602 = vsel %vm2090, %v2411, 0.0
      %v2603 = vadd.f32 %v2601, %v2602
      %v2604 = vsel %vm2090, %v2412, 0.0
      %v2605 = vadd.f32 %v2603, %v2604
      %v2606 = vsel %vm2090, %v2413, 0.0
      %v2607 = vadd.f32 %v2605, %v2606
      %v2608 = vsel %vm2090, %v2414, 0.0
      %v2609 = vadd.f32 %v2607, %v2608
      %v2610 = vsel %vm2090, %v2415, 0.0
      %v2611 = vadd.f32 %v2609, %v2610
      %v2612 = vsel %vm2090, %v2416, 0.0
      %v2613 = vadd.f32 %v2611, %v2612
      %v2614 = vsel %vm2090, %v2417, 0.0
      %v2615 = vadd.f32 %v2613, %v2614
      %v2616 = vsel %vm2090, %v2418, 0.0
      %v2617 = vadd.f32 %v2615, %v2616
      %v2618 = vsel %vm2090, %v2419, 0.0
      %v2619 = vadd.f32 %v2617, %v2618
      %v2620 = vsel %vm2090, %v2420, 0.0
      %v2621 = vadd.f32 %v2619, %v2620
      %v2622 = vsel %vm2090, %v2421, 0.0
      %v2623 = vadd.f32 %v2621, %v2622
      %v2624 = vsel %vm2090, %v2422, 0.0
      %v2625 = vadd.f32 %v2623, %v2624
      %v2626 = vsel %vm2090, %v2423, 0.0
      %v2627 = vadd.f32 %v2625, %v2626
      %v2628 = vsel %vm2090, %v2424, 0.0
      %v2629 = vadd.f32 %v2627, %v2628
      %v2630 = vsel %vm2090, %v2425, 0.0
      %v2631 = vadd.f32 %v2629, %v2630
      %v2632 = vsel %vm2090, %v2426, 0.0
      %v2633 = vadd.f32 %v2631, %v2632
      %v2634 = vsel %vm2090, %v2427, 0.0
      %v2635 = vadd.f32 %v2633, %v2634
      %v2636 = vsel %vm2090, %v2428, 0.0
      %v2637 = vadd.f32 %v2635, %v2636
      %v2638 = vsel %vm2090, %v2429, 0.0
      %v2639 = vadd.f32 %v2637, %v2638
      %v2640 = vsel %vm2090, %v2430, 0.0
      %v2641 = vadd.f32 %v2639, %v2640
      %v2642 = vsel %vm2090, %v2431, 0.0
      %v2643 = vadd.f32 %v2641, %v2642
      %v2644 = vsel %vm2090, %v2432, 0.0
      %v2645 = vadd.f32 %v2643, %v2644
      %v2646 = vsel %vm2090, %v2433, 0.0
      %v2647 = vadd.f32 %v2645, %v2646
      %v2648 = vsel %vm2090, %v2434, 0.0
      %v2649 = vadd.f32 %v2647, %v2648
      %v2650 = vsel %vm2090, %v2435, 0.0
      %v2651 = vadd.f32 %v2649, %v2650
      %v2652 = vsel %vm2090, %v2436, 0.0
      %v2653 = vadd.f32 %v2651, %v2652
      %v2654 = vsel %vm2090, %v2437, 0.0
      %v2655 = vadd.f32 %v2653, %v2654
      %v2656 = vsel %vm2090, %v2438, 0.0
      %v2657 = vadd.f32 %v2655, %v2656
      %v2658 = vsel %vm2090, %v2439, 0.0
      %v2659 = vadd.f32 %v2657, %v2658
      %v2660 = vsel %vm2090, %v2440, 0.0
      %v2661 = vadd.f32 %v2659, %v2660
      %v2662 = vsel %vm2090, %v2441, 0.0
      %v2663 = vadd.f32 %v2661, %v2662
      %v2664 = vsel %vm2090, %v2442, 0.0
      %v2665 = vadd.f32 %v2663, %v2664
      %v2666 = vsel %vm2090, %v2443, 0.0
      %v2667 = vadd.f32 %v2665, %v2666
      %v2668 = vsel %vm2090, %v2444, 0.0
      %v2669 = vadd.f32 %v2667, %v2668
      %v2670 = vsel %vm2090, %v2445, 0.0
      %v2671 = vadd.f32 %v2669, %v2670
      %v2672 = vsel %vm2090, %v2446, 0.0
      %v2673 = vadd.f32 %v2671, %v2672
      %v2674 = vsel %vm2090, %v2447, 0.0
      %v2675 = vadd.f32 %v2673, %v2674
      %v2676 = vsel %vm2090, %v2448, 0.0
      %v2677 = vadd.f32 %v2675, %v2676
      %v2678 = vsel %vm2090, %v2449, 0.0
      %v2679 = vadd.f32 %v2677, %v2678
      %v2680 = vsel %vm2090, %v2450, 0.0
      %v2681 = vadd.f32 %v2679, %v2680
      %v2682 = vsel %vm2090, %v2451, 0.0
      %v2683 = vadd.f32 %v2681, %v2682
      %v2684 = vsel %vm2090, %v2452, 0.0
      %v2685 = vadd.f32 %v2683, %v2684
      %v2686 = vsel %vm2090, %v2453, 0.0
      %v2687 = vadd.f32 %v2685, %v2686
      %v2688 = vsel %vm2090, %v2454, 0.0
      %v2689 = vadd.f32 %v2687, %v2688
      %v2690 = vsel %vm2090, %v2455, 0.0
      %v2691 = vadd.f32 %v2689, %v2690
      %v2692 = vsel %vm2090, %v2456, 0.0
      %v2693 = vadd.f32 %v2691, %v2692
      %v2694 = vsel %vm2090, %v2457, 0.0
      %v2695 = vadd.f32 %v2693, %v2694
      %v2696 = vsel %vm2090, %v2458, 0.0
      %v2697 = vadd.f32 %v2695, %v2696
      %v2698 = vsel %vm2090, %v2459, 0.0
      %v2699 = vadd.f32 %v2697, %v2698
      %v2700 = vsel %vm2090, %v2460, 0.0
      %v2701 = vadd.f32 %v2699, %v2700
      %v2702 = vsel %vm2090, %v2461, 0.0
      %v2703 = vadd.f32 %v2701, %v2702
      %v2704 = vsel %vm2090, %v2462, 0.0
      %v2705 = vadd.f32 %v2703, %v2704
      %v2706 = vsel %vm2090, %v2463, 0.0
      %v2707 = vadd.f32 %v2705, %v2706
      %v2708 = vsel %vm2090, %v2464, 0.0
      %v2709 = vadd.f32 %v2707, %v2708
      %v2710 = vsel %vm2090, %v2465, 0.0
      %v2711 = vadd.f32 %v2709, %v2710
      %v2712 = vsel %vm2090, %v2466, 0.0
      %v2713 = vadd.f32 %v2711, %v2712
      %v2714 = vsel %vm2090, %v2467, 0.0
      %v2715 = vadd.f32 %v2713, %v2714
      %v2716 = vsel %vm2090, %v2468, 0.0
      %v2717 = vadd.f32 %v2715, %v2716
      %v2718 = vsel %vm2090, %v2469, 0.0
      %v2719 = vadd.f32 %v2717, %v2718
      %v2720 = vsel %vm2090, %v2470, 0.0
      %v2721 = vadd.f32 %v2719, %v2720
      %v2722 = vsel %vm2090, %v2471, 0.0
      %v2723 = vadd.f32 %v2721, %v2722
      %v2724 = vsel %vm2090, %v2472, 0.0
      %v2725 = vadd.f32 %v2723, %v2724
      %v2726 = vsel %vm2090, %v2473, 0.0
      %v2727 = vadd.f32 %v2725, %v2726
      %v2728 = vsel %vm2090, %v2474, 0.0
      %v2729 = vadd.f32 %v2727, %v2728
      %2730 = vst.msk [vmem:[%s221] sm:$0xff] %vm2090, %v2729
      %s2731 = smul.u32 128, %s16
      %p2732 = scmp.lt.s32.totalorder %s2731, 255
      %s2733 = scalar_select %p2732, %s2731, 255
      %s2734 = smul.addr %s2733, 4
      %s2735 = scalar_lea.vmem %s2, %s2734
      %p2736 = scmp.lt.s32.totalorder %s16, 1
      %s2737 = scalar_select %p2736, %s16, 1
      %s2738 = smul.addr %s2737, 8
      %s2739 = scalar_lea.vmem %s3, %s2738
      %p2740 = scmp.lt.s32.totalorder %s16, 1
      %s2741 = scalar_select %p2740, %s16, 1
      %s2742 = smul.addr %s2741, 8
      %s2743 = scalar_lea.vmem %s4, %s2742
      // Predicated region
      $region29: #{upblock_forward.8} parent=27 // pred_check
        %p2744 = pneg %p81
      $region30: #{upblock_forward.8} parent=27 // pred_check_branch
        %2746 = sbr.rel (%p2744) target = $region32
      $region31: #{upblock_forward.8} parent=27 // pred_region
        %s2747 = smul.u32 128, %s16
      $region32: #{upblock_forward.8} parent=27 // pred_fallthru
        _
      // Predicated region
      $region33: #{upblock_forward.8} parent=27 // pred_check
        %p2748 = pneg %p107
      $region34: #{upblock_forward.8} parent=27 // pred_check_branch
        %2750 = sbr.rel (%p2748) target = $region36
      $region35: #{upblock_forward.8} parent=27 // pred_region
        _
      $region36: #{upblock_forward.8} parent=27 // pred_fallthru
        _
      // Predicated region
      $region37: #{upblock_forward.8} parent=27 // pred_check
        %p2751 = pneg %p133
      $region38: #{upblock_forward.8} parent=27 // pred_check_branch
        %2753 = sbr.rel (%p2751) target = $region40
      $region39: #{upblock_forward.8} parent=27 // pred_region
        _
      $region40: #{upblock_forward.8} parent=27 // pred_fallthru
        _
    $region28: #{upblock_forward.8} parent=5 // pred_fallthru
      _
    %p2754 = scmp.le.s32.totalorder 2, %s11
    // Predicated region
    $region41: #{upblock_forward.8} parent=5 // pred_check
      %p2755 = pneg %p2754
    $region42: #{upblock_forward.8} parent=5 // pred_check_branch
      %2757 = sbr.rel (%p2755) target = $region44
    $region43: #{upblock_forward.8} parent=5 // pred_region
      %s2758 = ssub.s32 %s11, 2
      // Predicated region
      $region45: #{upblock_forward.8} parent=43 // pred_check
        %p2759 = pneg %p87
      $region46: #{upblock_forward.8} parent=43 // pred_check_branch
        %2761 = sbr.rel (%p2759) target = $region48
      $region47: #{upblock_forward.8} parent=43 // pred_region
        %s2762 = smul.u32 128, %s17
        %p2763 = scmp.lt.s32.totalorder %s2762, 255
        %s2764 = scalar_select %p2763, %s2762, 255
        %s2765 = smul.addr %s2764, 4
        %s2766 = scalar_lea.vmem %s2, %s2765
      $region48: #{upblock_forward.8} parent=43 // pred_fallthru
        _
      // Predicated region
      $region49: #{upblock_forward.8} parent=43 // pred_check
        %p2767 = pneg %p113
      $region50: #{upblock_forward.8} parent=43 // pred_check_branch
        %2769 = sbr.rel (%p2767) target = $region52
      $region51: #{upblock_forward.8} parent=43 // pred_region
        %p2770 = scmp.lt.s32.totalorder %s17, 1
        %s2771 = scalar_select %p2770, %s17, 1
        %s2772 = smul.addr %s2771, 8
        %s2773 = scalar_lea.vmem %s3, %s2772
      $region52: #{upblock_forward.8} parent=43 // pred_fallthru
        _
      // Predicated region
      $region53: #{upblock_forward.8} parent=43 // pred_check
        %p2774 = pneg %p139
      $region54: #{upblock_forward.8} parent=43 // pred_check_branch
        %2776 = sbr.rel (%p2774) target = $region56
      $region55: #{upblock_forward.8} parent=43 // pred_region
        %p2777 = scmp.lt.s32.totalorder %s17, 1
        %s2778 = scalar_select %p2777, %s17, 1
        %s2779 = smul.addr %s2778, 8
        %s2780 = scalar_lea.vmem %s4, %s2779
      $region56: #{upblock_forward.8} parent=43 // pred_fallthru
        _
    $region44: #{upblock_forward.8} parent=5 // pred_fallthru
      _
  $region6: #{upblock_forward.8} parent=0 // loop_footer
    %s15 = sadd.s32 1, %s11
  $region7: #{upblock_forward.8} parent=0 // loop_footer_branch
    %10 = sbr.rel target = $region3
  $region8: #{upblock_forward.8} parent=0 // loop_exit
    _

// kernel: upblock_forward.9
$region0: #{upblock_forward.9}
  #allocation0 [shape = 'u32[]', space=smem, size = 0x4, offset = 0x4, fixed_abs, tag = 'smem constant byte address 0x4 - core index']
  #allocation1 [shape = 'u32[144,128]{1,0:T(1,128)}', space=vmem, size = 0x12000, scoped, tag = 'internal scratch']
  %s0 = inlined_call_operand.vmem [shape: bf16[128,128], index: 0, kind: input, shape index: {}]
  %s1 = inlined_call_operand.vmem [shape: f32[2,128], index: 1, kind: input, shape index: {}]
  %s2 = inlined_call_operand.vmem [shape: bf16[128,128], index: 2, kind: output, shape index: {}]
  %s3 = sld [smem:[#allocation0]]
  $region41: #{upblock_forward.9} parent=0
    _
  %s5 = ssub.s32 1, %s3
  %s6 = scalar_select 0, %s5, %s3
  loop: start=0, step=1, limit=4
  $region2: #{upblock_forward.9} parent=0 // loop_pre_header
    _
  $region3: #{upblock_forward.9} parent=0 // loop_header
    %s8 = sphi 0, %s12
    %p9 = scmp.ge.s32.totalorder %s8, 4
    %s18 = sphi 0, %s20
    %s21 = sphi 0, %s18
    %s22 = sphi 0, %s21
    %s38 = sphi 0, %s22
    %s42 = sphi 0, %s42
    %s44 = sphi 0, %s42
    %s45 = sphi 0, %s44
    %s59 = sphi 0, %s45
    %s65 = sphi 0, %s67
    %s68 = sphi 0, %s65
    %s69 = sphi 0, %s68
    %s85 = sphi 0, %s69
  $region4: #{upblock_forward.9} parent=0 // loop_header_branch
    %11 = sbr.rel (%p9) target = $region8
  $region5: #{upblock_forward.9} parent=0 // loop_body
    %s13 = ssub.s32 %s8, 1
    %s14 = ssub.s32 %s8, 2
    %s15 = sadd.s32 %s8, 1
    %s16 = ssub.s32 %s8, %s15
    %p17 = scmp.eq.s32.totalorder %s16, 0
    %s19 = sadd.s32 %s18, 1
    %s20 = scalar_select %p17, %s18, %s19
    %p23 = pneg %p17
    %p24 = scmp.eq.s32.totalorder %s8, 1
    %p25 = por %p23, %p24
    %p26 = scmp.ne.s32.totalorder %s18, %s21
    %p27 = scmp.eq.s32.totalorder %s8, 0
    %p28 = por %p26, %p27
    %p29 = scmp.ne.s32.totalorder %s18, %s21
    %p30 = scmp.eq.s32.totalorder %s13, 1
    %p31 = por %p29, %p30
    %p32 = scmp.ne.s32.totalorder %s21, %s22
    %p33 = scmp.eq.s32.totalorder %s13, 0
    %p34 = por %p32, %p33
    %p35 = scmp.ne.s32.totalorder %s21, %s22
    %p36 = scmp.eq.s32.totalorder %s14, 1
    %p37 = por %p35, %p36
    %p39 = scmp.ne.s32.totalorder %s22, %s38
    %p40 = scmp.eq.s32.totalorder %s14, 0
    %p41 = por %p39, %p40
    %s43 = sadd.s32 %s42, 1
    %p46 = scmp.eq.s32.totalorder %s8, 1
    %p47 = scmp.ne.s32.totalorder %s42, %s44
    %p48 = scmp.eq.s32.totalorder %s8, 0
    %p49 = por %p47, %p48
    %p50 = scmp.ne.s32.totalorder %s42, %s44
    %p51 = scmp.eq.s32.totalorder %s13, 1
    %p52 = por %p50, %p51
    %p53 = scmp.ne.s32.totalorder %s44, %s45
    %p54 = scmp.eq.s32.totalorder %s13, 0
    %p55 = por %p53, %p54
    %p56 = scmp.ne.s32.totalorder %s44, %s45
    %p57 = scmp.eq.s32.totalorder %s14, 1
    %p58 = por %p56, %p57
    %p60 = scmp.ne.s32.totalorder %s45, %s59
    %p61 = scmp.eq.s32.totalorder %s14, 0
    %p62 = por %p60, %p61
    %s63 = ssub.s32 %s8, %s15
    %p64 = scmp.eq.s32.totalorder %s63, 0
    %s66 = sadd.s32 %s65, 1
    %s67 = scalar_select %p64, %s65, %s66
    %p70 = pneg %p64
    %p71 = scmp.eq.s32.totalorder %s8, 1
    %p72 = por %p70, %p71
    %p73 = scmp.ne.s32.totalorder %s65, %s68
    %p74 = scmp.eq.s32.totalorder %s8, 0
    %p75 = por %p73, %p74
    %p76 = scmp.ne.s32.totalorder %s65, %s68
    %p77 = scmp.eq.s32.totalorder %s13, 1
    %p78 = por %p76, %p77
    %p79 = scmp.ne.s32.totalorder %s68, %s69
    %p80 = scmp.eq.s32.totalorder %s13, 0
    %p81 = por %p79, %p80
    %p82 = scmp.ne.s32.totalorder %s68, %s69
    %p83 = scmp.eq.s32.totalorder %s14, 1
    %p84 = por %p82, %p83
    %p86 = scmp.ne.s32.totalorder %s69, %s85
    %p87 = scmp.eq.s32.totalorder %s14, 0
    %p88 = por %p86, %p87
    %p89 = scmp.le.s32.totalorder 1, %s8
    %p90 = scmp.lt.s32.totalorder %s8, 3
    %p91 = pnand %p89, %p90
    %p92 = pneg %p91
    // Predicated region
    $region9: #{upblock_forward.9} parent=5 // pred_check
      _
    $region10: #{upblock_forward.9} parent=5 // pred_check_branch
      %94 = sbr.rel (%p91) target = $region12
    $region11: #{upblock_forward.9} parent=5 // pred_region
      %s95 = ssub.s32 %s8, 1
      // Predicated region
      $region13: #{upblock_forward.9} parent=11 // pred_check
        %p96 = pneg %p55
      $region14: #{upblock_forward.9} parent=11 // pred_check_branch
        %98 = sbr.rel (%p96) target = $region16
      $region15: #{upblock_forward.9} parent=11 // pred_region
        _
      $region16: #{upblock_forward.9} parent=11 // pred_fallthru
        _
    $region12: #{upblock_forward.9} parent=5 // pred_fallthru
      _
    %p99 = scmp.lt.s32.totalorder %s8, 2
    // Predicated region
    $region17: #{upblock_forward.9} parent=5 // pred_check
      %p100 = pneg %p99
    $region18: #{upblock_forward.9} parent=5 // pred_check_branch
      %102 = sbr.rel (%p100) target = $region20
    $region19: #{upblock_forward.9} parent=5 // pred_region
      // Predicated region
      $region21: #{upblock_forward.9} parent=19 // pred_check
        %p103 = pneg %p28
      $region22: #{upblock_forward.9} parent=19 // pred_check_branch
        %105 = sbr.rel (%p103) target = $region24
      $region23: #{upblock_forward.9} parent=19 // pred_region
        %s106 = smul.u32 8, %s8
        %p107 = scmp.lt.s32.totalorder %s106, 15
        %s108 = scalar_select %p107, %s106, 15
        %s109 = smul.addr %s108, 4
        %s110 = scalar_lea.vmem %s0, %s109
        %s111 = smul.u32 8, %s8
      $region24: #{upblock_forward.9} parent=19 // pred_fallthru
        _
    $region20: #{upblock_forward.9} parent=5 // pred_fallthru
      _
    %p112 = scmp.le.s32.totalorder 1, %s8
    %p113 = scmp.lt.s32.totalorder %s8, 3
    %p114 = pnand %p112, %p113
    %p115 = pneg %p114
    // Predicated region
    $region25: #{upblock_forward.9} parent=5 // pred_check
      _
    $region26: #{upblock_forward.9} parent=5 // pred_check_branch
      %117 = sbr.rel (%p114) target = $region28
    $region27: #{upblock_forward.9} parent=5 // pred_region
      %s118 = ssub.s32 %s8, 1
      %s119 = smul.u32 8, %s13
      %p120 = scmp.lt.s32.totalorder %s119, 15
      %s121 = scalar_select %p120, %s119, 15
      %s122 = smul.addr %s121, 4
      %s123 = scalar_lea.vmem %s0, %s122
      %p124 = pneg %p34
      %p125 = pneg %p31
      %p126 = pneg %p55
      %p127 = pneg %p52
      %p128 = pneg %p81
      %p129 = pneg %p78
      %s130 = smul.u32 8, %s13
      %p131 = scmp.lt.s32.totalorder %s130, 15
      %s132 = scalar_select %p131, %s130, 15
      %s133 = smul.addr %s132, 4
      %s134 = scalar_lea.vmem %s2, %s133
      %s135 = smul.u32 8, %s13
      %p136 = scmp.lt.s32.totalorder %s135, 15
      %s137 = scalar_select %p136, %s135, 15
      %s138 = smul.addr %s137, 4
      %s139 = scalar_lea.vmem %s0, %s138
      %s140 = smul.u32 8, %s13
      %s141 = smul.u32 8, %s13
      %p142 = scmp.lt.s32.totalorder %s141, 15
      %s143 = scalar_select %p142, %s141, 15
      %s144 = smul.addr %s143, 4
      %s145 = scalar_lea.vmem %s2, %s144
      %s146 = smul.u32 8, %s13
      %v147 = vld [vmem:[%s139] sm:$0xf]
      %v148 = vld [vmem:[%s139 + $0x4] sm:$0xf]
      %v149 = vld [vmem:[%s139 + $0x8] sm:$0xf]
      %v150 = vld [vmem:[%s139 + $0xc] sm:$0xf]
      %v151 = vld [vmem:[%s139 + $0x10] sm:$0xf]
      %v152 = vld [vmem:[%s139 + $0x14] sm:$0xf]
      %v153 = vld [vmem:[%s139 + $0x18] sm:$0xf]
      %v154 = vld [vmem:[%s139 + $0x1c] sm:$0xf]
      %v155 = vunpack.c.l.bf16 %v147
      %v156 = vunpack.c.l.bf16 %v148
      %v157 = vunpack.c.l.bf16 %v149
      %v158 = vunpack.c.l.bf16 %v150
      %v159 = vunpack.c.l.bf16 %v151
      %v160 = vunpack.c.l.bf16 %v152
      %v161 = vunpack.c.l.bf16 %v153
      %v162 = vunpack.c.l.bf16 %v154
      %v163 = vld [vmem:[%s1] sm:$0x1]
      %v164 = vlaneseq
      %v165 = vshrl.u32 %v164, 7
      %v166 = vsub.s32 0, %v165
      %v167 = vrot.slane %v163, %v166
      %v168 = vmul.f32 %v155, %v167
      %v169 = vmul.f32 %v156, %v167
      %v170 = vmul.f32 %v157, %v167
      %v171 = vmul.f32 %v158, %v167
      %v172 = vmul.f32 %v159, %v167
      %v173 = vmul.f32 %v160, %v167
      %v174 = vmul.f32 %v161, %v167
      %v175 = vmul.f32 %v162, %v167
      %v176 = vld [vmem:[%s1 + $0x1] sm:$0x1]
      %v177 = vlaneseq
      %v178 = vshrl.u32 %v177, 7
      %v179 = vsub.s32 0, %v178
      %v180 = vrot.slane %v176, %v179
      %v181 = vadd.f32 %v168, %v180
      %v182 = vadd.f32 %v169, %v180
      %v183 = vadd.f32 %v170, %v180
      %v184 = vadd.f32 %v171, %v180
      %v185 = vadd.f32 %v172, %v180
      %v186 = vadd.f32 %v173, %v180
      %v187 = vadd.f32 %v174, %v180
      %v188 = vadd.f32 %v175, %v180
      %v189 = vmul.f32 %v181, 0.5
      %v190 = vmul.f32 %v182, 0.5
      %v191 = vmul.f32 %v183, 0.5
      %v192 = vmul.f32 %v184, 0.5
      %v193 = vmul.f32 %v185, 0.5
      %v194 = vmul.f32 %v186, 0.5
      %v195 = vmul.f32 %v187, 0.5
      %v196 = vmul.f32 %v188, 0.5
      %v197 = vmul.f32 %v181, 0.70710677
      %v198 = vmul.f32 %v182, 0.70710677
      %v199 = vmul.f32 %v183, 0.70710677
      %v200 = vmul.f32 %v184, 0.70710677
      %v201 = vmul.f32 %v185, 0.70710677
      %v202 = vmul.f32 %v186, 0.70710677
      %v203 = vmul.f32 %v187, 0.70710677
      %v204 = vmul.f32 %v188, 0.70710677
      %v205 = verf.f32.pop %v197
      %v206 = verf.f32.pop %v198
      %v207 = verf.f32.pop %v199
      %v208 = verf.f32.pop %v200
      %v209 = verf.f32.pop %v201
      %v210 = verf.f32.pop %v202
      %v211 = verf.f32.pop %v203
      %v212 = verf.f32.pop %v204
      %v213 = vadd.f32 %v205, 1.0
      %v214 = vadd.f32 %v206, 1.0
      %v215 = vadd.f32 %v207, 1.0
      %v216 = vadd.f32 %v208, 1.0
      %v217 = vadd.f32 %v209, 1.0
      %v218 = vadd.f32 %v210, 1.0
      %v219 = vadd.f32 %v211, 1.0
      %v220 = vadd.f32 %v212, 1.0
      %v221 = vmul.f32 %v189, %v213
      %v222 = vmul.f32 %v190, %v214
      %v223 = vmul.f32 %v191, %v215
      %v224 = vmul.f32 %v192, %v216
      %v225 = vmul.f32 %v193, %v217
      %v226 = vmul.f32 %v194, %v218
      %v227 = vmul.f32 %v195, %v219
      %v228 = vmul.f32 %v196, %v220
      %v229 = vpack.c.bf16 %v222, %v221
      %v230 = vpack.c.bf16 %v224, %v223
      %v231 = vpack.c.bf16 %v226, %v225
      %v232 = vpack.c.bf16 %v228, %v227
      %v237 = vunpack.c.l.b16 %v229
      %v238 = vunpack.c.h.b16 %v229
      %v239 = vunpack.c.l.b16 %v230
      %v240 = vunpack.c.h.b16 %v230
      %v241 = vunpack.c.l.b16 %v231
      %v242 = vunpack.c.h.b16 %v231
      %v243 = vunpack.c.l.b16 %v232
      %v244 = vunpack.c.h.b16 %v232
      %v245 = vpack.c.b16 %v237, %v237
      %v246 = vpack.c.b16 %v238, %v238
      %v247 = vpack.c.b16 %v239, %v239
      %v248 = vpack.c.b16 %v240, %v240
      %v249 = vpack.c.b16 %v241, %v241
      %v250 = vpack.c.b16 %v242, %v242
      %v251 = vpack.c.b16 %v243, %v243
      %v252 = vpack.c.b16 %v244, %v244
      %261 = vst [vmem:[%s145] sm:$0xf] %v245
      %262 = vst [vmem:[%s145 + $0x4] sm:$0xf] %v246
      %263 = vst [vmem:[%s145 + $0x8] sm:$0xf] %v247
      %264 = vst [vmem:[%s145 + $0xc] sm:$0xf] %v248
      %265 = vst [vmem:[%s145 + $0x10] sm:$0xf] %v249
      %266 = vst [vmem:[%s145 + $0x14] sm:$0xf] %v250
      %267 = vst [vmem:[%s145 + $0x18] sm:$0xf] %v251
      %268 = vst [vmem:[%s145 + $0x1c] sm:$0xf] %v252
      %s269 = smul.u32 8, %s13
      %p270 = scmp.lt.s32.totalorder %s269, 15
      %s271 = scalar_select %p270, %s269, 15
      %s272 = smul.addr %s271, 4
      %s273 = scalar_lea.vmem %s2, %s272
      // Predicated region
      $region29: #{upblock_forward.9} parent=27 // pred_check
        %p274 = pneg %p78
      $region30: #{upblock_forward.9} parent=27 // pred_check_branch
        %276 = sbr.rel (%p274) target = $region32
      $region31: #{upblock_forward.9} parent=27 // pred_region
        %s277 = smul.u32 8, %s13
      $region32: #{upblock_forward.9} parent=27 // pred_fallthru
        _
    $region28: #{upblock_forward.9} parent=5 // pred_fallthru
      _
    %p278 = scmp.le.s32.totalorder 2, %s8
    // Predicated region
    $region33: #{upblock_forward.9} parent=5 // pred_check
      %p279 = pneg %p278
    $region34: #{upblock_forward.9} parent=5 // pred_check_branch
      %281 = sbr.rel (%p279) target = $region36
    $region35: #{upblock_forward.9} parent=5 // pred_region
      %s282 = ssub.s32 %s8, 2
      // Predicated region
      $region37: #{upblock_forward.9} parent=35 // pred_check
        %p283 = pneg %p84
      $region38: #{upblock_forward.9} parent=35 // pred_check_branch
        %285 = sbr.rel (%p283) target = $region40
      $region39: #{upblock_forward.9} parent=35 // pred_region
        %s286 = smul.u32 8, %s14
        %p287 = scmp.lt.s32.totalorder %s286, 15
        %s288 = scalar_select %p287, %s286, 15
        %s289 = smul.addr %s288, 4
        %s290 = scalar_lea.vmem %s2, %s289
      $region40: #{upblock_forward.9} parent=35 // pred_fallthru
        _
    $region36: #{upblock_forward.9} parent=5 // pred_fallthru
      _
  $region6: #{upblock_forward.9} parent=0 // loop_footer
    %s12 = sadd.s32 1, %s8
  $region7: #{upblock_forward.9} parent=0 // loop_footer_branch
    %7 = sbr.rel target = $region3
  $region8: #{upblock_forward.9} parent=0 // loop_exit
    _

// kernel: upblock_forward.11
$region0: #{upblock_forward.11}
  #allocation0 [shape = 'u32[]', space=smem, size = 0x4, offset = 0x4, fixed_abs, tag = 'smem constant byte address 0x4 - core index']
  #allocation1 [shape = 'u32[144,128]{1,0:T(1,128)}', space=vmem, size = 0x12000, scoped, tag = 'internal scratch']
  %s0 = inlined_call_operand.vmem [shape: bf16[128,128], index: 0, kind: input, shape index: {}]
  %s1 = inlined_call_operand.vmem [shape: f32[2,128], index: 1, kind: input, shape index: {}]
  %s2 = inlined_call_operand.vmem [shape: f32[128,128], index: 2, kind: output, shape index: {}]
  %s3 = sld [smem:[#allocation0]]
  $region41: #{upblock_forward.11} parent=0
    _
  %s5 = ssub.s32 1, %s3
  %s6 = scalar_select 0, %s5, %s3
  loop: start=0, step=1, limit=4
  $region2: #{upblock_forward.11} parent=0 // loop_pre_header
    _
  $region3: #{upblock_forward.11} parent=0 // loop_header
    %s8 = sphi 0, %s12
    %p9 = scmp.ge.s32.totalorder %s8, 4
    %s18 = sphi 0, %s20
    %s21 = sphi 0, %s18
    %s22 = sphi 0, %s21
    %s38 = sphi 0, %s22
    %s42 = sphi 0, %s42
    %s44 = sphi 0, %s42
    %s45 = sphi 0, %s44
    %s59 = sphi 0, %s45
    %s65 = sphi 0, %s67
    %s68 = sphi 0, %s65
    %s69 = sphi 0, %s68
    %s85 = sphi 0, %s69
  $region4: #{upblock_forward.11} parent=0 // loop_header_branch
    %11 = sbr.rel (%p9) target = $region8
  $region5: #{upblock_forward.11} parent=0 // loop_body
    %s13 = ssub.s32 %s8, 1
    %s14 = ssub.s32 %s8, 2
    %s15 = sadd.s32 %s8, 1
    %s16 = ssub.s32 %s8, %s15
    %p17 = scmp.eq.s32.totalorder %s16, 0
    %s19 = sadd.s32 %s18, 1
    %s20 = scalar_select %p17, %s18, %s19
    %p23 = pneg %p17
    %p24 = scmp.eq.s32.totalorder %s8, 1
    %p25 = por %p23, %p24
    %p26 = scmp.ne.s32.totalorder %s18, %s21
    %p27 = scmp.eq.s32.totalorder %s8, 0
    %p28 = por %p26, %p27
    %p29 = scmp.ne.s32.totalorder %s18, %s21
    %p30 = scmp.eq.s32.totalorder %s13, 1
    %p31 = por %p29, %p30
    %p32 = scmp.ne.s32.totalorder %s21, %s22
    %p33 = scmp.eq.s32.totalorder %s13, 0
    %p34 = por %p32, %p33
    %p35 = scmp.ne.s32.totalorder %s21, %s22
    %p36 = scmp.eq.s32.totalorder %s14, 1
    %p37 = por %p35, %p36
    %p39 = scmp.ne.s32.totalorder %s22, %s38
    %p40 = scmp.eq.s32.totalorder %s14, 0
    %p41 = por %p39, %p40
    %s43 = sadd.s32 %s42, 1
    %p46 = scmp.eq.s32.totalorder %s8, 1
    %p47 = scmp.ne.s32.totalorder %s42, %s44
    %p48 = scmp.eq.s32.totalorder %s8, 0
    %p49 = por %p47, %p48
    %p50 = scmp.ne.s32.totalorder %s42, %s44
    %p51 = scmp.eq.s32.totalorder %s13, 1
    %p52 = por %p50, %p51
    %p53 = scmp.ne.s32.totalorder %s44, %s45
    %p54 = scmp.eq.s32.totalorder %s13, 0
    %p55 = por %p53, %p54
    %p56 = scmp.ne.s32.totalorder %s44, %s45
    %p57 = scmp.eq.s32.totalorder %s14, 1
    %p58 = por %p56, %p57
    %p60 = scmp.ne.s32.totalorder %s45, %s59
    %p61 = scmp.eq.s32.totalorder %s14, 0
    %p62 = por %p60, %p61
    %s63 = ssub.s32 %s8, %s15
    %p64 = scmp.eq.s32.totalorder %s63, 0
    %s66 = sadd.s32 %s65, 1
    %s67 = scalar_select %p64, %s65, %s66
    %p70 = pneg %p64
    %p71 = scmp.eq.s32.totalorder %s8, 1
    %p72 = por %p70, %p71
    %p73 = scmp.ne.s32.totalorder %s65, %s68
    %p74 = scmp.eq.s32.totalorder %s8, 0
    %p75 = por %p73, %p74
    %p76 = scmp.ne.s32.totalorder %s65, %s68
    %p77 = scmp.eq.s32.totalorder %s13, 1
    %p78 = por %p76, %p77
    %p79 = scmp.ne.s32.totalorder %s68, %s69
    %p80 = scmp.eq.s32.totalorder %s13, 0
    %p81 = por %p79, %p80
    %p82 = scmp.ne.s32.totalorder %s68, %s69
    %p83 = scmp.eq.s32.totalorder %s14, 1
    %p84 = por %p82, %p83
    %p86 = scmp.ne.s32.totalorder %s69, %s85
    %p87 = scmp.eq.s32.totalorder %s14, 0
    %p88 = por %p86, %p87
    %p89 = scmp.le.s32.totalorder 1, %s8
    %p90 = scmp.lt.s32.totalorder %s8, 3
    %p91 = pnand %p89, %p90
    %p92 = pneg %p91
    // Predicated region
    $region9: #{upblock_forward.11} parent=5 // pred_check
      _
    $region10: #{upblock_forward.11} parent=5 // pred_check_branch
      %94 = sbr.rel (%p91) target = $region12
    $region11: #{upblock_forward.11} parent=5 // pred_region
      %s95 = ssub.s32 %s8, 1
      // Predicated region
      $region13: #{upblock_forward.11} parent=11 // pred_check
        %p96 = pneg %p55
      $region14: #{upblock_forward.11} parent=11 // pred_check_branch
        %98 = sbr.rel (%p96) target = $region16
      $region15: #{upblock_forward.11} parent=11 // pred_region
        _
      $region16: #{upblock_forward.11} parent=11 // pred_fallthru
        _
    $region12: #{upblock_forward.11} parent=5 // pred_fallthru
      _
    %p99 = scmp.lt.s32.totalorder %s8, 2
    // Predicated region
    $region17: #{upblock_forward.11} parent=5 // pred_check
      %p100 = pneg %p99
    $region18: #{upblock_forward.11} parent=5 // pred_check_branch
      %102 = sbr.rel (%p100) target = $region20
    $region19: #{upblock_forward.11} parent=5 // pred_region
      // Predicated region
      $region21: #{upblock_forward.11} parent=19 // pred_check
        %p103 = pneg %p28
      $region22: #{upblock_forward.11} parent=19 // pred_check_branch
        %105 = sbr.rel (%p103) target = $region24
      $region23: #{upblock_forward.11} parent=19 // pred_region
        %s106 = smul.u32 8, %s8
        %p107 = scmp.lt.s32.totalorder %s106, 15
        %s108 = scalar_select %p107, %s106, 15
        %s109 = smul.addr %s108, 4
        %s110 = scalar_lea.vmem %s0, %s109
        %s111 = smul.u32 8, %s8
      $region24: #{upblock_forward.11} parent=19 // pred_fallthru
        _
    $region20: #{upblock_forward.11} parent=5 // pred_fallthru
      _
    %p112 = scmp.le.s32.totalorder 1, %s8
    %p113 = scmp.lt.s32.totalorder %s8, 3
    %p114 = pnand %p112, %p113
    %p115 = pneg %p114
    // Predicated region
    $region25: #{upblock_forward.11} parent=5 // pred_check
      _
    $region26: #{upblock_forward.11} parent=5 // pred_check_branch
      %117 = sbr.rel (%p114) target = $region28
    $region27: #{upblock_forward.11} parent=5 // pred_region
      %s118 = ssub.s32 %s8, 1
      %s119 = smul.u32 8, %s13
      %p120 = scmp.lt.s32.totalorder %s119, 15
      %s121 = scalar_select %p120, %s119, 15
      %s122 = smul.addr %s121, 4
      %s123 = scalar_lea.vmem %s0, %s122
      %p124 = pneg %p34
      %p125 = pneg %p31
      %p126 = pneg %p55
      %p127 = pneg %p52
      %p128 = pneg %p81
      %p129 = pneg %p78
      %s130 = smul.u32 8, %s13
      %p131 = scmp.lt.s32.totalorder %s130, 15
      %s132 = scalar_select %p131, %s130, 15
      %s133 = smul.addr %s132, 8
      %s134 = scalar_lea.vmem %s2, %s133
      %s135 = smul.u32 8, %s13
      %p136 = scmp.lt.s32.totalorder %s135, 15
      %s137 = scalar_select %p136, %s135, 15
      %s138 = smul.addr %s137, 4
      %s139 = scalar_lea.vmem %s0, %s138
      %s140 = smul.u32 8, %s13
      %s141 = smul.u32 8, %s13
      %p142 = scmp.lt.s32.totalorder %s141, 15
      %s143 = scalar_select %p142, %s141, 15
      %s144 = smul.addr %s143, 8
      %s145 = scalar_lea.vmem %s2, %s144
      %s146 = smul.u32 8, %s13
      %v147 = vld [vmem:[%s139] sm:$0xf]
      %v148 = vld [vmem:[%s139 + $0x4] sm:$0xf]
      %v149 = vld [vmem:[%s139 + $0x8] sm:$0xf]
      %v150 = vld [vmem:[%s139 + $0xc] sm:$0xf]
      %v151 = vld [vmem:[%s139 + $0x10] sm:$0xf]
      %v152 = vld [vmem:[%s139 + $0x14] sm:$0xf]
      %v153 = vld [vmem:[%s139 + $0x18] sm:$0xf]
      %v154 = vld [vmem:[%s139 + $0x1c] sm:$0xf]
      %v155 = vunpack.c.l.bf16 %v147
      %v156 = vunpack.c.l.bf16 %v148
      %v157 = vunpack.c.l.bf16 %v149
      %v158 = vunpack.c.l.bf16 %v150
      %v159 = vunpack.c.l.bf16 %v151
      %v160 = vunpack.c.l.bf16 %v152
      %v161 = vunpack.c.l.bf16 %v153
      %v162 = vunpack.c.l.bf16 %v154
      %v163 = vld [vmem:[%s1] sm:$0x1]
      %v164 = vlaneseq
      %v165 = vshrl.u32 %v164, 7
      %v166 = vsub.s32 0, %v165
      %v167 = vrot.slane %v163, %v166
      %v168 = vmul.f32 %v155, %v167
      %v169 = vmul.f32 %v156, %v167
      %v170 = vmul.f32 %v157, %v167
      %v171 = vmul.f32 %v158, %v167
      %v172 = vmul.f32 %v159, %v167
      %v173 = vmul.f32 %v160, %v167
      %v174 = vmul.f32 %v161, %v167
      %v175 = vmul.f32 %v162, %v167
      %v176 = vld [vmem:[%s1 + $0x1] sm:$0x1]
      %v177 = vlaneseq
      %v178 = vshrl.u32 %v177, 7
      %v179 = vsub.s32 0, %v178
      %v180 = vrot.slane %v176, %v179
      %v181 = vadd.f32 %v168, %v180
      %v182 = vadd.f32 %v169, %v180
      %v183 = vadd.f32 %v170, %v180
      %v184 = vadd.f32 %v171, %v180
      %v185 = vadd.f32 %v172, %v180
      %v186 = vadd.f32 %v173, %v180
      %v187 = vadd.f32 %v174, %v180
      %v188 = vadd.f32 %v175, %v180
      %v189 = vmul.f32 %v181, 0.5
      %v190 = vmul.f32 %v182, 0.5
      %v191 = vmul.f32 %v183, 0.5
      %v192 = vmul.f32 %v184, 0.5
      %v193 = vmul.f32 %v185, 0.5
      %v194 = vmul.f32 %v186, 0.5
      %v195 = vmul.f32 %v187, 0.5
      %v196 = vmul.f32 %v188, 0.5
      %v197 = vmul.f32 %v181, 0.70710677
      %v198 = vmul.f32 %v182, 0.70710677
      %v199 = vmul.f32 %v183, 0.70710677
      %v200 = vmul.f32 %v184, 0.70710677
      %v201 = vmul.f32 %v185, 0.70710677
      %v202 = vmul.f32 %v186, 0.70710677
      %v203 = vmul.f32 %v187, 0.70710677
      %v204 = vmul.f32 %v188, 0.70710677
      %v205 = verf.f32.pop %v197
      %v206 = verf.f32.pop %v198
      %v207 = verf.f32.pop %v199
      %v208 = verf.f32.pop %v200
      %v209 = verf.f32.pop %v201
      %v210 = verf.f32.pop %v202
      %v211 = verf.f32.pop %v203
      %v212 = verf.f32.pop %v204
      %v213 = vadd.f32 %v205, 1.0
      %v214 = vadd.f32 %v206, 1.0
      %v215 = vadd.f32 %v207, 1.0
      %v216 = vadd.f32 %v208, 1.0
      %v217 = vadd.f32 %v209, 1.0
      %v218 = vadd.f32 %v210, 1.0
      %v219 = vadd.f32 %v211, 1.0
      %v220 = vadd.f32 %v212, 1.0
      %v221 = vmul.f32 %v189, %v213
      %v222 = vmul.f32 %v190, %v214
      %v223 = vmul.f32 %v191, %v215
      %v224 = vmul.f32 %v192, %v216
      %v225 = vmul.f32 %v193, %v217
      %v226 = vmul.f32 %v194, %v218
      %v227 = vmul.f32 %v195, %v219
      %v228 = vmul.f32 %v196, %v220
      %229 = vst [vmem:[%s145] sm:$0xff] %v221
      %230 = vst [vmem:[%s145 + $0x8] sm:$0xff] %v222
      %231 = vst [vmem:[%s145 + $0x10] sm:$0xff] %v223
      %232 = vst [vmem:[%s145 + $0x18] sm:$0xff] %v224
      %233 = vst [vmem:[%s145 + $0x20] sm:$0xff] %v225
      %234 = vst [vmem:[%s145 + $0x28] sm:$0xff] %v226
      %235 = vst [vmem:[%s145 + $0x30] sm:$0xff] %v227
      %236 = vst [vmem:[%s145 + $0x38] sm:$0xff] %v228
      %s237 = smul.u32 8, %s13
      %p238 = scmp.lt.s32.totalorder %s237, 15
      %s239 = scalar_select %p238, %s237, 15
      %s240 = smul.addr %s239, 8
      %s241 = scalar_lea.vmem %s2, %s240
      // Predicated region
      $region29: #{upblock_forward.11} parent=27 // pred_check
        %p242 = pneg %p78
      $region30: #{upblock_forward.11} parent=27 // pred_check_branch
        %244 = sbr.rel (%p242) target = $region32
      $region31: #{upblock_forward.11} parent=27 // pred_region
        %s245 = smul.u32 8, %s13
      $region32: #{upblock_forward.11} parent=27 // pred_fallthru
        _
    $region28: #{upblock_forward.11} parent=5 // pred_fallthru
      _
    %p246 = scmp.le.s32.totalorder 2, %s8
    // Predicated region
    $region33: #{upblock_forward.11} parent=5 // pred_check
      %p247 = pneg %p246
    $region34: #{upblock_forward.11} parent=5 // pred_check_branch
      %249 = sbr.rel (%p247) target = $region36
    $region35: #{upblock_forward.11} parent=5 // pred_region
      %s250 = ssub.s32 %s8, 2
      // Predicated region
      $region37: #{upblock_forward.11} parent=35 // pred_check
        %p251 = pneg %p84
      $region38: #{upblock_forward.11} parent=35 // pred_check_branch
        %253 = sbr.rel (%p251) target = $region40
      $region39: #{upblock_forward.11} parent=35 // pred_region
        %s254 = smul.u32 8, %s14
        %p255 = scmp.lt.s32.totalorder %s254, 15
        %s256 = scalar_select %p255, %s254, 15
        %s257 = smul.addr %s256, 8
        %s258 = scalar_lea.vmem %s2, %s257
      $region40: #{upblock_forward.11} parent=35 // pred_fallthru
        _
    $region36: #{upblock_forward.11} parent=5 // pred_fallthru
      _
  $region6: #{upblock_forward.11} parent=0 // loop_footer
    %s12 = sadd.s32 1, %s8
  $region7: #{upblock_forward.11} parent=0 // loop_footer_branch
    %7 = sbr.rel target = $region3
  $region8: #{upblock_forward.11} parent=0 // loop_exit
    _

</llo_original>
